<compile_context>
chip_gen: v7x
topology: tpu7x:2x2x1
jax: 0.10.0
libtpu: 0.0.40
codegen_flags: <defaults>
</compile_context>

<pallas_src>
import functools

import jax
import jax.numpy as jnp
from jax.experimental import pallas as pl
from jax.experimental.pallas import tpu as pltpu

LN_EPS = 1e-5        # torch.nn.LayerNorm default
NEG_INF = -1e30      # key-padding mask value (finite: avoids inf-inf NaNs)


# ----------------------------- in-kernel math helpers -----------------------------

def _layernorm(x, gamma, beta):
    mu = jnp.mean(x, axis=-1, keepdims=True)
    xc = x - mu
    var = jnp.mean(xc * xc, axis=-1, keepdims=True)  # biased, like nn.LayerNorm
    inv = jax.lax.rsqrt(var + LN_EPS)
    return xc * inv * gamma + beta


def _erf(x):
    # Abramowitz & Stegun 7.1.26 rational approximation, |err| < 1.5e-7 (~fp32 exact).
    a1, a2, a3, a4, a5 = 0.254829592, -0.284496736, 1.421413741, -1.453152027, 1.061405429
    p = 0.3275911
    s = jnp.where(x >= 0.0, 1.0, -1.0)
    ax = jnp.abs(x)
    t = 1.0 / (1.0 + p * ax)
    poly = ((((a5 * t + a4) * t + a3) * t + a2) * t + a1) * t
    return s * (1.0 - poly * jnp.exp(-ax * ax))


def _gelu(x):
    # exact (erf-based) GELU, matching torch.nn.GELU() default
    return 0.5 * x * (1.0 + _erf(x * 0.7071067811865476))


def _softmax_last(x):
    m = jnp.max(x, axis=-1, keepdims=True)
    e = jnp.exp(x - m)
    return e / jnp.sum(e, axis=-1, keepdims=True)


# --------------------------------- fused kernel -------------------------------------

def fused_transformer_kernel(
        x_ref, proj_w_ref, proj_b_ref, cls_ref,
        ln1g_ref, ln1b_ref, wq_ref, wk_ref, wv_ref, wo_ref, bo_ref,
        ln2g_ref, ln2b_ref, w1_ref, b1_ref, w2_ref, b2_ref,
        hlng_ref, hlnb_ref, hw_ref, hb_ref,
        logits_ref, probs_ref,
        h_ref,
        *, depth, heads, n_valid):
    s_pad = x_ref.shape[0]
    emb = proj_w_ref.shape[1]

    # ---- projection (Linear + ReLU); cls token written into row 0 via a row select.
    # Row 0 of x is a dummy zero row, rows [1, n_valid) are real tokens, the rest pad.
    proj = jnp.maximum(
        jnp.dot(x_ref[...], proj_w_ref[...], preferred_element_type=jnp.float32)
        + proj_b_ref[...], 0.0)
    row = jax.lax.broadcasted_iota(jnp.int32, (s_pad, 1), 0)
    h_ref[...] = jnp.where(row == 0, cls_ref[...], proj)

    # ---- key-padding mask (padded tokens never contribute to any softmax).
    col = jax.lax.broadcasted_iota(jnp.int32, (1, s_pad), 1)
    key_mask = jnp.where(col < n_valid, 0.0, NEG_INF)

    # ---- transformer layers (static Python loop; depth/heads are small & static).
    for d in range(depth):
        x = h_ref[...]

        # PreNorm + multi-head self-attention + residual
        xn = _layernorm(x, ln1g_ref[d], ln1b_ref[d])
        acc = jnp.zeros((s_pad, emb), jnp.float32)
        for hh in range(heads):
            # per-head weights stacked on leading axes -> no lane slicing at runtime
            q = jnp.dot(xn, wq_ref[d, hh], preferred_element_type=jnp.float32)  # pre-scaled
            k = jnp.dot(xn, wk_ref[d, hh], preferred_element_type=jnp.float32)
            v = jnp.dot(xn, wv_ref[d, hh], preferred_element_type=jnp.float32)
            dots = jnp.dot(q, k.T, preferred_element_type=jnp.float32) + key_mask
            attn = _softmax_last(dots)
            av = jnp.dot(attn, v, preferred_element_type=jnp.float32)
            # accumulate (attn @ v) @ w_o[h] instead of concatenating head outputs
            acc = acc + jnp.dot(av, wo_ref[d, hh], preferred_element_type=jnp.float32)
        x = x + acc + bo_ref[d]

        # PreNorm + FeedForward (Linear -> GELU -> Linear) + residual
        xn2 = _layernorm(x, ln2g_ref[d], ln2b_ref[d])
        h1 = _gelu(jnp.dot(xn2, w1_ref[d], preferred_element_type=jnp.float32) + b1_ref[d])
        ff = jnp.dot(h1, w2_ref[d], preferred_element_type=jnp.float32) + b2_ref[d]
        h_ref[...] = x + ff

    # ---- cls pooling + mlp_head (LayerNorm + Linear) + softmax
    pooled = h_ref[0:1, :]
    xn = _layernorm(pooled, hlng_ref[...], hlnb_ref[...])
    logits = jnp.dot(xn, hw_ref[...], preferred_element_type=jnp.float32) + hb_ref[...]
    logits_ref[...] = logits
    probs_ref[...] = _softmax_last(logits)


# -------------------------------- pallas_call wrapper --------------------------------

_VMEM = pl.BlockSpec(memory_space=pltpu.MemorySpace.VMEM)


def transformer_forward(x, params, *, heads, dim_head, depth):
    # x: (N, input_dim); torch does x.unsqueeze(0) -> batch of 1 kept implicit.
    n, input_dim = x.shape
    emb = heads * dim_head
    n_valid = n + 1                              # N data tokens + 1 cls token
    s_pad = ((n_valid + 7) // 8) * 8             # align token axis to 8-sublane tile
    x_pad = jnp.zeros((s_pad, input_dim), jnp.float32).at[1:n + 1, :].set(x)

    num_classes = params["head_w"].shape[1]
    kern = functools.partial(fused_transformer_kernel,
                             depth=depth, heads=heads, n_valid=n_valid)

    logits, probs = pl.pallas_call(
        kern,
        out_shape=(jax.ShapeDtypeStruct((1, num_classes), jnp.float32),
                   jax.ShapeDtypeStruct((1, num_classes), jnp.float32)),
        in_specs=[_VMEM] * 21,                   # everything resident in VMEM, no grid
        out_specs=(_VMEM, _VMEM),
        scratch_shapes=[pltpu.VMEM((s_pad, emb), jnp.float32)],
    )(x_pad, params["proj_w"], params["proj_b"], params["cls_token"],
      params["ln1_g"], params["ln1_b"],
      params["w_q"], params["w_k"], params["w_v"], params["w_o"], params["b_o"],
      params["ln2_g"], params["ln2_b"],
      params["w_ff1"], params["b_ff1"], params["w_ff2"], params["b_ff2"],
      params["head_ln_g"], params["head_ln_b"], params["head_w"], params["head_b"])

    y_hat = jnp.argmax(probs, axis=1)            # trivially small glue
    return logits, probs, y_hat


# ------------------------------ parameter construction -------------------------------

def init_params(key, *, input_dim, heads, dim_head, hidden_dim, depth, num_classes):
    emb = heads * dim_head
    inner = heads * dim_head

    def nxt():
        nonlocal key
        key, sub = jax.random.split(key)
        return sub

    def lin_w(fan_in, fan_out):
        bound = 1.0 / (fan_in ** 0.5)
        return jax.random.uniform(nxt(), (fan_in, fan_out), jnp.float32, -bound, bound)

    def lin_b(fan_in, fan_out):
        bound = 1.0 / (fan_in ** 0.5)
        return jax.random.uniform(nxt(), (1, fan_out), jnp.float32, -bound, bound)

    proj_w = lin_w(input_dim, emb)
    proj_b = lin_b(input_dim, emb)
    cls_token = jax.random.uniform(nxt(), (1, emb), jnp.float32)   # torch.rand

    scale = dim_head ** -0.5
    wq_l, wk_l, wv_l, wo_l, bo_l = [], [], [], [], []
    ln1g_l, ln1b_l, ln2g_l, ln2b_l = [], [], [], []
    w1_l, b1_l, w2_l, b2_l = [], [], [], []
    for _ in range(depth):
        w_qkv = lin_w(emb, 3 * inner)                    # to_qkv (bias=False)
        wq = w_qkv[:, 0 * inner:1 * inner] * scale       # fold attention scale into Q
        wk = w_qkv[:, 1 * inner:2 * inner]
        wv = w_qkv[:, 2 * inner:3 * inner]
        # (emb, inner) -> (heads, emb, dim_head): per-head slabs, no runtime lane slicing
        wq_l.append(wq.reshape(emb, heads, dim_head).transpose(1, 0, 2))
        wk_l.append(wk.reshape(emb, heads, dim_head).transpose(1, 0, 2))
        wv_l.append(wv.reshape(emb, heads, dim_head).transpose(1, 0, 2))
        w_o = lin_w(inner, emb)
        b_o = lin_b(inner, emb)
        wo_l.append(w_o.reshape(heads, dim_head, emb))   # row slices -> leading axis
        bo_l.append(b_o)
        ln1g_l.append(jnp.ones((1, emb), jnp.float32))
        ln1b_l.append(jnp.zeros((1, emb), jnp.float32))
        ln2g_l.append(jnp.ones((1, emb), jnp.float32))
        ln2b_l.append(jnp.zeros((1, emb), jnp.float32))
        w1_l.append(lin_w(emb, hidden_dim))
        b1_l.append(lin_b(emb, hidden_dim))
        w2_l.append(lin_w(hidden_dim, emb))
        b2_l.append(lin_b(hidden_dim, emb))

    head_w = lin_w(emb, num_classes)
    head_b = lin_b(emb, num_classes)

    stack = lambda lst: jnp.stack(lst, axis=0)
    return dict(
        proj_w=proj_w, proj_b=proj_b, cls_token=cls_token,
        ln1_g=stack(ln1g_l), ln1_b=stack(ln1b_l),
        w_q=stack(wq_l), w_k=stack(wk_l), w_v=stack(wv_l),
        w_o=stack(wo_l), b_o=stack(bo_l),
        ln2_g=stack(ln2g_l), ln2_b=stack(ln2b_l),
        w_ff1=stack(w1_l), b_ff1=stack(b1_l), w_ff2=stack(w2_l), b_ff2=stack(b2_l),
        head_ln_g=jnp.ones((1, emb), jnp.float32),
        head_ln_b=jnp.zeros((1, emb), jnp.float32),
        head_w=head_w, head_b=head_b,
    )


# -------------------------------------- main ----------------------------------------

if __name__ == "__main__":
    # small shapes consistent with the module: N=8 instances, input_dim=32,
    # heads=2, dim_head=16 -> emb_dim=32, hidden_dim=64, depth=2, num_classes=4
    N, INPUT_DIM = 8, 32
    HEADS, DIM_HEAD, HIDDEN_DIM, DEPTH, NUM_CLASSES = 2, 16, 64, 2, 4

    key = jax.random.PRNGKey(0)
    key, pkey, xkey = jax.random.split(key, 3)
    params = init_params(pkey, input_dim=INPUT_DIM, heads=HEADS, dim_head=DIM_HEAD,
                         hidden_dim=HIDDEN_DIM, depth=DEPTH, num_classes=NUM_CLASSES)
    x = jax.random.normal(xkey, (N, INPUT_DIM), jnp.float32)

    # TODO(synk): dropout / emb_dropout (p=0.0), pos_enc=None, and the 'mean'/'mil'
    # pooling branches are not exercised by this forward (pool='cls'), so not emitted.
    logits, y_prob, y_hat = transformer_forward(x, params, heads=HEADS,
                                                dim_head=DIM_HEAD, depth=DEPTH)
    jax.block_until_ready((logits, y_prob, y_hat))

    assert logits.shape == (1, NUM_CLASSES)
    assert y_prob.shape == (1, NUM_CLASSES)
    assert y_hat.shape == (1,)
    assert bool(jnp.all(jnp.isfinite(logits))) and bool(jnp.all(jnp.isfinite(y_prob)))
    print("KERNEL_OK")
</pallas_src>

<mosaic_0001>
module attributes {stable_mosaic.version = 11 : i64} {
  func.func @fused_transformer_kernel(%arg0: memref<16x32xf32, #tpu.memory_space<vmem>>, %arg1: memref<32x32xf32, #tpu.memory_space<vmem>>, %arg2: memref<1x32xf32, #tpu.memory_space<vmem>>, %arg3: memref<1x32xf32, #tpu.memory_space<vmem>>, %arg4: memref<2x1x32xf32, #tpu.memory_space<vmem>>, %arg5: memref<2x1x32xf32, #tpu.memory_space<vmem>>, %arg6: memref<2x2x32x16xf32, #tpu.memory_space<vmem>>, %arg7: memref<2x2x32x16xf32, #tpu.memory_space<vmem>>, %arg8: memref<2x2x32x16xf32, #tpu.memory_space<vmem>>, %arg9: memref<2x2x16x32xf32, #tpu.memory_space<vmem>>, %arg10: memref<2x1x32xf32, #tpu.memory_space<vmem>>, %arg11: memref<2x1x32xf32, #tpu.memory_space<vmem>>, %arg12: memref<2x1x32xf32, #tpu.memory_space<vmem>>, %arg13: memref<2x32x64xf32, #tpu.memory_space<vmem>>, %arg14: memref<2x1x64xf32, #tpu.memory_space<vmem>>, %arg15: memref<2x64x32xf32, #tpu.memory_space<vmem>>, %arg16: memref<2x1x32xf32, #tpu.memory_space<vmem>>, %arg17: memref<1x32xf32, #tpu.memory_space<vmem>>, %arg18: memref<1x32xf32, #tpu.memory_space<vmem>>, %arg19: memref<32x4xf32, #tpu.memory_space<vmem>>, %arg20: memref<1x4xf32, #tpu.memory_space<vmem>>, %arg21: memref<1x4xf32, #tpu.memory_space<vmem>>, %arg22: memref<1x4xf32, #tpu.memory_space<vmem>>, %arg23: memref<16x32xf32, #tpu.memory_space<vmem>>) attributes {dimension_semantics = [], scalar_prefetch = 0 : i64, scratch_operands = 1 : i64, tpu.core_type = #tpu.core_type<tc>} {
    %c0 = arith.constant 0 : index
    %c0_0 = arith.constant 0 : index
    %0 = vector.load %arg0[%c0, %c0_0] : memref<16x32xf32, #tpu.memory_space<vmem>>, vector<16x32xf32>
    %c0_1 = arith.constant 0 : index
    %c0_2 = arith.constant 0 : index
    %1 = vector.load %arg1[%c0_1, %c0_2] : memref<32x32xf32, #tpu.memory_space<vmem>>, vector<32x32xf32>
    %cst = arith.constant dense<0.000000e+00> : vector<16x32xf32>
    %2 = tpu.matmul %0, %1, %cst {dimension_numbers = #tpu.dot_dimension_numbers<[1], [0], [0], [1], [0, 0, 1, 1], [], []>} : vector<16x32xf32>, vector<32x32xf32>, vector<16x32xf32> -> vector<16x32xf32>
    %c0_3 = arith.constant 0 : index
    %c0_4 = arith.constant 0 : index
    %3 = vector.load %arg2[%c0_3, %c0_4] : memref<1x32xf32, #tpu.memory_space<vmem>>, vector<1x32xf32>
    %4 = vector.broadcast %3 : vector<1x32xf32> to vector<16x32xf32>
    %5 = arith.addf %2, %4 : vector<16x32xf32>
    %cst_5 = arith.constant 0.000000e+00 : f32
    %6 = vector.broadcast %cst_5 : f32 to vector<16x32xf32>
    %7 = arith.maximumf %5, %6 : vector<16x32xf32>
    %8 = tpu.iota {dimensions = array<i32: 0>} : vector<16x1xi32>
    %c0_i32 = arith.constant 0 : i32
    %9 = vector.broadcast %c0_i32 : i32 to vector<16x1xi32>
    %10 = arith.cmpi eq, %8, %9 : vector<16x1xi32>
    %c0_6 = arith.constant 0 : index
    %c0_7 = arith.constant 0 : index
    %11 = vector.load %arg3[%c0_6, %c0_7] : memref<1x32xf32, #tpu.memory_space<vmem>>, vector<1x32xf32>
    %12 = vector.shape_cast %10 : vector<16x1xi1> to vector<16x1xi1>
    %13 = vector.broadcast %12 : vector<16x1xi1> to vector<16x32xi1>
    %14 = vector.shape_cast %11 : vector<1x32xf32> to vector<1x32xf32>
    %15 = vector.broadcast %14 : vector<1x32xf32> to vector<16x32xf32>
    %16 = arith.select %13, %15, %7 : vector<16x32xi1>, vector<16x32xf32>
    %c0_8 = arith.constant 0 : index
    %c0_9 = arith.constant 0 : index
    %17 = vector.load %arg23[%c0_8, %c0_9] : memref<16x32xf32, #tpu.memory_space<vmem>>, vector<16x32xf32>
    tpu.vector_store %arg23[%c0_8, %c0_9], %16 {strides = array<i32>} : memref<16x32xf32, #tpu.memory_space<vmem>>, vector<16x32xf32>,
    %18 = tpu.iota {dimensions = array<i32: 1>} : vector<1x16xi32>
    %c9_i32 = arith.constant 9 : i32
    %19 = vector.broadcast %c9_i32 : i32 to vector<1x16xi32>
    %20 = arith.cmpi slt, %18, %19 : vector<1x16xi32>
    %cst_10 = arith.constant 0.000000e+00 : f32
    %cst_11 = arith.constant -1.000000e+30 : f32
    %21 = vector.broadcast %cst_10 : f32 to vector<1x16xf32>
    %22 = vector.broadcast %cst_11 : f32 to vector<1x16xf32>
    %23 = arith.select %20, %21, %22 : vector<1x16xi1>, vector<1x16xf32>
    %c0_12 = arith.constant 0 : index
    %c0_13 = arith.constant 0 : index
    %24 = vector.load %arg23[%c0_12, %c0_13] : memref<16x32xf32, #tpu.memory_space<vmem>>, vector<16x32xf32>
    %c0_14 = arith.constant 0 : index
    %c0_15 = arith.constant 0 : index
    %c0_16 = arith.constant 0 : index
    %25 = vector.load %arg4[%c0_14, %c0_15, %c0_16] : memref<2x1x32xf32, #tpu.memory_space<vmem>>, vector<1x1x32xf32>
    %26 = vector.shape_cast %25 : vector<1x1x32xf32> to vector<1x32xf32>
    %c0_17 = arith.constant 0 : index
    %c0_18 = arith.constant 0 : index
    %c0_19 = arith.constant 0 : index
    %27 = vector.load %arg5[%c0_17, %c0_18, %c0_19] : memref<2x1x32xf32, #tpu.memory_space<vmem>>, vector<1x1x32xf32>
    %28 = vector.shape_cast %27 : vector<1x1x32xf32> to vector<1x32xf32>
    %cst_20 = arith.constant dense<0.000000e+00> : vector<16xf32>
    %29 = vector.multi_reduction <add>, %24, %cst_20 [1] : vector<16x32xf32> to vector<16xf32>
    %30 = vector.shape_cast %29 : vector<16xf32> to vector<16x1xf32>
    %cst_21 = arith.constant 3.200000e+01 : f32
    %31 = vector.broadcast %cst_21 : f32 to vector<16x1xf32>
    %32 = arith.divf %30, %31 : vector<16x1xf32>
    %33 = vector.broadcast %32 : vector<16x1xf32> to vector<16x32xf32>
    %34 = arith.subf %24, %33 : vector<16x32xf32>
    %35 = arith.mulf %34, %34 : vector<16x32xf32>
    %cst_22 = arith.constant dense<0.000000e+00> : vector<16xf32>
    %36 = vector.multi_reduction <add>, %35, %cst_22 [1] : vector<16x32xf32> to vector<16xf32>
    %37 = vector.shape_cast %36 : vector<16xf32> to vector<16x1xf32>
    %cst_23 = arith.constant 3.200000e+01 : f32
    %38 = vector.broadcast %cst_23 : f32 to vector<16x1xf32>
    %39 = arith.divf %37, %38 : vector<16x1xf32>
    %cst_24 = arith.constant 9.99999974E-6 : f32
    %40 = vector.broadcast %cst_24 : f32 to vector<16x1xf32>
    %41 = arith.addf %39, %40 : vector<16x1xf32>
    %42 = math.rsqrt %41 : vector<16x1xf32>
    %43 = vector.broadcast %42 : vector<16x1xf32> to vector<16x32xf32>
    %44 = arith.mulf %34, %43 : vector<16x32xf32>
    %45 = vector.broadcast %26 : vector<1x32xf32> to vector<16x32xf32>
    %46 = arith.mulf %44, %45 : vector<16x32xf32>
    %47 = vector.broadcast %28 : vector<1x32xf32> to vector<16x32xf32>
    %48 = arith.addf %46, %47 : vector<16x32xf32>
    %cst_25 = arith.constant 0.000000e+00 : f32
    %49 = vector.broadcast %cst_25 : f32 to vector<16x32xf32>
    %c0_26 = arith.constant 0 : index
    %c0_27 = arith.constant 0 : index
    %c0_28 = arith.constant 0 : index
    %c0_29 = arith.constant 0 : index
    %50 = vector.load %arg6[%c0_26, %c0_27, %c0_28, %c0_29] : memref<2x2x32x16xf32, #tpu.memory_space<vmem>>, vector<1x1x32x16xf32>
    %51 = vector.shape_cast %50 : vector<1x1x32x16xf32> to vector<32x16xf32>
    %cst_30 = arith.constant dense<0.000000e+00> : vector<16x16xf32>
    %52 = tpu.matmul %48, %51, %cst_30 {dimension_numbers = #tpu.dot_dimension_numbers<[1], [0], [0], [1], [0, 0, 1, 1], [], []>} : vector<16x32xf32>, vector<32x16xf32>, vector<16x16xf32> -> vector<16x16xf32>
    %c0_31 = arith.constant 0 : index
    %c0_32 = arith.constant 0 : index
    %c0_33 = arith.constant 0 : index
    %c0_34 = arith.constant 0 : index
    %53 = vector.load %arg7[%c0_31, %c0_32, %c0_33, %c0_34] : memref<2x2x32x16xf32, #tpu.memory_space<vmem>>, vector<1x1x32x16xf32>
    %54 = vector.shape_cast %53 : vector<1x1x32x16xf32> to vector<32x16xf32>
    %cst_35 = arith.constant dense<0.000000e+00> : vector<16x16xf32>
    %55 = tpu.matmul %48, %54, %cst_35 {dimension_numbers = #tpu.dot_dimension_numbers<[1], [0], [0], [1], [0, 0, 1, 1], [], []>} : vector<16x32xf32>, vector<32x16xf32>, vector<16x16xf32> -> vector<16x16xf32>
    %c0_36 = arith.constant 0 : index
    %c0_37 = arith.constant 0 : index
    %c0_38 = arith.constant 0 : index
    %c0_39 = arith.constant 0 : index
    %56 = vector.load %arg8[%c0_36, %c0_37, %c0_38, %c0_39] : memref<2x2x32x16xf32, #tpu.memory_space<vmem>>, vector<1x1x32x16xf32>
    %57 = vector.shape_cast %56 : vector<1x1x32x16xf32> to vector<32x16xf32>
    %cst_40 = arith.constant dense<0.000000e+00> : vector<16x16xf32>
    %58 = tpu.matmul %48, %57, %cst_40 {dimension_numbers = #tpu.dot_dimension_numbers<[1], [0], [0], [1], [0, 0, 1, 1], [], []>} : vector<16x32xf32>, vector<32x16xf32>, vector<16x16xf32> -> vector<16x16xf32>
    %59 = tpu.transpose %55, [1, 0] : vector<16x16xf32> -> vector<16x16xf32>
    %cst_41 = arith.constant dense<0.000000e+00> : vector<16x16xf32>
    %60 = tpu.matmul %52, %59, %cst_41 {dimension_numbers = #tpu.dot_dimension_numbers<[1], [0], [0], [1], [0, 0, 1, 1], [], []>} : vector<16x16xf32>, vector<16x16xf32>, vector<16x16xf32> -> vector<16x16xf32>
    %61 = vector.broadcast %23 : vector<1x16xf32> to vector<16x16xf32>
    %62 = arith.addf %60, %61 : vector<16x16xf32>
    %cst_42 = arith.constant dense<0xFF800000> : vector<16xf32>
    %63 = vector.multi_reduction <maximumf>, %62, %cst_42 [1] : vector<16x16xf32> to vector<16xf32>
    %64 = vector.shape_cast %63 : vector<16xf32> to vector<16x1xf32>
    %65 = vector.broadcast %64 : vector<16x1xf32> to vector<16x16xf32>
    %66 = arith.subf %62, %65 : vector<16x16xf32>
    %67 = math.exp %66 : vector<16x16xf32>
    %cst_43 = arith.constant dense<0.000000e+00> : vector<16xf32>
    %68 = vector.multi_reduction <add>, %67, %cst_43 [1] : vector<16x16xf32> to vector<16xf32>
    %69 = vector.shape_cast %68 : vector<16xf32> to vector<16x1xf32>
    %70 = vector.broadcast %69 : vector<16x1xf32> to vector<16x16xf32>
    %71 = arith.divf %67, %70 : vector<16x16xf32>
    %cst_44 = arith.constant dense<0.000000e+00> : vector<16x16xf32>
    %72 = tpu.matmul %71, %58, %cst_44 {dimension_numbers = #tpu.dot_dimension_numbers<[1], [0], [0], [1], [0, 0, 1, 1], [], []>} : vector<16x16xf32>, vector<16x16xf32>, vector<16x16xf32> -> vector<16x16xf32>
    %c0_45 = arith.constant 0 : index
    %c0_46 = arith.constant 0 : index
    %c0_47 = arith.constant 0 : index
    %c0_48 = arith.constant 0 : index
    %73 = vector.load %arg9[%c0_45, %c0_46, %c0_47, %c0_48] : memref<2x2x16x32xf32, #tpu.memory_space<vmem>>, vector<1x1x16x32xf32>
    %74 = vector.shape_cast %73 : vector<1x1x16x32xf32> to vector<16x32xf32>
    %cst_49 = arith.constant dense<0.000000e+00> : vector<16x32xf32>
    %75 = tpu.matmul %72, %74, %cst_49 {dimension_numbers = #tpu.dot_dimension_numbers<[1], [0], [0], [1], [0, 0, 1, 1], [], []>} : vector<16x16xf32>, vector<16x32xf32>, vector<16x32xf32> -> vector<16x32xf32>
    %76 = arith.addf %49, %75 : vector<16x32xf32>
    %c0_50 = arith.constant 0 : index
    %c1 = arith.constant 1 : index
    %c0_51 = arith.constant 0 : index
    %c0_52 = arith.constant 0 : index
    %77 = vector.load %arg6[%c0_50, %c1, %c0_51, %c0_52] : memref<2x2x32x16xf32, #tpu.memory_space<vmem>>, vector<1x1x32x16xf32>
    %78 = vector.shape_cast %77 : vector<1x1x32x16xf32> to vector<32x16xf32>
    %cst_53 = arith.constant dense<0.000000e+00> : vector<16x16xf32>
    %79 = tpu.matmul %48, %78, %cst_53 {dimension_numbers = #tpu.dot_dimension_numbers<[1], [0], [0], [1], [0, 0, 1, 1], [], []>} : vector<16x32xf32>, vector<32x16xf32>, vector<16x16xf32> -> vector<16x16xf32>
    %c0_54 = arith.constant 0 : index
    %c1_55 = arith.constant 1 : index
    %c0_56 = arith.constant 0 : index
    %c0_57 = arith.constant 0 : index
    %80 = vector.load %arg7[%c0_54, %c1_55, %c0_56, %c0_57] : memref<2x2x32x16xf32, #tpu.memory_space<vmem>>, vector<1x1x32x16xf32>
    %81 = vector.shape_cast %80 : vector<1x1x32x16xf32> to vector<32x16xf32>
    %cst_58 = arith.constant dense<0.000000e+00> : vector<16x16xf32>
    %82 = tpu.matmul %48, %81, %cst_58 {dimension_numbers = #tpu.dot_dimension_numbers<[1], [0], [0], [1], [0, 0, 1, 1], [], []>} : vector<16x32xf32>, vector<32x16xf32>, vector<16x16xf32> -> vector<16x16xf32>
    %c0_59 = arith.constant 0 : index
    %c1_60 = arith.constant 1 : index
    %c0_61 = arith.constant 0 : index
    %c0_62 = arith.constant 0 : index
    %83 = vector.load %arg8[%c0_59, %c1_60, %c0_61, %c0_62] : memref<2x2x32x16xf32, #tpu.memory_space<vmem>>, vector<1x1x32x16xf32>
    %84 = vector.shape_cast %83 : vector<1x1x32x16xf32> to vector<32x16xf32>
    %cst_63 = arith.constant dense<0.000000e+00> : vector<16x16xf32>
    %85 = tpu.matmul %48, %84, %cst_63 {dimension_numbers = #tpu.dot_dimension_numbers<[1], [0], [0], [1], [0, 0, 1, 1], [], []>} : vector<16x32xf32>, vector<32x16xf32>, vector<16x16xf32> -> vector<16x16xf32>
    %86 = tpu.transpose %82, [1, 0] : vector<16x16xf32> -> vector<16x16xf32>
    %cst_64 = arith.constant dense<0.000000e+00> : vector<16x16xf32>
    %87 = tpu.matmul %79, %86, %cst_64 {dimension_numbers = #tpu.dot_dimension_numbers<[1], [0], [0], [1], [0, 0, 1, 1], [], []>} : vector<16x16xf32>, vector<16x16xf32>, vector<16x16xf32> -> vector<16x16xf32>
    %88 = vector.broadcast %23 : vector<1x16xf32> to vector<16x16xf32>
    %89 = arith.addf %87, %88 : vector<16x16xf32>
    %cst_65 = arith.constant dense<0xFF800000> : vector<16xf32>
    %90 = vector.multi_reduction <maximumf>, %89, %cst_65 [1] : vector<16x16xf32> to vector<16xf32>
    %91 = vector.shape_cast %90 : vector<16xf32> to vector<16x1xf32>
    %92 = vector.broadcast %91 : vector<16x1xf32> to vector<16x16xf32>
    %93 = arith.subf %89, %92 : vector<16x16xf32>
    %94 = math.exp %93 : vector<16x16xf32>
    %cst_66 = arith.constant dense<0.000000e+00> : vector<16xf32>
    %95 = vector.multi_reduction <add>, %94, %cst_66 [1] : vector<16x16xf32> to vector<16xf32>
    %96 = vector.shape_cast %95 : vector<16xf32> to vector<16x1xf32>
    %97 = vector.broadcast %96 : vector<16x1xf32> to vector<16x16xf32>
    %98 = arith.divf %94, %97 : vector<16x16xf32>
    %cst_67 = arith.constant dense<0.000000e+00> : vector<16x16xf32>
    %99 = tpu.matmul %98, %85, %cst_67 {dimension_numbers = #tpu.dot_dimension_numbers<[1], [0], [0], [1], [0, 0, 1, 1], [], []>} : vector<16x16xf32>, vector<16x16xf32>, vector<16x16xf32> -> vector<16x16xf32>
    %c0_68 = arith.constant 0 : index
    %c1_69 = arith.constant 1 : index
    %c0_70 = arith.constant 0 : index
    %c0_71 = arith.constant 0 : index
    %100 = vector.load %arg9[%c0_68, %c1_69, %c0_70, %c0_71] : memref<2x2x16x32xf32, #tpu.memory_space<vmem>>, vector<1x1x16x32xf32>
    %101 = vector.shape_cast %100 : vector<1x1x16x32xf32> to vector<16x32xf32>
    %cst_72 = arith.constant dense<0.000000e+00> : vector<16x32xf32>
    %102 = tpu.matmul %99, %101, %cst_72 {dimension_numbers = #tpu.dot_dimension_numbers<[1], [0], [0], [1], [0, 0, 1, 1], [], []>} : vector<16x16xf32>, vector<16x32xf32>, vector<16x32xf32> -> vector<16x32xf32>
    %103 = arith.addf %76, %102 : vector<16x32xf32>
    %104 = arith.addf %24, %103 : vector<16x32xf32>
    %c0_73 = arith.constant 0 : index
    %c0_74 = arith.constant 0 : index
    %c0_75 = arith.constant 0 : index
    %105 = vector.load %arg10[%c0_73, %c0_74, %c0_75] : memref<2x1x32xf32, #tpu.memory_space<vmem>>, vector<1x1x32xf32>
    %106 = vector.shape_cast %105 : vector<1x1x32xf32> to vector<1x32xf32>
    %107 = vector.broadcast %106 : vector<1x32xf32> to vector<16x32xf32>
    %108 = arith.addf %104, %107 : vector<16x32xf32>
    %c0_76 = arith.constant 0 : index
    %c0_77 = arith.constant 0 : index
    %c0_78 = arith.constant 0 : index
    %109 = vector.load %arg11[%c0_76, %c0_77, %c0_78] : memref<2x1x32xf32, #tpu.memory_space<vmem>>, vector<1x1x32xf32>
    %110 = vector.shape_cast %109 : vector<1x1x32xf32> to vector<1x32xf32>
    %c0_79 = arith.constant 0 : index
    %c0_80 = arith.constant 0 : index
    %c0_81 = arith.constant 0 : index
    %111 = vector.load %arg12[%c0_79, %c0_80, %c0_81] : memref<2x1x32xf32, #tpu.memory_space<vmem>>, vector<1x1x32xf32>
    %112 = vector.shape_cast %111 : vector<1x1x32xf32> to vector<1x32xf32>
    %cst_82 = arith.constant dense<0.000000e+00> : vector<16xf32>
    %113 = vector.multi_reduction <add>, %108, %cst_82 [1] : vector<16x32xf32> to vector<16xf32>
    %114 = vector.shape_cast %113 : vector<16xf32> to vector<16x1xf32>
    %cst_83 = arith.constant 3.200000e+01 : f32
    %115 = vector.broadcast %cst_83 : f32 to vector<16x1xf32>
    %116 = arith.divf %114, %115 : vector<16x1xf32>
    %117 = vector.broadcast %116 : vector<16x1xf32> to vector<16x32xf32>
    %118 = arith.subf %108, %117 : vector<16x32xf32>
    %119 = arith.mulf %118, %118 : vector<16x32xf32>
    %cst_84 = arith.constant dense<0.000000e+00> : vector<16xf32>
    %120 = vector.multi_reduction <add>, %119, %cst_84 [1] : vector<16x32xf32> to vector<16xf32>
    %121 = vector.shape_cast %120 : vector<16xf32> to vector<16x1xf32>
    %cst_85 = arith.constant 3.200000e+01 : f32
    %122 = vector.broadcast %cst_85 : f32 to vector<16x1xf32>
    %123 = arith.divf %121, %122 : vector<16x1xf32>
    %cst_86 = arith.constant 9.99999974E-6 : f32
    %124 = vector.broadcast %cst_86 : f32 to vector<16x1xf32>
    %125 = arith.addf %123, %124 : vector<16x1xf32>
    %126 = math.rsqrt %125 : vector<16x1xf32>
    %127 = vector.broadcast %126 : vector<16x1xf32> to vector<16x32xf32>
    %128 = arith.mulf %118, %127 : vector<16x32xf32>
    %129 = vector.broadcast %110 : vector<1x32xf32> to vector<16x32xf32>
    %130 = arith.mulf %128, %129 : vector<16x32xf32>
    %131 = vector.broadcast %112 : vector<1x32xf32> to vector<16x32xf32>
    %132 = arith.addf %130, %131 : vector<16x32xf32>
    %c0_87 = arith.constant 0 : index
    %c0_88 = arith.constant 0 : index
    %c0_89 = arith.constant 0 : index
    %133 = vector.load %arg13[%c0_87, %c0_88, %c0_89] : memref<2x32x64xf32, #tpu.memory_space<vmem>>, vector<1x32x64xf32>
    %134 = vector.shape_cast %133 : vector<1x32x64xf32> to vector<32x64xf32>
    %cst_90 = arith.constant dense<0.000000e+00> : vector<16x64xf32>
    %135 = tpu.matmul %132, %134, %cst_90 {dimension_numbers = #tpu.dot_dimension_numbers<[1], [0], [0], [1], [0, 0, 1, 1], [], []>} : vector<16x32xf32>, vector<32x64xf32>, vector<16x64xf32> -> vector<16x64xf32>
    %c0_91 = arith.constant 0 : index
    %c0_92 = arith.constant 0 : index
    %c0_93 = arith.constant 0 : index
    %136 = vector.load %arg14[%c0_91, %c0_92, %c0_93] : memref<2x1x64xf32, #tpu.memory_space<vmem>>, vector<1x1x64xf32>
    %137 = vector.shape_cast %136 : vector<1x1x64xf32> to vector<1x64xf32>
    %138 = vector.broadcast %137 : vector<1x64xf32> to vector<16x64xf32>
    %139 = arith.addf %135, %138 : vector<16x64xf32>
    %cst_94 = arith.constant 5.000000e-01 : f32
    %140 = vector.broadcast %cst_94 : f32 to vector<16x64xf32>
    %141 = arith.mulf %140, %139 : vector<16x64xf32>
    %cst_95 = arith.constant 0.707106769 : f32
    %142 = vector.broadcast %cst_95 : f32 to vector<16x64xf32>
    %143 = arith.mulf %139, %142 : vector<16x64xf32>
    %cst_96 = arith.constant 0.000000e+00 : f32
    %144 = vector.broadcast %cst_96 : f32 to vector<16x64xf32>
    %145 = arith.cmpf oge, %143, %144 : vector<16x64xf32>
    %cst_97 = arith.constant 1.000000e+00 : f32
    %cst_98 = arith.constant -1.000000e+00 : f32
    %146 = vector.broadcast %cst_97 : f32 to vector<16x64xf32>
    %147 = vector.broadcast %cst_98 : f32 to vector<16x64xf32>
    %148 = arith.select %145, %146, %147 : vector<16x64xi1>, vector<16x64xf32>
    %149 = math.absf %143 : vector<16x64xf32>
    %cst_99 = arith.constant 0.327591091 : f32
    %150 = vector.broadcast %cst_99 : f32 to vector<16x64xf32>
    %151 = arith.mulf %150, %149 : vector<16x64xf32>
    %cst_100 = arith.constant 1.000000e+00 : f32
    %152 = vector.broadcast %cst_100 : f32 to vector<16x64xf32>
    %153 = arith.addf %152, %151 : vector<16x64xf32>
    %cst_101 = arith.constant 1.000000e+00 : f32
    %154 = vector.broadcast %cst_101 : f32 to vector<16x64xf32>
    %155 = arith.divf %154, %153 : vector<16x64xf32>
    %cst_102 = arith.constant 1.06140542 : f32
    %156 = vector.broadcast %cst_102 : f32 to vector<16x64xf32>
    %157 = arith.mulf %156, %155 : vector<16x64xf32>
    %cst_103 = arith.constant -1.45315206 : f32
    %158 = vector.broadcast %cst_103 : f32 to vector<16x64xf32>
    %159 = arith.addf %157, %158 : vector<16x64xf32>
    %160 = arith.mulf %159, %155 : vector<16x64xf32>
    %cst_104 = arith.constant 1.42141378 : f32
    %161 = vector.broadcast %cst_104 : f32 to vector<16x64xf32>
    %162 = arith.addf %160, %161 : vector<16x64xf32>
    %163 = arith.mulf %162, %155 : vector<16x64xf32>
    %cst_105 = arith.constant -0.284496725 : f32
    %164 = vector.broadcast %cst_105 : f32 to vector<16x64xf32>
    %165 = arith.addf %163, %164 : vector<16x64xf32>
    %166 = arith.mulf %165, %155 : vector<16x64xf32>
    %cst_106 = arith.constant 0.254829586 : f32
    %167 = vector.broadcast %cst_106 : f32 to vector<16x64xf32>
    %168 = arith.addf %166, %167 : vector<16x64xf32>
    %169 = arith.mulf %168, %155 : vector<16x64xf32>
    %cst_107 = arith.constant 0.000000e+00 : f32
    %170 = vector.broadcast %cst_107 : f32 to vector<16x64xf32>
    %171 = arith.subf %170, %149 : vector<16x64xf32>
    %172 = arith.mulf %171, %149 : vector<16x64xf32>
    %173 = math.exp %172 : vector<16x64xf32>
    %174 = arith.mulf %169, %173 : vector<16x64xf32>
    %cst_108 = arith.constant 1.000000e+00 : f32
    %175 = vector.broadcast %cst_108 : f32 to vector<16x64xf32>
    %176 = arith.subf %175, %174 : vector<16x64xf32>
    %177 = arith.mulf %148, %176 : vector<16x64xf32>
    %cst_109 = arith.constant 1.000000e+00 : f32
    %178 = vector.broadcast %cst_109 : f32 to vector<16x64xf32>
    %179 = arith.addf %178, %177 : vector<16x64xf32>
    %180 = arith.mulf %141, %179 : vector<16x64xf32>
    %c0_110 = arith.constant 0 : index
    %c0_111 = arith.constant 0 : index
    %c0_112 = arith.constant 0 : index
    %181 = vector.load %arg15[%c0_110, %c0_111, %c0_112] : memref<2x64x32xf32, #tpu.memory_space<vmem>>, vector<1x64x32xf32>
    %182 = vector.shape_cast %181 : vector<1x64x32xf32> to vector<64x32xf32>
    %cst_113 = arith.constant dense<0.000000e+00> : vector<16x32xf32>
    %183 = tpu.matmul %180, %182, %cst_113 {dimension_numbers = #tpu.dot_dimension_numbers<[1], [0], [0], [1], [0, 0, 1, 1], [], []>} : vector<16x64xf32>, vector<64x32xf32>, vector<16x32xf32> -> vector<16x32xf32>
    %c0_114 = arith.constant 0 : index
    %c0_115 = arith.constant 0 : index
    %c0_116 = arith.constant 0 : index
    %184 = vector.load %arg16[%c0_114, %c0_115, %c0_116] : memref<2x1x32xf32, #tpu.memory_space<vmem>>, vector<1x1x32xf32>
    %185 = vector.shape_cast %184 : vector<1x1x32xf32> to vector<1x32xf32>
    %186 = vector.broadcast %185 : vector<1x32xf32> to vector<16x32xf32>
    %187 = arith.addf %183, %186 : vector<16x32xf32>
    %188 = arith.addf %108, %187 : vector<16x32xf32>
    %c0_117 = arith.constant 0 : index
    %c0_118 = arith.constant 0 : index
    %189 = vector.load %arg23[%c0_117, %c0_118] : memref<16x32xf32, #tpu.memory_space<vmem>>, vector<16x32xf32>
    tpu.vector_store %arg23[%c0_117, %c0_118], %188 {strides = array<i32>} : memref<16x32xf32, #tpu.memory_space<vmem>>, vector<16x32xf32>,
    %c0_119 = arith.constant 0 : index
    %c0_120 = arith.constant 0 : index
    %190 = vector.load %arg23[%c0_119, %c0_120] : memref<16x32xf32, #tpu.memory_space<vmem>>, vector<16x32xf32>
    %c1_121 = arith.constant 1 : index
    %c0_122 = arith.constant 0 : index
    %c0_123 = arith.constant 0 : index
    %191 = vector.load %arg4[%c1_121, %c0_122, %c0_123] : memref<2x1x32xf32, #tpu.memory_space<vmem>>, vector<1x1x32xf32>
    %192 = vector.shape_cast %191 : vector<1x1x32xf32> to vector<1x32xf32>
    %c1_124 = arith.constant 1 : index
    %c0_125 = arith.constant 0 : index
    %c0_126 = arith.constant 0 : index
    %193 = vector.load %arg5[%c1_124, %c0_125, %c0_126] : memref<2x1x32xf32, #tpu.memory_space<vmem>>, vector<1x1x32xf32>
    %194 = vector.shape_cast %193 : vector<1x1x32xf32> to vector<1x32xf32>
    %cst_127 = arith.constant dense<0.000000e+00> : vector<16xf32>
    %195 = vector.multi_reduction <add>, %190, %cst_127 [1] : vector<16x32xf32> to vector<16xf32>
    %196 = vector.shape_cast %195 : vector<16xf32> to vector<16x1xf32>
    %cst_128 = arith.constant 3.200000e+01 : f32
    %197 = vector.broadcast %cst_128 : f32 to vector<16x1xf32>
    %198 = arith.divf %196, %197 : vector<16x1xf32>
    %199 = vector.broadcast %198 : vector<16x1xf32> to vector<16x32xf32>
    %200 = arith.subf %190, %199 : vector<16x32xf32>
    %201 = arith.mulf %200, %200 : vector<16x32xf32>
    %cst_129 = arith.constant dense<0.000000e+00> : vector<16xf32>
    %202 = vector.multi_reduction <add>, %201, %cst_129 [1] : vector<16x32xf32> to vector<16xf32>
    %203 = vector.shape_cast %202 : vector<16xf32> to vector<16x1xf32>
    %cst_130 = arith.constant 3.200000e+01 : f32
    %204 = vector.broadcast %cst_130 : f32 to vector<16x1xf32>
    %205 = arith.divf %203, %204 : vector<16x1xf32>
    %cst_131 = arith.constant 9.99999974E-6 : f32
    %206 = vector.broadcast %cst_131 : f32 to vector<16x1xf32>
    %207 = arith.addf %205, %206 : vector<16x1xf32>
    %208 = math.rsqrt %207 : vector<16x1xf32>
    %209 = vector.broadcast %208 : vector<16x1xf32> to vector<16x32xf32>
    %210 = arith.mulf %200, %209 : vector<16x32xf32>
    %211 = vector.broadcast %192 : vector<1x32xf32> to vector<16x32xf32>
    %212 = arith.mulf %210, %211 : vector<16x32xf32>
    %213 = vector.broadcast %194 : vector<1x32xf32> to vector<16x32xf32>
    %214 = arith.addf %212, %213 : vector<16x32xf32>
    %cst_132 = arith.constant 0.000000e+00 : f32
    %215 = vector.broadcast %cst_132 : f32 to vector<16x32xf32>
    %c1_133 = arith.constant 1 : index
    %c0_134 = arith.constant 0 : index
    %c0_135 = arith.constant 0 : index
    %c0_136 = arith.constant 0 : index
    %216 = vector.load %arg6[%c1_133, %c0_134, %c0_135, %c0_136] : memref<2x2x32x16xf32, #tpu.memory_space<vmem>>, vector<1x1x32x16xf32>
    %217 = vector.shape_cast %216 : vector<1x1x32x16xf32> to vector<32x16xf32>
    %cst_137 = arith.constant dense<0.000000e+00> : vector<16x16xf32>
    %218 = tpu.matmul %214, %217, %cst_137 {dimension_numbers = #tpu.dot_dimension_numbers<[1], [0], [0], [1], [0, 0, 1, 1], [], []>} : vector<16x32xf32>, vector<32x16xf32>, vector<16x16xf32> -> vector<16x16xf32>
    %c1_138 = arith.constant 1 : index
    %c0_139 = arith.constant 0 : index
    %c0_140 = arith.constant 0 : index
    %c0_141 = arith.constant 0 : index
    %219 = vector.load %arg7[%c1_138, %c0_139, %c0_140, %c0_141] : memref<2x2x32x16xf32, #tpu.memory_space<vmem>>, vector<1x1x32x16xf32>
    %220 = vector.shape_cast %219 : vector<1x1x32x16xf32> to vector<32x16xf32>
    %cst_142 = arith.constant dense<0.000000e+00> : vector<16x16xf32>
    %221 = tpu.matmul %214, %220, %cst_142 {dimension_numbers = #tpu.dot_dimension_numbers<[1], [0], [0], [1], [0, 0, 1, 1], [], []>} : vector<16x32xf32>, vector<32x16xf32>, vector<16x16xf32> -> vector<16x16xf32>
    %c1_143 = arith.constant 1 : index
    %c0_144 = arith.constant 0 : index
    %c0_145 = arith.constant 0 : index
    %c0_146 = arith.constant 0 : index
    %222 = vector.load %arg8[%c1_143, %c0_144, %c0_145, %c0_146] : memref<2x2x32x16xf32, #tpu.memory_space<vmem>>, vector<1x1x32x16xf32>
    %223 = vector.shape_cast %222 : vector<1x1x32x16xf32> to vector<32x16xf32>
    %cst_147 = arith.constant dense<0.000000e+00> : vector<16x16xf32>
    %224 = tpu.matmul %214, %223, %cst_147 {dimension_numbers = #tpu.dot_dimension_numbers<[1], [0], [0], [1], [0, 0, 1, 1], [], []>} : vector<16x32xf32>, vector<32x16xf32>, vector<16x16xf32> -> vector<16x16xf32>
    %225 = tpu.transpose %221, [1, 0] : vector<16x16xf32> -> vector<16x16xf32>
    %cst_148 = arith.constant dense<0.000000e+00> : vector<16x16xf32>
    %226 = tpu.matmul %218, %225, %cst_148 {dimension_numbers = #tpu.dot_dimension_numbers<[1], [0], [0], [1], [0, 0, 1, 1], [], []>} : vector<16x16xf32>, vector<16x16xf32>, vector<16x16xf32> -> vector<16x16xf32>
    %227 = vector.broadcast %23 : vector<1x16xf32> to vector<16x16xf32>
    %228 = arith.addf %226, %227 : vector<16x16xf32>
    %cst_149 = arith.constant dense<0xFF800000> : vector<16xf32>
    %229 = vector.multi_reduction <maximumf>, %228, %cst_149 [1] : vector<16x16xf32> to vector<16xf32>
    %230 = vector.shape_cast %229 : vector<16xf32> to vector<16x1xf32>
    %231 = vector.broadcast %230 : vector<16x1xf32> to vector<16x16xf32>
    %232 = arith.subf %228, %231 : vector<16x16xf32>
    %233 = math.exp %232 : vector<16x16xf32>
    %cst_150 = arith.constant dense<0.000000e+00> : vector<16xf32>
    %234 = vector.multi_reduction <add>, %233, %cst_150 [1] : vector<16x16xf32> to vector<16xf32>
    %235 = vector.shape_cast %234 : vector<16xf32> to vector<16x1xf32>
    %236 = vector.broadcast %235 : vector<16x1xf32> to vector<16x16xf32>
    %237 = arith.divf %233, %236 : vector<16x16xf32>
    %cst_151 = arith.constant dense<0.000000e+00> : vector<16x16xf32>
    %238 = tpu.matmul %237, %224, %cst_151 {dimension_numbers = #tpu.dot_dimension_numbers<[1], [0], [0], [1], [0, 0, 1, 1], [], []>} : vector<16x16xf32>, vector<16x16xf32>, vector<16x16xf32> -> vector<16x16xf32>
    %c1_152 = arith.constant 1 : index
    %c0_153 = arith.constant 0 : index
    %c0_154 = arith.constant 0 : index
    %c0_155 = arith.constant 0 : index
    %239 = vector.load %arg9[%c1_152, %c0_153, %c0_154, %c0_155] : memref<2x2x16x32xf32, #tpu.memory_space<vmem>>, vector<1x1x16x32xf32>
    %240 = vector.shape_cast %239 : vector<1x1x16x32xf32> to vector<16x32xf32>
    %cst_156 = arith.constant dense<0.000000e+00> : vector<16x32xf32>
    %241 = tpu.matmul %238, %240, %cst_156 {dimension_numbers = #tpu.dot_dimension_numbers<[1], [0], [0], [1], [0, 0, 1, 1], [], []>} : vector<16x16xf32>, vector<16x32xf32>, vector<16x32xf32> -> vector<16x32xf32>
    %242 = arith.addf %215, %241 : vector<16x32xf32>
    %c1_157 = arith.constant 1 : index
    %c1_158 = arith.constant 1 : index
    %c0_159 = arith.constant 0 : index
    %c0_160 = arith.constant 0 : index
    %243 = vector.load %arg6[%c1_157, %c1_158, %c0_159, %c0_160] : memref<2x2x32x16xf32, #tpu.memory_space<vmem>>, vector<1x1x32x16xf32>
    %244 = vector.shape_cast %243 : vector<1x1x32x16xf32> to vector<32x16xf32>
    %cst_161 = arith.constant dense<0.000000e+00> : vector<16x16xf32>
    %245 = tpu.matmul %214, %244, %cst_161 {dimension_numbers = #tpu.dot_dimension_numbers<[1], [0], [0], [1], [0, 0, 1, 1], [], []>} : vector<16x32xf32>, vector<32x16xf32>, vector<16x16xf32> -> vector<16x16xf32>
    %c1_162 = arith.constant 1 : index
    %c1_163 = arith.constant 1 : index
    %c0_164 = arith.constant 0 : index
    %c0_165 = arith.constant 0 : index
    %246 = vector.load %arg7[%c1_162, %c1_163, %c0_164, %c0_165] : memref<2x2x32x16xf32, #tpu.memory_space<vmem>>, vector<1x1x32x16xf32>
    %247 = vector.shape_cast %246 : vector<1x1x32x16xf32> to vector<32x16xf32>
    %cst_166 = arith.constant dense<0.000000e+00> : vector<16x16xf32>
    %248 = tpu.matmul %214, %247, %cst_166 {dimension_numbers = #tpu.dot_dimension_numbers<[1], [0], [0], [1], [0, 0, 1, 1], [], []>} : vector<16x32xf32>, vector<32x16xf32>, vector<16x16xf32> -> vector<16x16xf32>
    %c1_167 = arith.constant 1 : index
    %c1_168 = arith.constant 1 : index
    %c0_169 = arith.constant 0 : index
    %c0_170 = arith.constant 0 : index
    %249 = vector.load %arg8[%c1_167, %c1_168, %c0_169, %c0_170] : memref<2x2x32x16xf32, #tpu.memory_space<vmem>>, vector<1x1x32x16xf32>
    %250 = vector.shape_cast %249 : vector<1x1x32x16xf32> to vector<32x16xf32>
    %cst_171 = arith.constant dense<0.000000e+00> : vector<16x16xf32>
    %251 = tpu.matmul %214, %250, %cst_171 {dimension_numbers = #tpu.dot_dimension_numbers<[1], [0], [0], [1], [0, 0, 1, 1], [], []>} : vector<16x32xf32>, vector<32x16xf32>, vector<16x16xf32> -> vector<16x16xf32>
    %252 = tpu.transpose %248, [1, 0] : vector<16x16xf32> -> vector<16x16xf32>
    %cst_172 = arith.constant dense<0.000000e+00> : vector<16x16xf32>
    %253 = tpu.matmul %245, %252, %cst_172 {dimension_numbers = #tpu.dot_dimension_numbers<[1], [0], [0], [1], [0, 0, 1, 1], [], []>} : vector<16x16xf32>, vector<16x16xf32>, vector<16x16xf32> -> vector<16x16xf32>
    %254 = vector.broadcast %23 : vector<1x16xf32> to vector<16x16xf32>
    %255 = arith.addf %253, %254 : vector<16x16xf32>
    %cst_173 = arith.constant dense<0xFF800000> : vector<16xf32>
    %256 = vector.multi_reduction <maximumf>, %255, %cst_173 [1] : vector<16x16xf32> to vector<16xf32>
    %257 = vector.shape_cast %256 : vector<16xf32> to vector<16x1xf32>
    %258 = vector.broadcast %257 : vector<16x1xf32> to vector<16x16xf32>
    %259 = arith.subf %255, %258 : vector<16x16xf32>
    %260 = math.exp %259 : vector<16x16xf32>
    %cst_174 = arith.constant dense<0.000000e+00> : vector<16xf32>
    %261 = vector.multi_reduction <add>, %260, %cst_174 [1] : vector<16x16xf32> to vector<16xf32>
    %262 = vector.shape_cast %261 : vector<16xf32> to vector<16x1xf32>
    %263 = vector.broadcast %262 : vector<16x1xf32> to vector<16x16xf32>
    %264 = arith.divf %260, %263 : vector<16x16xf32>
    %cst_175 = arith.constant dense<0.000000e+00> : vector<16x16xf32>
    %265 = tpu.matmul %264, %251, %cst_175 {dimension_numbers = #tpu.dot_dimension_numbers<[1], [0], [0], [1], [0, 0, 1, 1], [], []>} : vector<16x16xf32>, vector<16x16xf32>, vector<16x16xf32> -> vector<16x16xf32>
    %c1_176 = arith.constant 1 : index
    %c1_177 = arith.constant 1 : index
    %c0_178 = arith.constant 0 : index
    %c0_179 = arith.constant 0 : index
    %266 = vector.load %arg9[%c1_176, %c1_177, %c0_178, %c0_179] : memref<2x2x16x32xf32, #tpu.memory_space<vmem>>, vector<1x1x16x32xf32>
    %267 = vector.shape_cast %266 : vector<1x1x16x32xf32> to vector<16x32xf32>
    %cst_180 = arith.constant dense<0.000000e+00> : vector<16x32xf32>
    %268 = tpu.matmul %265, %267, %cst_180 {dimension_numbers = #tpu.dot_dimension_numbers<[1], [0], [0], [1], [0, 0, 1, 1], [], []>} : vector<16x16xf32>, vector<16x32xf32>, vector<16x32xf32> -> vector<16x32xf32>
    %269 = arith.addf %242, %268 : vector<16x32xf32>
    %270 = arith.addf %190, %269 : vector<16x32xf32>
    %c1_181 = arith.constant 1 : index
    %c0_182 = arith.constant 0 : index
    %c0_183 = arith.constant 0 : index
    %271 = vector.load %arg10[%c1_181, %c0_182, %c0_183] : memref<2x1x32xf32, #tpu.memory_space<vmem>>, vector<1x1x32xf32>
    %272 = vector.shape_cast %271 : vector<1x1x32xf32> to vector<1x32xf32>
    %273 = vector.broadcast %272 : vector<1x32xf32> to vector<16x32xf32>
    %274 = arith.addf %270, %273 : vector<16x32xf32>
    %c1_184 = arith.constant 1 : index
    %c0_185 = arith.constant 0 : index
    %c0_186 = arith.constant 0 : index
    %275 = vector.load %arg11[%c1_184, %c0_185, %c0_186] : memref<2x1x32xf32, #tpu.memory_space<vmem>>, vector<1x1x32xf32>
    %276 = vector.shape_cast %275 : vector<1x1x32xf32> to vector<1x32xf32>
    %c1_187 = arith.constant 1 : index
    %c0_188 = arith.constant 0 : index
    %c0_189 = arith.constant 0 : index
    %277 = vector.load %arg12[%c1_187, %c0_188, %c0_189] : memref<2x1x32xf32, #tpu.memory_space<vmem>>, vector<1x1x32xf32>
    %278 = vector.shape_cast %277 : vector<1x1x32xf32> to vector<1x32xf32>
    %cst_190 = arith.constant dense<0.000000e+00> : vector<16xf32>
    %279 = vector.multi_reduction <add>, %274, %cst_190 [1] : vector<16x32xf32> to vector<16xf32>
    %280 = vector.shape_cast %279 : vector<16xf32> to vector<16x1xf32>
    %cst_191 = arith.constant 3.200000e+01 : f32
    %281 = vector.broadcast %cst_191 : f32 to vector<16x1xf32>
    %282 = arith.divf %280, %281 : vector<16x1xf32>
    %283 = vector.broadcast %282 : vector<16x1xf32> to vector<16x32xf32>
    %284 = arith.subf %274, %283 : vector<16x32xf32>
    %285 = arith.mulf %284, %284 : vector<16x32xf32>
    %cst_192 = arith.constant dense<0.000000e+00> : vector<16xf32>
    %286 = vector.multi_reduction <add>, %285, %cst_192 [1] : vector<16x32xf32> to vector<16xf32>
    %287 = vector.shape_cast %286 : vector<16xf32> to vector<16x1xf32>
    %cst_193 = arith.constant 3.200000e+01 : f32
    %288 = vector.broadcast %cst_193 : f32 to vector<16x1xf32>
    %289 = arith.divf %287, %288 : vector<16x1xf32>
    %cst_194 = arith.constant 9.99999974E-6 : f32
    %290 = vector.broadcast %cst_194 : f32 to vector<16x1xf32>
    %291 = arith.addf %289, %290 : vector<16x1xf32>
    %292 = math.rsqrt %291 : vector<16x1xf32>
    %293 = vector.broadcast %292 : vector<16x1xf32> to vector<16x32xf32>
    %294 = arith.mulf %284, %293 : vector<16x32xf32>
    %295 = vector.broadcast %276 : vector<1x32xf32> to vector<16x32xf32>
    %296 = arith.mulf %294, %295 : vector<16x32xf32>
    %297 = vector.broadcast %278 : vector<1x32xf32> to vector<16x32xf32>
    %298 = arith.addf %296, %297 : vector<16x32xf32>
    %c1_195 = arith.constant 1 : index
    %c0_196 = arith.constant 0 : index
    %c0_197 = arith.constant 0 : index
    %299 = vector.load %arg13[%c1_195, %c0_196, %c0_197] : memref<2x32x64xf32, #tpu.memory_space<vmem>>, vector<1x32x64xf32>
    %300 = vector.shape_cast %299 : vector<1x32x64xf32> to vector<32x64xf32>
    %cst_198 = arith.constant dense<0.000000e+00> : vector<16x64xf32>
    %301 = tpu.matmul %298, %300, %cst_198 {dimension_numbers = #tpu.dot_dimension_numbers<[1], [0], [0], [1], [0, 0, 1, 1], [], []>} : vector<16x32xf32>, vector<32x64xf32>, vector<16x64xf32> -> vector<16x64xf32>
    %c1_199 = arith.constant 1 : index
    %c0_200 = arith.constant 0 : index
    %c0_201 = arith.constant 0 : index
    %302 = vector.load %arg14[%c1_199, %c0_200, %c0_201] : memref<2x1x64xf32, #tpu.memory_space<vmem>>, vector<1x1x64xf32>
    %303 = vector.shape_cast %302 : vector<1x1x64xf32> to vector<1x64xf32>
    %304 = vector.broadcast %303 : vector<1x64xf32> to vector<16x64xf32>
    %305 = arith.addf %301, %304 : vector<16x64xf32>
    %cst_202 = arith.constant 5.000000e-01 : f32
    %306 = vector.broadcast %cst_202 : f32 to vector<16x64xf32>
    %307 = arith.mulf %306, %305 : vector<16x64xf32>
    %cst_203 = arith.constant 0.707106769 : f32
    %308 = vector.broadcast %cst_203 : f32 to vector<16x64xf32>
    %309 = arith.mulf %305, %308 : vector<16x64xf32>
    %cst_204 = arith.constant 0.000000e+00 : f32
    %310 = vector.broadcast %cst_204 : f32 to vector<16x64xf32>
    %311 = arith.cmpf oge, %309, %310 : vector<16x64xf32>
    %cst_205 = arith.constant 1.000000e+00 : f32
    %cst_206 = arith.constant -1.000000e+00 : f32
    %312 = vector.broadcast %cst_205 : f32 to vector<16x64xf32>
    %313 = vector.broadcast %cst_206 : f32 to vector<16x64xf32>
    %314 = arith.select %311, %312, %313 : vector<16x64xi1>, vector<16x64xf32>
    %315 = math.absf %309 : vector<16x64xf32>
    %cst_207 = arith.constant 0.327591091 : f32
    %316 = vector.broadcast %cst_207 : f32 to vector<16x64xf32>
    %317 = arith.mulf %316, %315 : vector<16x64xf32>
    %cst_208 = arith.constant 1.000000e+00 : f32
    %318 = vector.broadcast %cst_208 : f32 to vector<16x64xf32>
    %319 = arith.addf %318, %317 : vector<16x64xf32>
    %cst_209 = arith.constant 1.000000e+00 : f32
    %320 = vector.broadcast %cst_209 : f32 to vector<16x64xf32>
    %321 = arith.divf %320, %319 : vector<16x64xf32>
    %cst_210 = arith.constant 1.06140542 : f32
    %322 = vector.broadcast %cst_210 : f32 to vector<16x64xf32>
    %323 = arith.mulf %322, %321 : vector<16x64xf32>
    %cst_211 = arith.constant -1.45315206 : f32
    %324 = vector.broadcast %cst_211 : f32 to vector<16x64xf32>
    %325 = arith.addf %323, %324 : vector<16x64xf32>
    %326 = arith.mulf %325, %321 : vector<16x64xf32>
    %cst_212 = arith.constant 1.42141378 : f32
    %327 = vector.broadcast %cst_212 : f32 to vector<16x64xf32>
    %328 = arith.addf %326, %327 : vector<16x64xf32>
    %329 = arith.mulf %328, %321 : vector<16x64xf32>
    %cst_213 = arith.constant -0.284496725 : f32
    %330 = vector.broadcast %cst_213 : f32 to vector<16x64xf32>
    %331 = arith.addf %329, %330 : vector<16x64xf32>
    %332 = arith.mulf %331, %321 : vector<16x64xf32>
    %cst_214 = arith.constant 0.254829586 : f32
    %333 = vector.broadcast %cst_214 : f32 to vector<16x64xf32>
    %334 = arith.addf %332, %333 : vector<16x64xf32>
    %335 = arith.mulf %334, %321 : vector<16x64xf32>
    %cst_215 = arith.constant 0.000000e+00 : f32
    %336 = vector.broadcast %cst_215 : f32 to vector<16x64xf32>
    %337 = arith.subf %336, %315 : vector<16x64xf32>
    %338 = arith.mulf %337, %315 : vector<16x64xf32>
    %339 = math.exp %338 : vector<16x64xf32>
    %340 = arith.mulf %335, %339 : vector<16x64xf32>
    %cst_216 = arith.constant 1.000000e+00 : f32
    %341 = vector.broadcast %cst_216 : f32 to vector<16x64xf32>
    %342 = arith.subf %341, %340 : vector<16x64xf32>
    %343 = arith.mulf %314, %342 : vector<16x64xf32>
    %cst_217 = arith.constant 1.000000e+00 : f32
    %344 = vector.broadcast %cst_217 : f32 to vector<16x64xf32>
    %345 = arith.addf %344, %343 : vector<16x64xf32>
    %346 = arith.mulf %307, %345 : vector<16x64xf32>
    %c1_218 = arith.constant 1 : index
    %c0_219 = arith.constant 0 : index
    %c0_220 = arith.constant 0 : index
    %347 = vector.load %arg15[%c1_218, %c0_219, %c0_220] : memref<2x64x32xf32, #tpu.memory_space<vmem>>, vector<1x64x32xf32>
    %348 = vector.shape_cast %347 : vector<1x64x32xf32> to vector<64x32xf32>
    %cst_221 = arith.constant dense<0.000000e+00> : vector<16x32xf32>
    %349 = tpu.matmul %346, %348, %cst_221 {dimension_numbers = #tpu.dot_dimension_numbers<[1], [0], [0], [1], [0, 0, 1, 1], [], []>} : vector<16x64xf32>, vector<64x32xf32>, vector<16x32xf32> -> vector<16x32xf32>
    %c1_222 = arith.constant 1 : index
    %c0_223 = arith.constant 0 : index
    %c0_224 = arith.constant 0 : index
    %350 = vector.load %arg16[%c1_222, %c0_223, %c0_224] : memref<2x1x32xf32, #tpu.memory_space<vmem>>, vector<1x1x32xf32>
    %351 = vector.shape_cast %350 : vector<1x1x32xf32> to vector<1x32xf32>
    %352 = vector.broadcast %351 : vector<1x32xf32> to vector<16x32xf32>
    %353 = arith.addf %349, %352 : vector<16x32xf32>
    %354 = arith.addf %274, %353 : vector<16x32xf32>
    %c0_225 = arith.constant 0 : index
    %c0_226 = arith.constant 0 : index
    %355 = vector.load %arg23[%c0_225, %c0_226] : memref<16x32xf32, #tpu.memory_space<vmem>>, vector<16x32xf32>
    tpu.vector_store %arg23[%c0_225, %c0_226], %354 {strides = array<i32>} : memref<16x32xf32, #tpu.memory_space<vmem>>, vector<16x32xf32>,
    %c0_227 = arith.constant 0 : index
    %c0_228 = arith.constant 0 : index
    %356 = vector.load %arg23[%c0_227, %c0_228] : memref<16x32xf32, #tpu.memory_space<vmem>>, vector<1x32xf32>
    %c0_229 = arith.constant 0 : index
    %c0_230 = arith.constant 0 : index
    %357 = vector.load %arg17[%c0_229, %c0_230] : memref<1x32xf32, #tpu.memory_space<vmem>>, vector<1x32xf32>
    %c0_231 = arith.constant 0 : index
    %c0_232 = arith.constant 0 : index
    %358 = vector.load %arg18[%c0_231, %c0_232] : memref<1x32xf32, #tpu.memory_space<vmem>>, vector<1x32xf32>
    %cst_233 = arith.constant dense<0.000000e+00> : vector<1xf32>
    %359 = vector.multi_reduction <add>, %356, %cst_233 [1] : vector<1x32xf32> to vector<1xf32>
    %360 = vector.shape_cast %359 : vector<1xf32> to vector<1x1xf32>
    %cst_234 = arith.constant 3.200000e+01 : f32
    %361 = vector.broadcast %cst_234 : f32 to vector<1x1xf32>
    %362 = arith.divf %360, %361 : vector<1x1xf32>
    %363 = vector.broadcast %362 : vector<1x1xf32> to vector<1x32xf32>
    %364 = arith.subf %356, %363 : vector<1x32xf32>
    %365 = arith.mulf %364, %364 : vector<1x32xf32>
    %cst_235 = arith.constant dense<0.000000e+00> : vector<1xf32>
    %366 = vector.multi_reduction <add>, %365, %cst_235 [1] : vector<1x32xf32> to vector<1xf32>
    %367 = vector.shape_cast %366 : vector<1xf32> to vector<1x1xf32>
    %cst_236 = arith.constant 3.200000e+01 : f32
    %368 = vector.broadcast %cst_236 : f32 to vector<1x1xf32>
    %369 = arith.divf %367, %368 : vector<1x1xf32>
    %cst_237 = arith.constant 9.99999974E-6 : f32
    %370 = vector.broadcast %cst_237 : f32 to vector<1x1xf32>
    %371 = arith.addf %369, %370 : vector<1x1xf32>
    %372 = math.rsqrt %371 : vector<1x1xf32>
    %373 = vector.broadcast %372 : vector<1x1xf32> to vector<1x32xf32>
    %374 = arith.mulf %364, %373 : vector<1x32xf32>
    %375 = arith.mulf %374, %357 : vector<1x32xf32>
    %376 = arith.addf %375, %358 : vector<1x32xf32>
    %c0_238 = arith.constant 0 : index
    %c0_239 = arith.constant 0 : index
    %377 = vector.load %arg19[%c0_238, %c0_239] : memref<32x4xf32, #tpu.memory_space<vmem>>, vector<32x4xf32>
    %cst_240 = arith.constant dense<0.000000e+00> : vector<1x4xf32>
    %378 = tpu.matmul %376, %377, %cst_240 {dimension_numbers = #tpu.dot_dimension_numbers<[1], [0], [0], [1], [0, 0, 1, 1], [], []>} : vector<1x32xf32>, vector<32x4xf32>, vector<1x4xf32> -> vector<1x4xf32>
    %c0_241 = arith.constant 0 : index
    %c0_242 = arith.constant 0 : index
    %379 = vector.load %arg20[%c0_241, %c0_242] : memref<1x4xf32, #tpu.memory_space<vmem>>, vector<1x4xf32>
    %380 = arith.addf %378, %379 : vector<1x4xf32>
    %c0_243 = arith.constant 0 : index
    %c0_244 = arith.constant 0 : index
    %381 = vector.load %arg21[%c0_243, %c0_244] : memref<1x4xf32, #tpu.memory_space<vmem>>, vector<1x4xf32>
    tpu.vector_store %arg21[%c0_243, %c0_244], %380 {strides = array<i32>} : memref<1x4xf32, #tpu.memory_space<vmem>>, vector<1x4xf32>,
    %cst_245 = arith.constant dense<0xFF800000> : vector<1xf32>
    %382 = vector.multi_reduction <maximumf>, %380, %cst_245 [1] : vector<1x4xf32> to vector<1xf32>
    %383 = vector.shape_cast %382 : vector<1xf32> to vector<1x1xf32>
    %384 = vector.broadcast %383 : vector<1x1xf32> to vector<1x4xf32>
    %385 = arith.subf %380, %384 : vector<1x4xf32>
    %386 = math.exp %385 : vector<1x4xf32>
    %cst_246 = arith.constant dense<0.000000e+00> : vector<1xf32>
    %387 = vector.multi_reduction <add>, %386, %cst_246 [1] : vector<1x4xf32> to vector<1xf32>
    %388 = vector.shape_cast %387 : vector<1xf32> to vector<1x1xf32>
    %389 = vector.broadcast %388 : vector<1x1xf32> to vector<1x4xf32>
    %390 = arith.divf %386, %389 : vector<1x4xf32>
    %c0_247 = arith.constant 0 : index
    %c0_248 = arith.constant 0 : index
    %391 = vector.load %arg22[%c0_247, %c0_248] : memref<1x4xf32, #tpu.memory_space<vmem>>, vector<1x4xf32>
    tpu.vector_store %arg22[%c0_247, %c0_248], %390 {strides = array<i32>} : memref<1x4xf32, #tpu.memory_space<vmem>>, vector<1x4xf32>,
    return
  }
}

</mosaic_0001>

<llo_original>
// kernel: tpu_custom_call.1
$region0: #{tpu_custom_call.1}
  #allocation0 [shape = 'u32[]', space=smem, size = 0x4, offset = 0x4, fixed_abs, tag = 'smem constant byte address 0x4 - core index']
  #allocation1 [shape = 'u32[144,128]{1,0:T(1,128)}', space=vmem, size = 0x12000, scoped, tag = 'internal scratch']
  #allocation2 [shape = 'f32[16,32]{1,0:T(8,128)}', space=vmem, size = 0x2000, scoped, tag = 'scratch operand']
  %s0 = inlined_call_operand.vmem [shape: f32[16,32], index: 0, kind: input, shape index: {}]
  %s1 = inlined_call_operand.vmem [shape: f32[32,32], index: 1, kind: input, shape index: {}]
  %s2 = inlined_call_operand.vmem [shape: f32[1,32], index: 2, kind: input, shape index: {}]
  %s3 = inlined_call_operand.vmem [shape: f32[1,32], index: 3, kind: input, shape index: {}]
  %s4 = inlined_call_operand.vmem [shape: f32[2,1,32], index: 4, kind: input, shape index: {}]
  %s5 = inlined_call_operand.vmem [shape: f32[2,1,32], index: 5, kind: input, shape index: {}]
  %s6 = inlined_call_operand.vmem [shape: f32[2,2,32,16], index: 6, kind: input, shape index: {}]
  %s7 = inlined_call_operand.vmem [shape: f32[2,2,32,16], index: 7, kind: input, shape index: {}]
  %s8 = inlined_call_operand.vmem [shape: f32[2,2,32,16], index: 8, kind: input, shape index: {}]
  %s9 = inlined_call_operand.vmem [shape: f32[2,2,16,32], index: 9, kind: input, shape index: {}]
  %s10 = inlined_call_operand.vmem [shape: f32[2,1,32], index: 10, kind: input, shape index: {}]
  %s11 = inlined_call_operand.vmem [shape: f32[2,1,32], index: 11, kind: input, shape index: {}]
  %s12 = inlined_call_operand.vmem [shape: f32[2,1,32], index: 12, kind: input, shape index: {}]
  %s13 = inlined_call_operand.vmem [shape: f32[2,32,64], index: 13, kind: input, shape index: {}]
  %s14 = inlined_call_operand.vmem [shape: f32[2,1,64], index: 14, kind: input, shape index: {}]
  %s15 = inlined_call_operand.vmem [shape: f32[2,64,32], index: 15, kind: input, shape index: {}]
  %s16 = inlined_call_operand.vmem [shape: f32[2,1,32], index: 16, kind: input, shape index: {}]
  %s17 = inlined_call_operand.vmem [shape: f32[1,32], index: 17, kind: input, shape index: {}]
  %s18 = inlined_call_operand.vmem [shape: f32[1,32], index: 18, kind: input, shape index: {}]
  %s19 = inlined_call_operand.vmem [shape: f32[32,4], index: 19, kind: input, shape index: {}]
  %s20 = inlined_call_operand.vmem [shape: f32[1,4], index: 20, kind: input, shape index: {}]
  %s21 = inlined_call_operand.hbm [shape: f32[1,4], index: 21, kind: output, shape index: {0}]
  %s22 = inlined_call_operand.hbm [shape: f32[1,4], index: 22, kind: output, shape index: {1}]
  %23 = xla_tuple %s21, %s22
  %s24 = sld [smem:[#allocation0]]
  $region102: #{tpu_custom_call.1} parent=0
    _
  %s26 = ssub.s32 1, %s24
  %s27 = scalar_select 0, %s26, %s24
  $region1: #{tpu_custom_call.1} parent=0
    #allocation3 [shape = 'u8[512]{0}', space=vmem, size = 0x400, scoped, tag = 'output window, operand 0, single buffered']
    #allocation4 [shape = 's32[1]{0}', space=sflag, size = 0x4, scoped, tag = 'scoped memory for tpu_custom_call.1']
    #allocation5 [shape = 'u8[512]{0}', space=vmem, size = 0x400, scoped, tag = 'output window, operand 1, single buffered']
    #allocation6 [shape = 's32[1]{0}', space=sflag, size = 0x4, scoped, tag = 'scoped memory for tpu_custom_call.1']
    %28 = vsyncpa [#allocation4], 0
    %29 = vsyncpa [#allocation6], 0
    // Predicated region
    $region2: #{tpu_custom_call.1} parent=1 // pred_check
      _
    $region3: #{tpu_custom_call.1} parent=1 // pred_check_branch
      %31 = sbr.rel (0) target = $region5
    $region4: #{tpu_custom_call.1} parent=1 // pred_region
      _
    $region5: #{tpu_custom_call.1} parent=1 // pred_fallthru
      _
    // Predicated region
    $region6: #{tpu_custom_call.1} parent=1 // pred_check
      _
    $region7: #{tpu_custom_call.1} parent=1 // pred_check_branch
      %33 = sbr.rel (0) target = $region9
    $region8: #{tpu_custom_call.1} parent=1 // pred_region
      _
    $region9: #{tpu_custom_call.1} parent=1 // pred_fallthru
      _
    // Predicated region
    $region10: #{tpu_custom_call.1} parent=1 // pred_check
      _
    $region11: #{tpu_custom_call.1} parent=1 // pred_check_branch
      %35 = sbr.rel (0) target = $region13
    $region12: #{tpu_custom_call.1} parent=1 // pred_region
      _
    $region13: #{tpu_custom_call.1} parent=1 // pred_fallthru
      _
    // Predicated region
    $region14: #{tpu_custom_call.1} parent=1 // pred_check
      _
    $region15: #{tpu_custom_call.1} parent=1 // pred_check_branch
      %37 = sbr.rel (0) target = $region17
    $region16: #{tpu_custom_call.1} parent=1 // pred_region
      _
    $region17: #{tpu_custom_call.1} parent=1 // pred_fallthru
      _
    // Predicated region
    $region18: #{tpu_custom_call.1} parent=1 // pred_check
      _
    $region19: #{tpu_custom_call.1} parent=1 // pred_check_branch
      %39 = sbr.rel (0) target = $region21
    $region20: #{tpu_custom_call.1} parent=1 // pred_region
      _
    $region21: #{tpu_custom_call.1} parent=1 // pred_fallthru
      _
    // Predicated region
    $region22: #{tpu_custom_call.1} parent=1 // pred_check
      _
    $region23: #{tpu_custom_call.1} parent=1 // pred_check_branch
      %41 = sbr.rel (0) target = $region25
    $region24: #{tpu_custom_call.1} parent=1 // pred_region
      _
    $region25: #{tpu_custom_call.1} parent=1 // pred_fallthru
      _
    // Predicated region
    $region26: #{tpu_custom_call.1} parent=1 // pred_check
      _
    $region27: #{tpu_custom_call.1} parent=1 // pred_check_branch
      %43 = sbr.rel (0) target = $region29
    $region28: #{tpu_custom_call.1} parent=1 // pred_region
      _
    $region29: #{tpu_custom_call.1} parent=1 // pred_fallthru
      _
    // Predicated region
    $region30: #{tpu_custom_call.1} parent=1 // pred_check
      _
    $region31: #{tpu_custom_call.1} parent=1 // pred_check_branch
      %45 = sbr.rel (0) target = $region33
    $region32: #{tpu_custom_call.1} parent=1 // pred_region
      _
    $region33: #{tpu_custom_call.1} parent=1 // pred_fallthru
      _
    // Predicated region
    $region34: #{tpu_custom_call.1} parent=1 // pred_check
      _
    $region35: #{tpu_custom_call.1} parent=1 // pred_check_branch
      %47 = sbr.rel (0) target = $region37
    $region36: #{tpu_custom_call.1} parent=1 // pred_region
      _
    $region37: #{tpu_custom_call.1} parent=1 // pred_fallthru
      _
    // Predicated region
    $region38: #{tpu_custom_call.1} parent=1 // pred_check
      _
    $region39: #{tpu_custom_call.1} parent=1 // pred_check_branch
      %49 = sbr.rel (0) target = $region41
    $region40: #{tpu_custom_call.1} parent=1 // pred_region
      _
    $region41: #{tpu_custom_call.1} parent=1 // pred_fallthru
      _
    // Predicated region
    $region42: #{tpu_custom_call.1} parent=1 // pred_check
      _
    $region43: #{tpu_custom_call.1} parent=1 // pred_check_branch
      %51 = sbr.rel (0) target = $region45
    $region44: #{tpu_custom_call.1} parent=1 // pred_region
      _
    $region45: #{tpu_custom_call.1} parent=1 // pred_fallthru
      _
    // Predicated region
    $region46: #{tpu_custom_call.1} parent=1 // pred_check
      _
    $region47: #{tpu_custom_call.1} parent=1 // pred_check_branch
      %53 = sbr.rel (0) target = $region49
    $region48: #{tpu_custom_call.1} parent=1 // pred_region
      _
    $region49: #{tpu_custom_call.1} parent=1 // pred_fallthru
      _
    // Predicated region
    $region50: #{tpu_custom_call.1} parent=1 // pred_check
      _
    $region51: #{tpu_custom_call.1} parent=1 // pred_check_branch
      %55 = sbr.rel (0) target = $region53
    $region52: #{tpu_custom_call.1} parent=1 // pred_region
      _
    $region53: #{tpu_custom_call.1} parent=1 // pred_fallthru
      _
    // Predicated region
    $region54: #{tpu_custom_call.1} parent=1 // pred_check
      _
    $region55: #{tpu_custom_call.1} parent=1 // pred_check_branch
      %57 = sbr.rel (0) target = $region57
    $region56: #{tpu_custom_call.1} parent=1 // pred_region
      _
    $region57: #{tpu_custom_call.1} parent=1 // pred_fallthru
      _
    // Predicated region
    $region58: #{tpu_custom_call.1} parent=1 // pred_check
      _
    $region59: #{tpu_custom_call.1} parent=1 // pred_check_branch
      %59 = sbr.rel (0) target = $region61
    $region60: #{tpu_custom_call.1} parent=1 // pred_region
      _
    $region61: #{tpu_custom_call.1} parent=1 // pred_fallthru
      _
    // Predicated region
    $region62: #{tpu_custom_call.1} parent=1 // pred_check
      _
    $region63: #{tpu_custom_call.1} parent=1 // pred_check_branch
      %61 = sbr.rel (0) target = $region65
    $region64: #{tpu_custom_call.1} parent=1 // pred_region
      _
    $region65: #{tpu_custom_call.1} parent=1 // pred_fallthru
      _
    // Predicated region
    $region66: #{tpu_custom_call.1} parent=1 // pred_check
      _
    $region67: #{tpu_custom_call.1} parent=1 // pred_check_branch
      %63 = sbr.rel (0) target = $region69
    $region68: #{tpu_custom_call.1} parent=1 // pred_region
      _
    $region69: #{tpu_custom_call.1} parent=1 // pred_fallthru
      _
    // Predicated region
    $region70: #{tpu_custom_call.1} parent=1 // pred_check
      _
    $region71: #{tpu_custom_call.1} parent=1 // pred_check_branch
      %65 = sbr.rel (0) target = $region73
    $region72: #{tpu_custom_call.1} parent=1 // pred_region
      _
    $region73: #{tpu_custom_call.1} parent=1 // pred_fallthru
      _
    // Predicated region
    $region74: #{tpu_custom_call.1} parent=1 // pred_check
      _
    $region75: #{tpu_custom_call.1} parent=1 // pred_check_branch
      %67 = sbr.rel (0) target = $region77
    $region76: #{tpu_custom_call.1} parent=1 // pred_region
      _
    $region77: #{tpu_custom_call.1} parent=1 // pred_fallthru
      _
    // Predicated region
    $region78: #{tpu_custom_call.1} parent=1 // pred_check
      _
    $region79: #{tpu_custom_call.1} parent=1 // pred_check_branch
      %69 = sbr.rel (0) target = $region81
    $region80: #{tpu_custom_call.1} parent=1 // pred_region
      _
    $region81: #{tpu_custom_call.1} parent=1 // pred_fallthru
      _
    // Predicated region
    $region82: #{tpu_custom_call.1} parent=1 // pred_check
      _
    $region83: #{tpu_custom_call.1} parent=1 // pred_check_branch
      %71 = sbr.rel (0) target = $region85
    $region84: #{tpu_custom_call.1} parent=1 // pred_region
      _
    $region85: #{tpu_custom_call.1} parent=1 // pred_fallthru
      _
    %v72 = vld [vmem:[%s0] sm:$0xff]
    %v73 = vld [vmem:[%s0 + $0x8] sm:$0xff]
    %v74 = vld [vmem:[%s1] sm:$0xff]
    %v75 = vld [vmem:[%s1 + $0x8] sm:$0xff]
    %v76 = vld [vmem:[%s1 + $0x10] sm:$0xff]
    %v77 = vld [vmem:[%s1 + $0x18] sm:$0xff]
    %v78 = vld [vmem:[%s2] sm:$0x1]
    %v80 = vlaneseq
    %v81 = vshrl.u32 %v80, 7
    %v82 = vsub.s32 0, %v81
    %v83 = vrot.slane %v78, %v82
    %vm85 = vcmask 261120
    %v87 = vsel %vm85, %v72, 0
    %v90 = vsel %vm85, %v73, 0
    %92 = vmatprep.subr.mxu0 0.0
    %93 = vmatpush1.msra.mxu0 %v74
    %94 = vmatprep.subr.mxu0 0.0
    %95 = vmatpush1.msra.mxu0 %v75
    %96 = vmatprep.subr.mxu0 0.0
    %97 = vmatpush1.msra.mxu0 %v76
    %98 = vmatprep.subr.mxu0 0.0
    %99 = vmatpush1.msra.mxu0 %v77
    %100 = vmatprep.subr.mxu0 0.0
    %101 = vmatpush1.msra.mxu0 0.0
    %102 = vmatprep.subr.mxu0 0.0
    %103 = vmatpush1.msra.mxu0 0.0
    %104 = vmatprep.subr.mxu0 0.0
    %105 = vmatpush1.msra.mxu0 0.0
    %106 = vmatprep.subr.mxu0 0.0
    %107 = vmatpush1.msra.mxu0 0.0
    %108 = vmatprep.subr.mxu0 0.0
    %109 = vmatpush1.msra.mxu0 0.0
    %110 = vmatprep.subr.mxu0 0.0
    %111 = vmatpush1.msra.mxu0 0.0
    %112 = vmatprep.subr.mxu0 0.0
    %113 = vmatpush1.msra.mxu0 0.0
    %114 = vmatprep.subr.mxu0 0.0
    %115 = vmatpush1.msra.mxu0 0.0
    %116 = vmatprep.subr.mxu0 0.0
    %117 = vmatpush1.msra.mxu0 0.0
    %118 = vmatprep.subr.mxu0 0.0
    %119 = vmatpush1.msra.mxu0 0.0
    %120 = vmatprep.subr.mxu0 0.0
    %121 = vmatpush1.msra.mxu0 0.0
    %122 = vmatprep.subr.mxu0 0.0
    %123 = vmatpush1.msra.mxu0 0.0
    %124 = vmatprep.subr.mxu0 0.0
    %125 = vmatpush1.msra.mxu0 0.0
    %126 = vmatprep.subr.mxu0 0.0
    %127 = vmatpush1.msra.mxu0 0.0
    %128 = vmatprep.subr.mxu0 0.0
    %129 = vmatpush1.msra.mxu0 0.0
    %130 = vmatprep.subr.mxu0 0.0
    %131 = vmatpush1.msra.mxu0 0.0
    %132 = vmatprep.subr.mxu0 0.0
    %133 = vmatpush1.msra.mxu0 0.0
    %134 = vmatprep.subr.mxu0 0.0
    %135 = vmatpush1.msra.mxu0 0.0
    %136 = vmatprep.subr.mxu0 0.0
    %137 = vmatpush1.msra.mxu0 0.0
    %138 = vmatprep.subr.mxu0 0.0
    %139 = vmatpush1.msra.mxu0 0.0
    %140 = vmatprep.subr.mxu0 0.0
    %141 = vmatpush1.msra.mxu0 0.0
    %142 = vmatprep.subr.mxu0 0.0
    %143 = vmatpush1.msra.mxu0 0.0
    %144 = vmatprep.subr.mxu0 0.0
    %145 = vmatpush1.msra.mxu0 0.0
    %146 = vmatprep.subr.mxu0 0.0
    %147 = vmatpush1.msra.mxu0 0.0
    %148 = vmatprep.subr.mxu0 0.0
    %149 = vmatpush1.msra.mxu0 0.0
    %150 = vmatprep.subr.mxu0 0.0
    %151 = vmatpush1.msra.mxu0 0.0
    %152 = vmatprep.subr.mxu0 0.0
    %153 = vmatpush1.msra.mxu0 0.0
    %154 = vmatprep.subr.mxu0 0.0
    %155 = vmatpush1.msra.mxu0 0.0
    %156 = vmatprep.mubr.f32.mxu0 0.0
    %157 = vmatmul.mubr.f32.gmra.mrb[0].mxu0 %v87
    %v158 = vpop.f32.mrb[0].mxu0
    %v159 = vadd.f32 %v83, %v158
    %v160 = vpop.f32.mrb[0].mxu0
    %161 = vmatprep.mubr.f32.mxu0 0.0
    %162 = vmatmul.mubr.f32.gmra.mrb[0].mxu0 %v90
    %v163 = vpop.f32.mrb[0].mxu0
    %v164 = vadd.f32 %v83, %v163
    %v165 = vpop.f32.mrb[0].mxu0
    %166 = vdwg.mxu0
    %v167 = vmax.f32 %v159, 0.0
    %v168 = vmax.f32 %v164, 0.0
    %v169 = vlaneseq
    %v170 = vshrl.u32 %v169, 7
    %v171 = vadd.s32 %v170, 8
    %vm172 = vcmp.eq.s32.totalorder %v170, 0
    %vm173 = vcmp.eq.s32.totalorder %v171, 0
    %v174 = vld [vmem:[%s3] sm:$0x1]
    %v175 = vsel %vm172, 1, 0
    %v176 = vsel %vm173, 1, 0
    %vm177 = vcmp.eq.s32.totalorder %v175, 1
    %vm178 = vcmp.eq.s32.totalorder %v176, 1
    %v180 = vlaneseq
    %v181 = vshrl.u32 %v180, 7
    %v182 = vsub.s32 0, %v181
    %v183 = vrot.slane %v174, %v182
    %v185 = vsel %vm177, %v183, %v167
    %v186 = vsel %vm178, %v183, %v168
    %187 = vst.msk [vmem:[#allocation2] sm:$0xff] %vm85, %v185
    %188 = vst.msk [vmem:[#allocation2 + $0x8] sm:$0xff] %vm85, %v186
    %v189 = vlaneseq
    %v190 = vand.u32 %v189, 127
    %vm191 = vcmp.lt.s32.totalorder %v190, 9
    %v192 = vsel %vm191, 0.0, -1e+30
    %v193 = vld [vmem:[#allocation2] sm:$0xff]
    %v194 = vld [vmem:[#allocation2 + $0x8] sm:$0xff]
    %v195 = vld [vmem:[%s4] sm:$0x1]
    %v196 = vld [vmem:[%s5] sm:$0x1]
    %v197 = vsel %vm85, %v193, 0.0
    %198 = vadd.xlane.f32.xlu0 %v197
    %v199 = vpop.xlane.xlu0 %198
    %v200 = vsel %vm85, %v194, 0.0
    %201 = vadd.xlane.f32.xlu0 %v200
    %v202 = vpop.xlane.xlu0 %201
    %v203 = vrcp.pop 32.0
    %v204 = vmul.f32 %v199, %v203
    %v205 = vmul.f32 %v202, %v203
    %v206 = vsub.f32 %v193, %v204
    %v207 = vsub.f32 %v194, %v205
    %v208 = vmul.f32 %v206, %v206
    %v209 = vmul.f32 %v207, %v207
    %v210 = vsel %vm85, %v208, 0.0
    %211 = vadd.xlane.f32.xlu0 %v210
    %v212 = vpop.xlane.xlu0 %211
    %v213 = vsel %vm85, %v209, 0.0
    %214 = vadd.xlane.f32.xlu0 %v213
    %v215 = vpop.xlane.xlu0 %214
    %v216 = vmul.f32 %v212, %v203
    %v217 = vmul.f32 %v215, %v203
    %v218 = vadd.f32 %v216, 1e-05
    %v219 = vadd.f32 %v217, 1e-05
    %v220 = vrsqrt.pop %v218
    %v221 = vrsqrt.pop %v219
    %v222 = vmul.f32 %v206, %v220
    %v223 = vmul.f32 %v207, %v221
    %v225 = vlaneseq
    %v226 = vshrl.u32 %v225, 7
    %v227 = vsub.s32 0, %v226
    %v228 = vrot.slane %v195, %v227
    %v230 = vmul.f32 %v222, %v228
    %v231 = vmul.f32 %v223, %v228
    %v233 = vlaneseq
    %v234 = vshrl.u32 %v233, 7
    %v235 = vsub.s32 0, %v234
    %v236 = vrot.slane %v196, %v235
    %v238 = vadd.f32 %v230, %v236
    %v239 = vadd.f32 %v231, %v236
    %v240 = vld [vmem:[%s6] sm:$0xff]
    %v241 = vld [vmem:[%s6 + $0x8] sm:$0xff]
    %v242 = vld [vmem:[%s6 + $0x10] sm:$0xff]
    %v243 = vld [vmem:[%s6 + $0x18] sm:$0xff]
    %v245 = vsel %vm85, %v238, 0
    %v248 = vsel %vm85, %v239, 0
    %250 = vmatprep.subr.mxu0 0.0
    %251 = vmatpush1.msra.mxu0 %v240
    %252 = vmatprep.subr.mxu0 0.0
    %253 = vmatpush1.msra.mxu0 %v241
    %254 = vmatprep.subr.mxu0 0.0
    %255 = vmatpush1.msra.mxu0 %v242
    %256 = vmatprep.subr.mxu0 0.0
    %257 = vmatpush1.msra.mxu0 %v243
    %258 = vmatprep.subr.mxu0 0.0
    %259 = vmatpush1.msra.mxu0 0.0
    %260 = vmatprep.subr.mxu0 0.0
    %261 = vmatpush1.msra.mxu0 0.0
    %262 = vmatprep.subr.mxu0 0.0
    %263 = vmatpush1.msra.mxu0 0.0
    %264 = vmatprep.subr.mxu0 0.0
    %265 = vmatpush1.msra.mxu0 0.0
    %266 = vmatprep.subr.mxu0 0.0
    %267 = vmatpush1.msra.mxu0 0.0
    %268 = vmatprep.subr.mxu0 0.0
    %269 = vmatpush1.msra.mxu0 0.0
    %270 = vmatprep.subr.mxu0 0.0
    %271 = vmatpush1.msra.mxu0 0.0
    %272 = vmatprep.subr.mxu0 0.0
    %273 = vmatpush1.msra.mxu0 0.0
    %274 = vmatprep.subr.mxu0 0.0
    %275 = vmatpush1.msra.mxu0 0.0
    %276 = vmatprep.subr.mxu0 0.0
    %277 = vmatpush1.msra.mxu0 0.0
    %278 = vmatprep.subr.mxu0 0.0
    %279 = vmatpush1.msra.mxu0 0.0
    %280 = vmatprep.subr.mxu0 0.0
    %281 = vmatpush1.msra.mxu0 0.0
    %282 = vmatprep.subr.mxu0 0.0
    %283 = vmatpush1.msra.mxu0 0.0
    %284 = vmatprep.subr.mxu0 0.0
    %285 = vmatpush1.msra.mxu0 0.0
    %286 = vmatprep.subr.mxu0 0.0
    %287 = vmatpush1.msra.mxu0 0.0
    %288 = vmatprep.subr.mxu0 0.0
    %289 = vmatpush1.msra.mxu0 0.0
    %290 = vmatprep.subr.mxu0 0.0
    %291 = vmatpush1.msra.mxu0 0.0
    %292 = vmatprep.subr.mxu0 0.0
    %293 = vmatpush1.msra.mxu0 0.0
    %294 = vmatprep.subr.mxu0 0.0
    %295 = vmatpush1.msra.mxu0 0.0
    %296 = vmatprep.subr.mxu0 0.0
    %297 = vmatpush1.msra.mxu0 0.0
    %298 = vmatprep.subr.mxu0 0.0
    %299 = vmatpush1.msra.mxu0 0.0
    %300 = vmatprep.subr.mxu0 0.0
    %301 = vmatpush1.msra.mxu0 0.0
    %302 = vmatprep.subr.mxu0 0.0
    %303 = vmatpush1.msra.mxu0 0.0
    %304 = vmatprep.subr.mxu0 0.0
    %305 = vmatpush1.msra.mxu0 0.0
    %306 = vmatprep.subr.mxu0 0.0
    %307 = vmatpush1.msra.mxu0 0.0
    %308 = vmatprep.subr.mxu0 0.0
    %309 = vmatpush1.msra.mxu0 0.0
    %310 = vmatprep.subr.mxu0 0.0
    %311 = vmatpush1.msra.mxu0 0.0
    %312 = vmatprep.subr.mxu0 0.0
    %313 = vmatpush1.msra.mxu0 0.0
    %314 = vmatprep.mubr.f32.mxu0 0.0
    %315 = vmatmul.mubr.f32.gmra.mrb[0].mxu0 %v245
    %v316 = vpop.f32.mrb[0].mxu0
    %v317 = vadd.f32 0.0, %v316
    %v318 = vpop.f32.mrb[0].mxu0
    %319 = vmatprep.mubr.f32.mxu0 0.0
    %320 = vmatmul.mubr.f32.gmra.mrb[0].mxu0 %v248
    %v321 = vpop.f32.mrb[0].mxu0
    %v322 = vadd.f32 0.0, %v321
    %v323 = vpop.f32.mrb[0].mxu0
    %324 = vdwg.mxu0
    %v325 = vld [vmem:[%s7] sm:$0xff]
    %v326 = vld [vmem:[%s7 + $0x8] sm:$0xff]
    %v327 = vld [vmem:[%s7 + $0x10] sm:$0xff]
    %v328 = vld [vmem:[%s7 + $0x18] sm:$0xff]
    %329 = vmatprep.subr.mxu0 0.0
    %330 = vmatpush1.msra.mxu0 %v325
    %331 = vmatprep.subr.mxu0 0.0
    %332 = vmatpush1.msra.mxu0 %v326
    %333 = vmatprep.subr.mxu0 0.0
    %334 = vmatpush1.msra.mxu0 %v327
    %335 = vmatprep.subr.mxu0 0.0
    %336 = vmatpush1.msra.mxu0 %v328
    %337 = vmatprep.subr.mxu0 0.0
    %338 = vmatpush1.msra.mxu0 0.0
    %339 = vmatprep.subr.mxu0 0.0
    %340 = vmatpush1.msra.mxu0 0.0
    %341 = vmatprep.subr.mxu0 0.0
    %342 = vmatpush1.msra.mxu0 0.0
    %343 = vmatprep.subr.mxu0 0.0
    %344 = vmatpush1.msra.mxu0 0.0
    %345 = vmatprep.subr.mxu0 0.0
    %346 = vmatpush1.msra.mxu0 0.0
    %347 = vmatprep.subr.mxu0 0.0
    %348 = vmatpush1.msra.mxu0 0.0
    %349 = vmatprep.subr.mxu0 0.0
    %350 = vmatpush1.msra.mxu0 0.0
    %351 = vmatprep.subr.mxu0 0.0
    %352 = vmatpush1.msra.mxu0 0.0
    %353 = vmatprep.subr.mxu0 0.0
    %354 = vmatpush1.msra.mxu0 0.0
    %355 = vmatprep.subr.mxu0 0.0
    %356 = vmatpush1.msra.mxu0 0.0
    %357 = vmatprep.subr.mxu0 0.0
    %358 = vmatpush1.msra.mxu0 0.0
    %359 = vmatprep.subr.mxu0 0.0
    %360 = vmatpush1.msra.mxu0 0.0
    %361 = vmatprep.subr.mxu0 0.0
    %362 = vmatpush1.msra.mxu0 0.0
    %363 = vmatprep.subr.mxu0 0.0
    %364 = vmatpush1.msra.mxu0 0.0
    %365 = vmatprep.subr.mxu0 0.0
    %366 = vmatpush1.msra.mxu0 0.0
    %367 = vmatprep.subr.mxu0 0.0
    %368 = vmatpush1.msra.mxu0 0.0
    %369 = vmatprep.subr.mxu0 0.0
    %370 = vmatpush1.msra.mxu0 0.0
    %371 = vmatprep.subr.mxu0 0.0
    %372 = vmatpush1.msra.mxu0 0.0
    %373 = vmatprep.subr.mxu0 0.0
    %374 = vmatpush1.msra.mxu0 0.0
    %375 = vmatprep.subr.mxu0 0.0
    %376 = vmatpush1.msra.mxu0 0.0
    %377 = vmatprep.subr.mxu0 0.0
    %378 = vmatpush1.msra.mxu0 0.0
    %379 = vmatprep.subr.mxu0 0.0
    %380 = vmatpush1.msra.mxu0 0.0
    %381 = vmatprep.subr.mxu0 0.0
    %382 = vmatpush1.msra.mxu0 0.0
    %383 = vmatprep.subr.mxu0 0.0
    %384 = vmatpush1.msra.mxu0 0.0
    %385 = vmatprep.subr.mxu0 0.0
    %386 = vmatpush1.msra.mxu0 0.0
    %387 = vmatprep.subr.mxu0 0.0
    %388 = vmatpush1.msra.mxu0 0.0
    %389 = vmatprep.subr.mxu0 0.0
    %390 = vmatpush1.msra.mxu0 0.0
    %391 = vmatprep.subr.mxu0 0.0
    %392 = vmatpush1.msra.mxu0 0.0
    %393 = vmatprep.mubr.f32.mxu0 0.0
    %394 = vmatmul.mubr.f32.gmra.mrb[0].mxu0 %v245
    %v395 = vpop.f32.mrb[0].mxu0
    %v396 = vadd.f32 0.0, %v395
    %v397 = vpop.f32.mrb[0].mxu0
    %398 = vmatprep.mubr.f32.mxu0 0.0
    %399 = vmatmul.mubr.f32.gmra.mrb[0].mxu0 %v248
    %v400 = vpop.f32.mrb[0].mxu0
    %v401 = vadd.f32 0.0, %v400
    %v402 = vpop.f32.mrb[0].mxu0
    %403 = vdwg.mxu0
    %v404 = vld [vmem:[%s8] sm:$0xff]
    %v405 = vld [vmem:[%s8 + $0x8] sm:$0xff]
    %v406 = vld [vmem:[%s8 + $0x10] sm:$0xff]
    %v407 = vld [vmem:[%s8 + $0x18] sm:$0xff]
    %408 = vmatprep.subr.mxu0 0.0
    %409 = vmatpush1.msra.mxu0 %v404
    %410 = vmatprep.subr.mxu0 0.0
    %411 = vmatpush1.msra.mxu0 %v405
    %412 = vmatprep.subr.mxu0 0.0
    %413 = vmatpush1.msra.mxu0 %v406
    %414 = vmatprep.subr.mxu0 0.0
    %415 = vmatpush1.msra.mxu0 %v407
    %416 = vmatprep.subr.mxu0 0.0
    %417 = vmatpush1.msra.mxu0 0.0
    %418 = vmatprep.subr.mxu0 0.0
    %419 = vmatpush1.msra.mxu0 0.0
    %420 = vmatprep.subr.mxu0 0.0
    %421 = vmatpush1.msra.mxu0 0.0
    %422 = vmatprep.subr.mxu0 0.0
    %423 = vmatpush1.msra.mxu0 0.0
    %424 = vmatprep.subr.mxu0 0.0
    %425 = vmatpush1.msra.mxu0 0.0
    %426 = vmatprep.subr.mxu0 0.0
    %427 = vmatpush1.msra.mxu0 0.0
    %428 = vmatprep.subr.mxu0 0.0
    %429 = vmatpush1.msra.mxu0 0.0
    %430 = vmatprep.subr.mxu0 0.0
    %431 = vmatpush1.msra.mxu0 0.0
    %432 = vmatprep.subr.mxu0 0.0
    %433 = vmatpush1.msra.mxu0 0.0
    %434 = vmatprep.subr.mxu0 0.0
    %435 = vmatpush1.msra.mxu0 0.0
    %436 = vmatprep.subr.mxu0 0.0
    %437 = vmatpush1.msra.mxu0 0.0
    %438 = vmatprep.subr.mxu0 0.0
    %439 = vmatpush1.msra.mxu0 0.0
    %440 = vmatprep.subr.mxu0 0.0
    %441 = vmatpush1.msra.mxu0 0.0
    %442 = vmatprep.subr.mxu0 0.0
    %443 = vmatpush1.msra.mxu0 0.0
    %444 = vmatprep.subr.mxu0 0.0
    %445 = vmatpush1.msra.mxu0 0.0
    %446 = vmatprep.subr.mxu0 0.0
    %447 = vmatpush1.msra.mxu0 0.0
    %448 = vmatprep.subr.mxu0 0.0
    %449 = vmatpush1.msra.mxu0 0.0
    %450 = vmatprep.subr.mxu0 0.0
    %451 = vmatpush1.msra.mxu0 0.0
    %452 = vmatprep.subr.mxu0 0.0
    %453 = vmatpush1.msra.mxu0 0.0
    %454 = vmatprep.subr.mxu0 0.0
    %455 = vmatpush1.msra.mxu0 0.0
    %456 = vmatprep.subr.mxu0 0.0
    %457 = vmatpush1.msra.mxu0 0.0
    %458 = vmatprep.subr.mxu0 0.0
    %459 = vmatpush1.msra.mxu0 0.0
    %460 = vmatprep.subr.mxu0 0.0
    %461 = vmatpush1.msra.mxu0 0.0
    %462 = vmatprep.subr.mxu0 0.0
    %463 = vmatpush1.msra.mxu0 0.0
    %464 = vmatprep.subr.mxu0 0.0
    %465 = vmatpush1.msra.mxu0 0.0
    %466 = vmatprep.subr.mxu0 0.0
    %467 = vmatpush1.msra.mxu0 0.0
    %468 = vmatprep.subr.mxu0 0.0
    %469 = vmatpush1.msra.mxu0 0.0
    %470 = vmatprep.subr.mxu0 0.0
    %471 = vmatpush1.msra.mxu0 0.0
    %472 = vmatprep.mubr.f32.mxu0 0.0
    %473 = vmatmul.mubr.f32.gmra.mrb[0].mxu0 %v245
    %v474 = vpop.f32.mrb[0].mxu0
    %v475 = vadd.f32 0.0, %v474
    %v476 = vpop.f32.mrb[0].mxu0
    %477 = vmatprep.mubr.f32.mxu0 0.0
    %478 = vmatmul.mubr.f32.gmra.mrb[0].mxu0 %v248
    %v479 = vpop.f32.mrb[0].mxu0
    %v480 = vadd.f32 0.0, %v479
    %v481 = vpop.f32.mrb[0].mxu0
    %482 = vdwg.mxu0
    %vm483 = vcmask 130048
    %v485 = vsel %vm483, %v317, 0
    %v488 = vsel %vm483, %v322, 0
    %v491 = vsel %vm483, %v396, 0
    %v494 = vsel %vm483, %v401, 0
    %496 = vmatprep.subr.mxu0 0.0
    %497 = vmatpush1.xpose.msra.mxu0 %v491
    %498 = vmatprep.subr.mxu0 0.0
    %499 = vmatpush1.xpose.msra.mxu0 %v494
    %500 = vmatprep.subr.mxu0 0.0
    %501 = vmatpush1.xpose.msra.mxu0 0.0
    %502 = vmatprep.subr.mxu0 0.0
    %503 = vmatpush1.xpose.msra.mxu0 0.0
    %504 = vmatprep.subr.mxu0 0.0
    %505 = vmatpush1.xpose.msra.mxu0 0.0
    %506 = vmatprep.subr.mxu0 0.0
    %507 = vmatpush1.xpose.msra.mxu0 0.0
    %508 = vmatprep.subr.mxu0 0.0
    %509 = vmatpush1.xpose.msra.mxu0 0.0
    %510 = vmatprep.subr.mxu0 0.0
    %511 = vmatpush1.xpose.msra.mxu0 0.0
    %512 = vmatprep.subr.mxu0 0.0
    %513 = vmatpush1.xpose.msra.mxu0 0.0
    %514 = vmatprep.subr.mxu0 0.0
    %515 = vmatpush1.xpose.msra.mxu0 0.0
    %516 = vmatprep.subr.mxu0 0.0
    %517 = vmatpush1.xpose.msra.mxu0 0.0
    %518 = vmatprep.subr.mxu0 0.0
    %519 = vmatpush1.xpose.msra.mxu0 0.0
    %520 = vmatprep.subr.mxu0 0.0
    %521 = vmatpush1.xpose.msra.mxu0 0.0
    %522 = vmatprep.subr.mxu0 0.0
    %523 = vmatpush1.xpose.msra.mxu0 0.0
    %524 = vmatprep.subr.mxu0 0.0
    %525 = vmatpush1.xpose.msra.mxu0 0.0
    %526 = vmatprep.subr.mxu0 0.0
    %527 = vmatpush1.xpose.msra.mxu0 0.0
    %528 = vmatprep.subr.mxu0 0.0
    %529 = vmatpush1.xpose.msra.mxu0 0.0
    %530 = vmatprep.subr.mxu0 0.0
    %531 = vmatpush1.xpose.msra.mxu0 0.0
    %532 = vmatprep.subr.mxu0 0.0
    %533 = vmatpush1.xpose.msra.mxu0 0.0
    %534 = vmatprep.subr.mxu0 0.0
    %535 = vmatpush1.xpose.msra.mxu0 0.0
    %536 = vmatprep.subr.mxu0 0.0
    %537 = vmatpush1.xpose.msra.mxu0 0.0
    %538 = vmatprep.subr.mxu0 0.0
    %539 = vmatpush1.xpose.msra.mxu0 0.0
    %540 = vmatprep.subr.mxu0 0.0
    %541 = vmatpush1.xpose.msra.mxu0 0.0
    %542 = vmatprep.subr.mxu0 0.0
    %543 = vmatpush1.xpose.msra.mxu0 0.0
    %544 = vmatprep.subr.mxu0 0.0
    %545 = vmatpush1.xpose.msra.mxu0 0.0
    %546 = vmatprep.subr.mxu0 0.0
    %547 = vmatpush1.xpose.msra.mxu0 0.0
    %548 = vmatprep.subr.mxu0 0.0
    %549 = vmatpush1.xpose.msra.mxu0 0.0
    %550 = vmatprep.subr.mxu0 0.0
    %551 = vmatpush1.xpose.msra.mxu0 0.0
    %552 = vmatprep.subr.mxu0 0.0
    %553 = vmatpush1.xpose.msra.mxu0 0.0
    %554 = vmatprep.subr.mxu0 0.0
    %555 = vmatpush1.xpose.msra.mxu0 0.0
    %556 = vmatprep.subr.mxu0 0.0
    %557 = vmatpush1.xpose.msra.mxu0 0.0
    %558 = vmatprep.subr.mxu0 0.0
    %559 = vmatpush1.xpose.msra.mxu0 0.0
    %560 = vmatprep.mubr.f32.mxu0 0.0
    %561 = vmatmul.mubr.f32.gmra.mrb[0].mxu0 %v485
    %v562 = vpop.f32.mrb[0].mxu0
    %v563 = vadd.f32 %v192, %v562
    %v564 = vpop.f32.mrb[0].mxu0
    %565 = vmatprep.mubr.f32.mxu0 0.0
    %566 = vmatmul.mubr.f32.gmra.mrb[0].mxu0 %v488
    %v567 = vpop.f32.mrb[0].mxu0
    %v568 = vadd.f32 %v192, %v567
    %v569 = vpop.f32.mrb[0].mxu0
    %570 = vdwg.mxu0
    %v571 = vsel %vm483, %v563, -inf
    %572 = vmax.xlane.f32.xlu0 %v571
    %v573 = vpop.xlane.xlu0 %572
    %v574 = vsel %vm483, %v568, -inf
    %575 = vmax.xlane.f32.xlu0 %v574
    %v576 = vpop.xlane.xlu0 %575
    %v577 = vsub.f32 %v563, %v573
    %v578 = vsub.f32 %v568, %v576
    %v579 = vmul.f32 %v577, 1.442695
    %v580 = vpow.pop %v579
    %v581 = vmul.f32 %v578, 1.442695
    %v582 = vpow.pop %v581
    %v583 = vsel %vm483, %v580, 0.0
    %584 = vadd.xlane.f32.xlu0 %v583
    %v585 = vpop.xlane.xlu0 %584
    %v586 = vsel %vm483, %v582, 0.0
    %587 = vadd.xlane.f32.xlu0 %v586
    %v588 = vpop.xlane.xlu0 %587
    %v589 = vrcp.pop %v585
    %v590 = vmul.f32 %v580, %v589
    %v591 = vrcp.pop %v588
    %v592 = vmul.f32 %v582, %v591
    %v594 = vsel %vm483, %v590, 0
    %v597 = vsel %vm483, %v592, 0
    %599 = vmatprep.subr.mxu0 0.0
    %600 = vmatpush1.msra.mxu0 %v475
    %601 = vmatprep.subr.mxu0 0.0
    %602 = vmatpush1.msra.mxu0 %v480
    %603 = vmatprep.subr.mxu0 0.0
    %604 = vmatpush1.msra.mxu0 0.0
    %605 = vmatprep.subr.mxu0 0.0
    %606 = vmatpush1.msra.mxu0 0.0
    %607 = vmatprep.subr.mxu0 0.0
    %608 = vmatpush1.msra.mxu0 0.0
    %609 = vmatprep.subr.mxu0 0.0
    %610 = vmatpush1.msra.mxu0 0.0
    %611 = vmatprep.subr.mxu0 0.0
    %612 = vmatpush1.msra.mxu0 0.0
    %613 = vmatprep.subr.mxu0 0.0
    %614 = vmatpush1.msra.mxu0 0.0
    %615 = vmatprep.subr.mxu0 0.0
    %616 = vmatpush1.msra.mxu0 0.0
    %617 = vmatprep.subr.mxu0 0.0
    %618 = vmatpush1.msra.mxu0 0.0
    %619 = vmatprep.subr.mxu0 0.0
    %620 = vmatpush1.msra.mxu0 0.0
    %621 = vmatprep.subr.mxu0 0.0
    %622 = vmatpush1.msra.mxu0 0.0
    %623 = vmatprep.subr.mxu0 0.0
    %624 = vmatpush1.msra.mxu0 0.0
    %625 = vmatprep.subr.mxu0 0.0
    %626 = vmatpush1.msra.mxu0 0.0
    %627 = vmatprep.subr.mxu0 0.0
    %628 = vmatpush1.msra.mxu0 0.0
    %629 = vmatprep.subr.mxu0 0.0
    %630 = vmatpush1.msra.mxu0 0.0
    %631 = vmatprep.subr.mxu0 0.0
    %632 = vmatpush1.msra.mxu0 0.0
    %633 = vmatprep.subr.mxu0 0.0
    %634 = vmatpush1.msra.mxu0 0.0
    %635 = vmatprep.subr.mxu0 0.0
    %636 = vmatpush1.msra.mxu0 0.0
    %637 = vmatprep.subr.mxu0 0.0
    %638 = vmatpush1.msra.mxu0 0.0
    %639 = vmatprep.subr.mxu0 0.0
    %640 = vmatpush1.msra.mxu0 0.0
    %641 = vmatprep.subr.mxu0 0.0
    %642 = vmatpush1.msra.mxu0 0.0
    %643 = vmatprep.subr.mxu0 0.0
    %644 = vmatpush1.msra.mxu0 0.0
    %645 = vmatprep.subr.mxu0 0.0
    %646 = vmatpush1.msra.mxu0 0.0
    %647 = vmatprep.subr.mxu0 0.0
    %648 = vmatpush1.msra.mxu0 0.0
    %649 = vmatprep.subr.mxu0 0.0
    %650 = vmatpush1.msra.mxu0 0.0
    %651 = vmatprep.subr.mxu0 0.0
    %652 = vmatpush1.msra.mxu0 0.0
    %653 = vmatprep.subr.mxu0 0.0
    %654 = vmatpush1.msra.mxu0 0.0
    %655 = vmatprep.subr.mxu0 0.0
    %656 = vmatpush1.msra.mxu0 0.0
    %657 = vmatprep.subr.mxu0 0.0
    %658 = vmatpush1.msra.mxu0 0.0
    %659 = vmatprep.subr.mxu0 0.0
    %660 = vmatpush1.msra.mxu0 0.0
    %661 = vmatprep.subr.mxu0 0.0
    %662 = vmatpush1.msra.mxu0 0.0
    %663 = vmatprep.mubr.f32.mxu0 0.0
    %664 = vmatmul.mubr.f32.gmra.mrb[0].mxu0 %v594
    %v665 = vpop.f32.mrb[0].mxu0
    %v666 = vadd.f32 0.0, %v665
    %v667 = vpop.f32.mrb[0].mxu0
    %668 = vmatprep.mubr.f32.mxu0 0.0
    %669 = vmatmul.mubr.f32.gmra.mrb[0].mxu0 %v597
    %v670 = vpop.f32.mrb[0].mxu0
    %v671 = vadd.f32 0.0, %v670
    %v672 = vpop.f32.mrb[0].mxu0
    %673 = vdwg.mxu0
    %v674 = vld [vmem:[%s9] sm:$0xff]
    %v675 = vld [vmem:[%s9 + $0x8] sm:$0xff]
    %s676 = scalar_lea.vmem %s6, 32
    %v677 = vld [vmem:[%s676] sm:$0xff]
    %v678 = vld [vmem:[%s676 + $0x8] sm:$0xff]
    %v679 = vld [vmem:[%s676 + $0x10] sm:$0xff]
    %v680 = vld [vmem:[%s676 + $0x18] sm:$0xff]
    %681 = vmatprep.subr.mxu0 0.0
    %682 = vmatpush1.msra.mxu0 %v677
    %683 = vmatprep.subr.mxu0 0.0
    %684 = vmatpush1.msra.mxu0 %v678
    %685 = vmatprep.subr.mxu0 0.0
    %686 = vmatpush1.msra.mxu0 %v679
    %687 = vmatprep.subr.mxu0 0.0
    %688 = vmatpush1.msra.mxu0 %v680
    %689 = vmatprep.subr.mxu0 0.0
    %690 = vmatpush1.msra.mxu0 0.0
    %691 = vmatprep.subr.mxu0 0.0
    %692 = vmatpush1.msra.mxu0 0.0
    %693 = vmatprep.subr.mxu0 0.0
    %694 = vmatpush1.msra.mxu0 0.0
    %695 = vmatprep.subr.mxu0 0.0
    %696 = vmatpush1.msra.mxu0 0.0
    %697 = vmatprep.subr.mxu0 0.0
    %698 = vmatpush1.msra.mxu0 0.0
    %699 = vmatprep.subr.mxu0 0.0
    %700 = vmatpush1.msra.mxu0 0.0
    %701 = vmatprep.subr.mxu0 0.0
    %702 = vmatpush1.msra.mxu0 0.0
    %703 = vmatprep.subr.mxu0 0.0
    %704 = vmatpush1.msra.mxu0 0.0
    %705 = vmatprep.subr.mxu0 0.0
    %706 = vmatpush1.msra.mxu0 0.0
    %707 = vmatprep.subr.mxu0 0.0
    %708 = vmatpush1.msra.mxu0 0.0
    %709 = vmatprep.subr.mxu0 0.0
    %710 = vmatpush1.msra.mxu0 0.0
    %711 = vmatprep.subr.mxu0 0.0
    %712 = vmatpush1.msra.mxu0 0.0
    %713 = vmatprep.subr.mxu0 0.0
    %714 = vmatpush1.msra.mxu0 0.0
    %715 = vmatprep.subr.mxu0 0.0
    %716 = vmatpush1.msra.mxu0 0.0
    %717 = vmatprep.subr.mxu0 0.0
    %718 = vmatpush1.msra.mxu0 0.0
    %719 = vmatprep.subr.mxu0 0.0
    %720 = vmatpush1.msra.mxu0 0.0
    %721 = vmatprep.subr.mxu0 0.0
    %722 = vmatpush1.msra.mxu0 0.0
    %723 = vmatprep.subr.mxu0 0.0
    %724 = vmatpush1.msra.mxu0 0.0
    %725 = vmatprep.subr.mxu0 0.0
    %726 = vmatpush1.msra.mxu0 0.0
    %727 = vmatprep.subr.mxu0 0.0
    %728 = vmatpush1.msra.mxu0 0.0
    %729 = vmatprep.subr.mxu0 0.0
    %730 = vmatpush1.msra.mxu0 0.0
    %731 = vmatprep.subr.mxu0 0.0
    %732 = vmatpush1.msra.mxu0 0.0
    %733 = vmatprep.subr.mxu0 0.0
    %734 = vmatpush1.msra.mxu0 0.0
    %735 = vmatprep.subr.mxu0 0.0
    %736 = vmatpush1.msra.mxu0 0.0
    %737 = vmatprep.subr.mxu0 0.0
    %738 = vmatpush1.msra.mxu0 0.0
    %739 = vmatprep.subr.mxu0 0.0
    %740 = vmatpush1.msra.mxu0 0.0
    %741 = vmatprep.subr.mxu0 0.0
    %742 = vmatpush1.msra.mxu0 0.0
    %743 = vmatprep.subr.mxu0 0.0
    %744 = vmatpush1.msra.mxu0 0.0
    %745 = vmatprep.mubr.f32.mxu0 0.0
    %746 = vmatmul.mubr.f32.gmra.mrb[0].mxu0 %v245
    %v747 = vpop.f32.mrb[0].mxu0
    %v748 = vadd.f32 0.0, %v747
    %v749 = vpop.f32.mrb[0].mxu0
    %750 = vmatprep.mubr.f32.mxu0 0.0
    %751 = vmatmul.mubr.f32.gmra.mrb[0].mxu0 %v248
    %v752 = vpop.f32.mrb[0].mxu0
    %v753 = vadd.f32 0.0, %v752
    %v754 = vpop.f32.mrb[0].mxu0
    %755 = vdwg.mxu0
    %s756 = scalar_lea.vmem %s7, 32
    %v757 = vld [vmem:[%s756] sm:$0xff]
    %v758 = vld [vmem:[%s756 + $0x8] sm:$0xff]
    %v759 = vld [vmem:[%s756 + $0x10] sm:$0xff]
    %v760 = vld [vmem:[%s756 + $0x18] sm:$0xff]
    %761 = vmatprep.subr.mxu0 0.0
    %762 = vmatpush1.msra.mxu0 %v757
    %763 = vmatprep.subr.mxu0 0.0
    %764 = vmatpush1.msra.mxu0 %v758
    %765 = vmatprep.subr.mxu0 0.0
    %766 = vmatpush1.msra.mxu0 %v759
    %767 = vmatprep.subr.mxu0 0.0
    %768 = vmatpush1.msra.mxu0 %v760
    %769 = vmatprep.subr.mxu0 0.0
    %770 = vmatpush1.msra.mxu0 0.0
    %771 = vmatprep.subr.mxu0 0.0
    %772 = vmatpush1.msra.mxu0 0.0
    %773 = vmatprep.subr.mxu0 0.0
    %774 = vmatpush1.msra.mxu0 0.0
    %775 = vmatprep.subr.mxu0 0.0
    %776 = vmatpush1.msra.mxu0 0.0
    %777 = vmatprep.subr.mxu0 0.0
    %778 = vmatpush1.msra.mxu0 0.0
    %779 = vmatprep.subr.mxu0 0.0
    %780 = vmatpush1.msra.mxu0 0.0
    %781 = vmatprep.subr.mxu0 0.0
    %782 = vmatpush1.msra.mxu0 0.0
    %783 = vmatprep.subr.mxu0 0.0
    %784 = vmatpush1.msra.mxu0 0.0
    %785 = vmatprep.subr.mxu0 0.0
    %786 = vmatpush1.msra.mxu0 0.0
    %787 = vmatprep.subr.mxu0 0.0
    %788 = vmatpush1.msra.mxu0 0.0
    %789 = vmatprep.subr.mxu0 0.0
    %790 = vmatpush1.msra.mxu0 0.0
    %791 = vmatprep.subr.mxu0 0.0
    %792 = vmatpush1.msra.mxu0 0.0
    %793 = vmatprep.subr.mxu0 0.0
    %794 = vmatpush1.msra.mxu0 0.0
    %795 = vmatprep.subr.mxu0 0.0
    %796 = vmatpush1.msra.mxu0 0.0
    %797 = vmatprep.subr.mxu0 0.0
    %798 = vmatpush1.msra.mxu0 0.0
    %799 = vmatprep.subr.mxu0 0.0
    %800 = vmatpush1.msra.mxu0 0.0
    %801 = vmatprep.subr.mxu0 0.0
    %802 = vmatpush1.msra.mxu0 0.0
    %803 = vmatprep.subr.mxu0 0.0
    %804 = vmatpush1.msra.mxu0 0.0
    %805 = vmatprep.subr.mxu0 0.0
    %806 = vmatpush1.msra.mxu0 0.0
    %807 = vmatprep.subr.mxu0 0.0
    %808 = vmatpush1.msra.mxu0 0.0
    %809 = vmatprep.subr.mxu0 0.0
    %810 = vmatpush1.msra.mxu0 0.0
    %811 = vmatprep.subr.mxu0 0.0
    %812 = vmatpush1.msra.mxu0 0.0
    %813 = vmatprep.subr.mxu0 0.0
    %814 = vmatpush1.msra.mxu0 0.0
    %815 = vmatprep.subr.mxu0 0.0
    %816 = vmatpush1.msra.mxu0 0.0
    %817 = vmatprep.subr.mxu0 0.0
    %818 = vmatpush1.msra.mxu0 0.0
    %819 = vmatprep.subr.mxu0 0.0
    %820 = vmatpush1.msra.mxu0 0.0
    %821 = vmatprep.subr.mxu0 0.0
    %822 = vmatpush1.msra.mxu0 0.0
    %823 = vmatprep.subr.mxu0 0.0
    %824 = vmatpush1.msra.mxu0 0.0
    %825 = vmatprep.mubr.f32.mxu0 0.0
    %826 = vmatmul.mubr.f32.gmra.mrb[0].mxu0 %v245
    %v827 = vpop.f32.mrb[0].mxu0
    %v828 = vadd.f32 0.0, %v827
    %v829 = vpop.f32.mrb[0].mxu0
    %830 = vmatprep.mubr.f32.mxu0 0.0
    %831 = vmatmul.mubr.f32.gmra.mrb[0].mxu0 %v248
    %v832 = vpop.f32.mrb[0].mxu0
    %v833 = vadd.f32 0.0, %v832
    %v834 = vpop.f32.mrb[0].mxu0
    %835 = vdwg.mxu0
    %s836 = scalar_lea.vmem %s8, 32
    %v837 = vld [vmem:[%s836] sm:$0xff]
    %v838 = vld [vmem:[%s836 + $0x8] sm:$0xff]
    %v839 = vld [vmem:[%s836 + $0x10] sm:$0xff]
    %v840 = vld [vmem:[%s836 + $0x18] sm:$0xff]
    %841 = vmatprep.subr.mxu0 0.0
    %842 = vmatpush1.msra.mxu0 %v837
    %843 = vmatprep.subr.mxu0 0.0
    %844 = vmatpush1.msra.mxu0 %v838
    %845 = vmatprep.subr.mxu0 0.0
    %846 = vmatpush1.msra.mxu0 %v839
    %847 = vmatprep.subr.mxu0 0.0
    %848 = vmatpush1.msra.mxu0 %v840
    %849 = vmatprep.subr.mxu0 0.0
    %850 = vmatpush1.msra.mxu0 0.0
    %851 = vmatprep.subr.mxu0 0.0
    %852 = vmatpush1.msra.mxu0 0.0
    %853 = vmatprep.subr.mxu0 0.0
    %854 = vmatpush1.msra.mxu0 0.0
    %855 = vmatprep.subr.mxu0 0.0
    %856 = vmatpush1.msra.mxu0 0.0
    %857 = vmatprep.subr.mxu0 0.0
    %858 = vmatpush1.msra.mxu0 0.0
    %859 = vmatprep.subr.mxu0 0.0
    %860 = vmatpush1.msra.mxu0 0.0
    %861 = vmatprep.subr.mxu0 0.0
    %862 = vmatpush1.msra.mxu0 0.0
    %863 = vmatprep.subr.mxu0 0.0
    %864 = vmatpush1.msra.mxu0 0.0
    %865 = vmatprep.subr.mxu0 0.0
    %866 = vmatpush1.msra.mxu0 0.0
    %867 = vmatprep.subr.mxu0 0.0
    %868 = vmatpush1.msra.mxu0 0.0
    %869 = vmatprep.subr.mxu0 0.0
    %870 = vmatpush1.msra.mxu0 0.0
    %871 = vmatprep.subr.mxu0 0.0
    %872 = vmatpush1.msra.mxu0 0.0
    %873 = vmatprep.subr.mxu0 0.0
    %874 = vmatpush1.msra.mxu0 0.0
    %875 = vmatprep.subr.mxu0 0.0
    %876 = vmatpush1.msra.mxu0 0.0
    %877 = vmatprep.subr.mxu0 0.0
    %878 = vmatpush1.msra.mxu0 0.0
    %879 = vmatprep.subr.mxu0 0.0
    %880 = vmatpush1.msra.mxu0 0.0
    %881 = vmatprep.subr.mxu0 0.0
    %882 = vmatpush1.msra.mxu0 0.0
    %883 = vmatprep.subr.mxu0 0.0
    %884 = vmatpush1.msra.mxu0 0.0
    %885 = vmatprep.subr.mxu0 0.0
    %886 = vmatpush1.msra.mxu0 0.0
    %887 = vmatprep.subr.mxu0 0.0
    %888 = vmatpush1.msra.mxu0 0.0
    %889 = vmatprep.subr.mxu0 0.0
    %890 = vmatpush1.msra.mxu0 0.0
    %891 = vmatprep.subr.mxu0 0.0
    %892 = vmatpush1.msra.mxu0 0.0
    %893 = vmatprep.subr.mxu0 0.0
    %894 = vmatpush1.msra.mxu0 0.0
    %895 = vmatprep.subr.mxu0 0.0
    %896 = vmatpush1.msra.mxu0 0.0
    %897 = vmatprep.subr.mxu0 0.0
    %898 = vmatpush1.msra.mxu0 0.0
    %899 = vmatprep.subr.mxu0 0.0
    %900 = vmatpush1.msra.mxu0 0.0
    %901 = vmatprep.subr.mxu0 0.0
    %902 = vmatpush1.msra.mxu0 0.0
    %903 = vmatprep.subr.mxu0 0.0
    %904 = vmatpush1.msra.mxu0 0.0
    %905 = vmatprep.mubr.f32.mxu0 0.0
    %906 = vmatmul.mubr.f32.gmra.mrb[0].mxu0 %v245
    %v907 = vpop.f32.mrb[0].mxu0
    %v908 = vadd.f32 0.0, %v907
    %v909 = vpop.f32.mrb[0].mxu0
    %910 = vmatprep.mubr.f32.mxu0 0.0
    %911 = vmatmul.mubr.f32.gmra.mrb[0].mxu0 %v248
    %v912 = vpop.f32.mrb[0].mxu0
    %v913 = vadd.f32 0.0, %v912
    %v914 = vpop.f32.mrb[0].mxu0
    %915 = vdwg.mxu0
    %v917 = vsel %vm483, %v748, 0
    %v920 = vsel %vm483, %v753, 0
    %v923 = vsel %vm483, %v828, 0
    %v926 = vsel %vm483, %v833, 0
    %928 = vmatprep.subr.mxu0 0.0
    %929 = vmatpush1.xpose.msra.mxu0 %v923
    %930 = vmatprep.subr.mxu0 0.0
    %931 = vmatpush1.xpose.msra.mxu0 %v926
    %932 = vmatprep.subr.mxu0 0.0
    %933 = vmatpush1.xpose.msra.mxu0 0.0
    %934 = vmatprep.subr.mxu0 0.0
    %935 = vmatpush1.xpose.msra.mxu0 0.0
    %936 = vmatprep.subr.mxu0 0.0
    %937 = vmatpush1.xpose.msra.mxu0 0.0
    %938 = vmatprep.subr.mxu0 0.0
    %939 = vmatpush1.xpose.msra.mxu0 0.0
    %940 = vmatprep.subr.mxu0 0.0
    %941 = vmatpush1.xpose.msra.mxu0 0.0
    %942 = vmatprep.subr.mxu0 0.0
    %943 = vmatpush1.xpose.msra.mxu0 0.0
    %944 = vmatprep.subr.mxu0 0.0
    %945 = vmatpush1.xpose.msra.mxu0 0.0
    %946 = vmatprep.subr.mxu0 0.0
    %947 = vmatpush1.xpose.msra.mxu0 0.0
    %948 = vmatprep.subr.mxu0 0.0
    %949 = vmatpush1.xpose.msra.mxu0 0.0
    %950 = vmatprep.subr.mxu0 0.0
    %951 = vmatpush1.xpose.msra.mxu0 0.0
    %952 = vmatprep.subr.mxu0 0.0
    %953 = vmatpush1.xpose.msra.mxu0 0.0
    %954 = vmatprep.subr.mxu0 0.0
    %955 = vmatpush1.xpose.msra.mxu0 0.0
    %956 = vmatprep.subr.mxu0 0.0
    %957 = vmatpush1.xpose.msra.mxu0 0.0
    %958 = vmatprep.subr.mxu0 0.0
    %959 = vmatpush1.xpose.msra.mxu0 0.0
    %960 = vmatprep.subr.mxu0 0.0
    %961 = vmatpush1.xpose.msra.mxu0 0.0
    %962 = vmatprep.subr.mxu0 0.0
    %963 = vmatpush1.xpose.msra.mxu0 0.0
    %964 = vmatprep.subr.mxu0 0.0
    %965 = vmatpush1.xpose.msra.mxu0 0.0
    %966 = vmatprep.subr.mxu0 0.0
    %967 = vmatpush1.xpose.msra.mxu0 0.0
    %968 = vmatprep.subr.mxu0 0.0
    %969 = vmatpush1.xpose.msra.mxu0 0.0
    %970 = vmatprep.subr.mxu0 0.0
    %971 = vmatpush1.xpose.msra.mxu0 0.0
    %972 = vmatprep.subr.mxu0 0.0
    %973 = vmatpush1.xpose.msra.mxu0 0.0
    %974 = vmatprep.subr.mxu0 0.0
    %975 = vmatpush1.xpose.msra.mxu0 0.0
    %976 = vmatprep.subr.mxu0 0.0
    %977 = vmatpush1.xpose.msra.mxu0 0.0
    %978 = vmatprep.subr.mxu0 0.0
    %979 = vmatpush1.xpose.msra.mxu0 0.0
    %980 = vmatprep.subr.mxu0 0.0
    %981 = vmatpush1.xpose.msra.mxu0 0.0
    %982 = vmatprep.subr.mxu0 0.0
    %983 = vmatpush1.xpose.msra.mxu0 0.0
    %984 = vmatprep.subr.mxu0 0.0
    %985 = vmatpush1.xpose.msra.mxu0 0.0
    %986 = vmatprep.subr.mxu0 0.0
    %987 = vmatpush1.xpose.msra.mxu0 0.0
    %988 = vmatprep.subr.mxu0 0.0
    %989 = vmatpush1.xpose.msra.mxu0 0.0
    %990 = vmatprep.subr.mxu0 0.0
    %991 = vmatpush1.xpose.msra.mxu0 0.0
    %992 = vmatprep.mubr.f32.mxu0 0.0
    %993 = vmatmul.mubr.f32.gmra.mrb[0].mxu0 %v917
    %v994 = vpop.f32.mrb[0].mxu0
    %v995 = vadd.f32 %v192, %v994
    %v996 = vpop.f32.mrb[0].mxu0
    %997 = vmatprep.mubr.f32.mxu0 0.0
    %998 = vmatmul.mubr.f32.gmra.mrb[0].mxu0 %v920
    %v999 = vpop.f32.mrb[0].mxu0
    %v1000 = vadd.f32 %v192, %v999
    %v1001 = vpop.f32.mrb[0].mxu0
    %1002 = vdwg.mxu0
    %v1003 = vsel %vm483, %v995, -inf
    %1004 = vmax.xlane.f32.xlu0 %v1003
    %v1005 = vpop.xlane.xlu0 %1004
    %v1006 = vsel %vm483, %v1000, -inf
    %1007 = vmax.xlane.f32.xlu0 %v1006
    %v1008 = vpop.xlane.xlu0 %1007
    %v1009 = vsub.f32 %v995, %v1005
    %v1010 = vsub.f32 %v1000, %v1008
    %v1011 = vmul.f32 %v1009, 1.442695
    %v1012 = vpow.pop %v1011
    %v1013 = vmul.f32 %v1010, 1.442695
    %v1014 = vpow.pop %v1013
    %v1015 = vsel %vm483, %v1012, 0.0
    %1016 = vadd.xlane.f32.xlu0 %v1015
    %v1017 = vpop.xlane.xlu0 %1016
    %v1018 = vsel %vm483, %v1014, 0.0
    %1019 = vadd.xlane.f32.xlu0 %v1018
    %v1020 = vpop.xlane.xlu0 %1019
    %v1021 = vrcp.pop %v1017
    %v1022 = vmul.f32 %v1012, %v1021
    %v1023 = vrcp.pop %v1020
    %v1024 = vmul.f32 %v1014, %v1023
    %v1026 = vsel %vm483, %v1022, 0
    %v1029 = vsel %vm483, %v1024, 0
    %1031 = vmatprep.subr.mxu0 0.0
    %1032 = vmatpush1.msra.mxu0 %v908
    %1033 = vmatprep.subr.mxu0 0.0
    %1034 = vmatpush1.msra.mxu0 %v913
    %1035 = vmatprep.subr.mxu0 0.0
    %1036 = vmatpush1.msra.mxu0 0.0
    %1037 = vmatprep.subr.mxu0 0.0
    %1038 = vmatpush1.msra.mxu0 0.0
    %1039 = vmatprep.subr.mxu0 0.0
    %1040 = vmatpush1.msra.mxu0 0.0
    %1041 = vmatprep.subr.mxu0 0.0
    %1042 = vmatpush1.msra.mxu0 0.0
    %1043 = vmatprep.subr.mxu0 0.0
    %1044 = vmatpush1.msra.mxu0 0.0
    %1045 = vmatprep.subr.mxu0 0.0
    %1046 = vmatpush1.msra.mxu0 0.0
    %1047 = vmatprep.subr.mxu0 0.0
    %1048 = vmatpush1.msra.mxu0 0.0
    %1049 = vmatprep.subr.mxu0 0.0
    %1050 = vmatpush1.msra.mxu0 0.0
    %1051 = vmatprep.subr.mxu0 0.0
    %1052 = vmatpush1.msra.mxu0 0.0
    %1053 = vmatprep.subr.mxu0 0.0
    %1054 = vmatpush1.msra.mxu0 0.0
    %1055 = vmatprep.subr.mxu0 0.0
    %1056 = vmatpush1.msra.mxu0 0.0
    %1057 = vmatprep.subr.mxu0 0.0
    %1058 = vmatpush1.msra.mxu0 0.0
    %1059 = vmatprep.subr.mxu0 0.0
    %1060 = vmatpush1.msra.mxu0 0.0
    %1061 = vmatprep.subr.mxu0 0.0
    %1062 = vmatpush1.msra.mxu0 0.0
    %1063 = vmatprep.subr.mxu0 0.0
    %1064 = vmatpush1.msra.mxu0 0.0
    %1065 = vmatprep.subr.mxu0 0.0
    %1066 = vmatpush1.msra.mxu0 0.0
    %1067 = vmatprep.subr.mxu0 0.0
    %1068 = vmatpush1.msra.mxu0 0.0
    %1069 = vmatprep.subr.mxu0 0.0
    %1070 = vmatpush1.msra.mxu0 0.0
    %1071 = vmatprep.subr.mxu0 0.0
    %1072 = vmatpush1.msra.mxu0 0.0
    %1073 = vmatprep.subr.mxu0 0.0
    %1074 = vmatpush1.msra.mxu0 0.0
    %1075 = vmatprep.subr.mxu0 0.0
    %1076 = vmatpush1.msra.mxu0 0.0
    %1077 = vmatprep.subr.mxu0 0.0
    %1078 = vmatpush1.msra.mxu0 0.0
    %1079 = vmatprep.subr.mxu0 0.0
    %1080 = vmatpush1.msra.mxu0 0.0
    %1081 = vmatprep.subr.mxu0 0.0
    %1082 = vmatpush1.msra.mxu0 0.0
    %1083 = vmatprep.subr.mxu0 0.0
    %1084 = vmatpush1.msra.mxu0 0.0
    %1085 = vmatprep.subr.mxu0 0.0
    %1086 = vmatpush1.msra.mxu0 0.0
    %1087 = vmatprep.subr.mxu0 0.0
    %1088 = vmatpush1.msra.mxu0 0.0
    %1089 = vmatprep.subr.mxu0 0.0
    %1090 = vmatpush1.msra.mxu0 0.0
    %1091 = vmatprep.subr.mxu0 0.0
    %1092 = vmatpush1.msra.mxu0 0.0
    %1093 = vmatprep.subr.mxu0 0.0
    %1094 = vmatpush1.msra.mxu0 0.0
    %1095 = vmatprep.mubr.f32.mxu0 0.0
    %1096 = vmatmul.mubr.f32.gmra.mrb[0].mxu0 %v1026
    %v1097 = vpop.f32.mrb[0].mxu0
    %v1098 = vadd.f32 0.0, %v1097
    %v1099 = vpop.f32.mrb[0].mxu0
    %1100 = vmatprep.mubr.f32.mxu0 0.0
    %1101 = vmatmul.mubr.f32.gmra.mrb[0].mxu0 %v1029
    %v1102 = vpop.f32.mrb[0].mxu0
    %v1103 = vadd.f32 0.0, %v1102
    %v1104 = vpop.f32.mrb[0].mxu0
    %1105 = vdwg.mxu0
    %s1106 = scalar_lea.vmem %s9, 16
    %v1107 = vld [vmem:[%s1106] sm:$0xff]
    %v1108 = vld [vmem:[%s1106 + $0x8] sm:$0xff]
    %v1110 = vsel %vm483, %v1098, 0
    %v1113 = vsel %vm483, %v1103, 0
    %1115 = vmatprep.subr.mxu0 0.0
    %1116 = vmatpush1.msra.mxu0 %v1107
    %1117 = vmatprep.subr.mxu0 0.0
    %1118 = vmatpush1.msra.mxu0 %v1108
    %1119 = vmatprep.subr.mxu0 0.0
    %1120 = vmatpush1.msra.mxu0 0.0
    %1121 = vmatprep.subr.mxu0 0.0
    %1122 = vmatpush1.msra.mxu0 0.0
    %1123 = vmatprep.subr.mxu0 0.0
    %1124 = vmatpush1.msra.mxu0 0.0
    %1125 = vmatprep.subr.mxu0 0.0
    %1126 = vmatpush1.msra.mxu0 0.0
    %1127 = vmatprep.subr.mxu0 0.0
    %1128 = vmatpush1.msra.mxu0 0.0
    %1129 = vmatprep.subr.mxu0 0.0
    %1130 = vmatpush1.msra.mxu0 0.0
    %1131 = vmatprep.subr.mxu0 0.0
    %1132 = vmatpush1.msra.mxu0 0.0
    %1133 = vmatprep.subr.mxu0 0.0
    %1134 = vmatpush1.msra.mxu0 0.0
    %1135 = vmatprep.subr.mxu0 0.0
    %1136 = vmatpush1.msra.mxu0 0.0
    %1137 = vmatprep.subr.mxu0 0.0
    %1138 = vmatpush1.msra.mxu0 0.0
    %1139 = vmatprep.subr.mxu0 0.0
    %1140 = vmatpush1.msra.mxu0 0.0
    %1141 = vmatprep.subr.mxu0 0.0
    %1142 = vmatpush1.msra.mxu0 0.0
    %1143 = vmatprep.subr.mxu0 0.0
    %1144 = vmatpush1.msra.mxu0 0.0
    %1145 = vmatprep.subr.mxu0 0.0
    %1146 = vmatpush1.msra.mxu0 0.0
    %1147 = vmatprep.subr.mxu0 0.0
    %1148 = vmatpush1.msra.mxu0 0.0
    %1149 = vmatprep.subr.mxu0 0.0
    %1150 = vmatpush1.msra.mxu0 0.0
    %1151 = vmatprep.subr.mxu0 0.0
    %1152 = vmatpush1.msra.mxu0 0.0
    %1153 = vmatprep.subr.mxu0 0.0
    %1154 = vmatpush1.msra.mxu0 0.0
    %1155 = vmatprep.subr.mxu0 0.0
    %1156 = vmatpush1.msra.mxu0 0.0
    %1157 = vmatprep.subr.mxu0 0.0
    %1158 = vmatpush1.msra.mxu0 0.0
    %1159 = vmatprep.subr.mxu0 0.0
    %1160 = vmatpush1.msra.mxu0 0.0
    %1161 = vmatprep.subr.mxu0 0.0
    %1162 = vmatpush1.msra.mxu0 0.0
    %1163 = vmatprep.subr.mxu0 0.0
    %1164 = vmatpush1.msra.mxu0 0.0
    %1165 = vmatprep.subr.mxu0 0.0
    %1166 = vmatpush1.msra.mxu0 0.0
    %1167 = vmatprep.subr.mxu0 0.0
    %1168 = vmatpush1.msra.mxu0 0.0
    %1169 = vmatprep.subr.mxu0 0.0
    %1170 = vmatpush1.msra.mxu0 0.0
    %1171 = vmatprep.subr.mxu0 0.0
    %1172 = vmatpush1.msra.mxu0 0.0
    %1173 = vmatprep.subr.mxu0 0.0
    %1174 = vmatpush1.msra.mxu0 0.0
    %1175 = vmatprep.subr.mxu0 0.0
    %1176 = vmatpush1.msra.mxu0 0.0
    %1177 = vmatprep.subr.mxu0 0.0
    %1178 = vmatpush1.msra.mxu0 0.0
    %1179 = vmatprep.mubr.f32.mxu0 0.0
    %1180 = vmatmul.mubr.f32.gmra.mrb[0].mxu0 %v1110
    %v1181 = vpop.f32.mrb[0].mxu0
    %v1182 = vadd.f32 0.0, %v1181
    %v1183 = vpop.f32.mrb[0].mxu0
    %1184 = vmatprep.mubr.f32.mxu0 0.0
    %1185 = vmatmul.mubr.f32.gmra.mrb[0].mxu0 %v1113
    %v1186 = vpop.f32.mrb[0].mxu0
    %v1187 = vadd.f32 0.0, %v1186
    %v1188 = vpop.f32.mrb[0].mxu0
    %1189 = vdwg.mxu0
    %v1191 = vsel %vm483, %v666, 0
    %v1194 = vsel %vm483, %v671, 0
    %1196 = vmatprep.subr.mxu0 0.0
    %1197 = vmatpush1.msra.mxu0 %v674
    %1198 = vmatprep.subr.mxu0 0.0
    %1199 = vmatpush1.msra.mxu0 %v675
    %1200 = vmatprep.subr.mxu0 0.0
    %1201 = vmatpush1.msra.mxu0 0.0
    %1202 = vmatprep.subr.mxu0 0.0
    %1203 = vmatpush1.msra.mxu0 0.0
    %1204 = vmatprep.subr.mxu0 0.0
    %1205 = vmatpush1.msra.mxu0 0.0
    %1206 = vmatprep.subr.mxu0 0.0
    %1207 = vmatpush1.msra.mxu0 0.0
    %1208 = vmatprep.subr.mxu0 0.0
    %1209 = vmatpush1.msra.mxu0 0.0
    %1210 = vmatprep.subr.mxu0 0.0
    %1211 = vmatpush1.msra.mxu0 0.0
    %1212 = vmatprep.subr.mxu0 0.0
    %1213 = vmatpush1.msra.mxu0 0.0
    %1214 = vmatprep.subr.mxu0 0.0
    %1215 = vmatpush1.msra.mxu0 0.0
    %1216 = vmatprep.subr.mxu0 0.0
    %1217 = vmatpush1.msra.mxu0 0.0
    %1218 = vmatprep.subr.mxu0 0.0
    %1219 = vmatpush1.msra.mxu0 0.0
    %1220 = vmatprep.subr.mxu0 0.0
    %1221 = vmatpush1.msra.mxu0 0.0
    %1222 = vmatprep.subr.mxu0 0.0
    %1223 = vmatpush1.msra.mxu0 0.0
    %1224 = vmatprep.subr.mxu0 0.0
    %1225 = vmatpush1.msra.mxu0 0.0
    %1226 = vmatprep.subr.mxu0 0.0
    %1227 = vmatpush1.msra.mxu0 0.0
    %1228 = vmatprep.subr.mxu0 0.0
    %1229 = vmatpush1.msra.mxu0 0.0
    %1230 = vmatprep.subr.mxu0 0.0
    %1231 = vmatpush1.msra.mxu0 0.0
    %1232 = vmatprep.subr.mxu0 0.0
    %1233 = vmatpush1.msra.mxu0 0.0
    %1234 = vmatprep.subr.mxu0 0.0
    %1235 = vmatpush1.msra.mxu0 0.0
    %1236 = vmatprep.subr.mxu0 0.0
    %1237 = vmatpush1.msra.mxu0 0.0
    %1238 = vmatprep.subr.mxu0 0.0
    %1239 = vmatpush1.msra.mxu0 0.0
    %1240 = vmatprep.subr.mxu0 0.0
    %1241 = vmatpush1.msra.mxu0 0.0
    %1242 = vmatprep.subr.mxu0 0.0
    %1243 = vmatpush1.msra.mxu0 0.0
    %1244 = vmatprep.subr.mxu0 0.0
    %1245 = vmatpush1.msra.mxu0 0.0
    %1246 = vmatprep.subr.mxu0 0.0
    %1247 = vmatpush1.msra.mxu0 0.0
    %1248 = vmatprep.subr.mxu0 0.0
    %1249 = vmatpush1.msra.mxu0 0.0
    %1250 = vmatprep.subr.mxu0 0.0
    %1251 = vmatpush1.msra.mxu0 0.0
    %1252 = vmatprep.subr.mxu0 0.0
    %1253 = vmatpush1.msra.mxu0 0.0
    %1254 = vmatprep.subr.mxu0 0.0
    %1255 = vmatpush1.msra.mxu0 0.0
    %1256 = vmatprep.subr.mxu0 0.0
    %1257 = vmatpush1.msra.mxu0 0.0
    %1258 = vmatprep.subr.mxu0 0.0
    %1259 = vmatpush1.msra.mxu0 0.0
    %1260 = vmatprep.mubr.f32.mxu0 0.0
    %1261 = vmatmul.mubr.f32.gmra.mrb[0].mxu0 %v1191
    %v1262 = vpop.f32.mrb[0].mxu0
    %v1263 = vadd.f32 %v1182, %v1262
    %v1264 = vpop.f32.mrb[0].mxu0
    %1265 = vmatprep.mubr.f32.mxu0 0.0
    %1266 = vmatmul.mubr.f32.gmra.mrb[0].mxu0 %v1194
    %v1267 = vpop.f32.mrb[0].mxu0
    %v1268 = vadd.f32 %v1187, %v1267
    %v1269 = vpop.f32.mrb[0].mxu0
    %1270 = vdwg.mxu0
    %v1271 = vadd.f32 %v193, %v1263
    %v1272 = vadd.f32 %v194, %v1268
    %v1273 = vld [vmem:[%s10] sm:$0x1]
    %v1275 = vlaneseq
    %v1276 = vshrl.u32 %v1275, 7
    %v1277 = vsub.s32 0, %v1276
    %v1278 = vrot.slane %v1273, %v1277
    %v1280 = vadd.f32 %v1271, %v1278
    %v1281 = vadd.f32 %v1272, %v1278
    %v1282 = vld [vmem:[%s11] sm:$0x1]
    %v1283 = vld [vmem:[%s12] sm:$0x1]
    %v1284 = vsel %vm85, %v1280, 0.0
    %1285 = vadd.xlane.f32.xlu0 %v1284
    %v1286 = vpop.xlane.xlu0 %1285
    %v1287 = vsel %vm85, %v1281, 0.0
    %1288 = vadd.xlane.f32.xlu0 %v1287
    %v1289 = vpop.xlane.xlu0 %1288
    %v1290 = vmul.f32 %v1286, %v203
    %v1291 = vmul.f32 %v1289, %v203
    %v1292 = vsub.f32 %v1280, %v1290
    %v1293 = vsub.f32 %v1281, %v1291
    %v1294 = vmul.f32 %v1292, %v1292
    %v1295 = vmul.f32 %v1293, %v1293
    %v1296 = vsel %vm85, %v1294, 0.0
    %1297 = vadd.xlane.f32.xlu0 %v1296
    %v1298 = vpop.xlane.xlu0 %1297
    %v1299 = vsel %vm85, %v1295, 0.0
    %1300 = vadd.xlane.f32.xlu0 %v1299
    %v1301 = vpop.xlane.xlu0 %1300
    %v1302 = vmul.f32 %v1298, %v203
    %v1303 = vmul.f32 %v1301, %v203
    %v1304 = vadd.f32 %v1302, 1e-05
    %v1305 = vadd.f32 %v1303, 1e-05
    %v1306 = vrsqrt.pop %v1304
    %v1307 = vrsqrt.pop %v1305
    %v1308 = vmul.f32 %v1292, %v1306
    %v1309 = vmul.f32 %v1293, %v1307
    %v1311 = vlaneseq
    %v1312 = vshrl.u32 %v1311, 7
    %v1313 = vsub.s32 0, %v1312
    %v1314 = vrot.slane %v1282, %v1313
    %v1316 = vmul.f32 %v1308, %v1314
    %v1317 = vmul.f32 %v1309, %v1314
    %v1319 = vlaneseq
    %v1320 = vshrl.u32 %v1319, 7
    %v1321 = vsub.s32 0, %v1320
    %v1322 = vrot.slane %v1283, %v1321
    %v1324 = vadd.f32 %v1316, %v1322
    %v1325 = vadd.f32 %v1317, %v1322
    %v1326 = vld [vmem:[%s13] sm:$0xff]
    %v1327 = vld [vmem:[%s13 + $0x8] sm:$0xff]
    %v1328 = vld [vmem:[%s13 + $0x10] sm:$0xff]
    %v1329 = vld [vmem:[%s13 + $0x18] sm:$0xff]
    %v1330 = vld [vmem:[%s14] sm:$0x1]
    %v1332 = vlaneseq
    %v1333 = vshrl.u32 %v1332, 7
    %v1334 = vsub.s32 0, %v1333
    %v1335 = vrot.slane %v1330, %v1334
    %v1338 = vsel %vm85, %v1324, 0
    %v1341 = vsel %vm85, %v1325, 0
    %1343 = vmatprep.subr.mxu0 0.0
    %1344 = vmatpush1.msra.mxu0 %v1326
    %1345 = vmatprep.subr.mxu0 0.0
    %1346 = vmatpush1.msra.mxu0 %v1327
    %1347 = vmatprep.subr.mxu0 0.0
    %1348 = vmatpush1.msra.mxu0 %v1328
    %1349 = vmatprep.subr.mxu0 0.0
    %1350 = vmatpush1.msra.mxu0 %v1329
    %1351 = vmatprep.subr.mxu0 0.0
    %1352 = vmatpush1.msra.mxu0 0.0
    %1353 = vmatprep.subr.mxu0 0.0
    %1354 = vmatpush1.msra.mxu0 0.0
    %1355 = vmatprep.subr.mxu0 0.0
    %1356 = vmatpush1.msra.mxu0 0.0
    %1357 = vmatprep.subr.mxu0 0.0
    %1358 = vmatpush1.msra.mxu0 0.0
    %1359 = vmatprep.subr.mxu0 0.0
    %1360 = vmatpush1.msra.mxu0 0.0
    %1361 = vmatprep.subr.mxu0 0.0
    %1362 = vmatpush1.msra.mxu0 0.0
    %1363 = vmatprep.subr.mxu0 0.0
    %1364 = vmatpush1.msra.mxu0 0.0
    %1365 = vmatprep.subr.mxu0 0.0
    %1366 = vmatpush1.msra.mxu0 0.0
    %1367 = vmatprep.subr.mxu0 0.0
    %1368 = vmatpush1.msra.mxu0 0.0
    %1369 = vmatprep.subr.mxu0 0.0
    %1370 = vmatpush1.msra.mxu0 0.0
    %1371 = vmatprep.subr.mxu0 0.0
    %1372 = vmatpush1.msra.mxu0 0.0
    %1373 = vmatprep.subr.mxu0 0.0
    %1374 = vmatpush1.msra.mxu0 0.0
    %1375 = vmatprep.subr.mxu0 0.0
    %1376 = vmatpush1.msra.mxu0 0.0
    %1377 = vmatprep.subr.mxu0 0.0
    %1378 = vmatpush1.msra.mxu0 0.0
    %1379 = vmatprep.subr.mxu0 0.0
    %1380 = vmatpush1.msra.mxu0 0.0
    %1381 = vmatprep.subr.mxu0 0.0
    %1382 = vmatpush1.msra.mxu0 0.0
    %1383 = vmatprep.subr.mxu0 0.0
    %1384 = vmatpush1.msra.mxu0 0.0
    %1385 = vmatprep.subr.mxu0 0.0
    %1386 = vmatpush1.msra.mxu0 0.0
    %1387 = vmatprep.subr.mxu0 0.0
    %1388 = vmatpush1.msra.mxu0 0.0
    %1389 = vmatprep.subr.mxu0 0.0
    %1390 = vmatpush1.msra.mxu0 0.0
    %1391 = vmatprep.subr.mxu0 0.0
    %1392 = vmatpush1.msra.mxu0 0.0
    %1393 = vmatprep.subr.mxu0 0.0
    %1394 = vmatpush1.msra.mxu0 0.0
    %1395 = vmatprep.subr.mxu0 0.0
    %1396 = vmatpush1.msra.mxu0 0.0
    %1397 = vmatprep.subr.mxu0 0.0
    %1398 = vmatpush1.msra.mxu0 0.0
    %1399 = vmatprep.subr.mxu0 0.0
    %1400 = vmatpush1.msra.mxu0 0.0
    %1401 = vmatprep.subr.mxu0 0.0
    %1402 = vmatpush1.msra.mxu0 0.0
    %1403 = vmatprep.subr.mxu0 0.0
    %1404 = vmatpush1.msra.mxu0 0.0
    %1405 = vmatprep.subr.mxu0 0.0
    %1406 = vmatpush1.msra.mxu0 0.0
    %1407 = vmatprep.mubr.f32.mxu0 0.0
    %1408 = vmatmul.mubr.f32.gmra.mrb[0].mxu0 %v1338
    %v1409 = vpop.f32.mrb[0].mxu0
    %v1410 = vadd.f32 %v1335, %v1409
    %v1411 = vpop.f32.mrb[0].mxu0
    %1412 = vmatprep.mubr.f32.mxu0 0.0
    %1413 = vmatmul.mubr.f32.gmra.mrb[0].mxu0 %v1341
    %v1414 = vpop.f32.mrb[0].mxu0
    %v1415 = vadd.f32 %v1335, %v1414
    %v1416 = vpop.f32.mrb[0].mxu0
    %1417 = vdwg.mxu0
    %v1418 = vmul.f32 %v1410, 0.5
    %v1419 = vmul.f32 %v1415, 0.5
    %v1420 = vmul.f32 %v1410, 0.70710677
    %v1421 = vmul.f32 %v1415, 0.70710677
    %vm1422 = vcmp.ge.f32.partialorder %v1420, 0.0
    %vm1423 = vcmp.ge.f32.partialorder %v1421, 0.0
    %v1424 = vsel %vm1422, 1.0, -1.0
    %v1425 = vsel %vm1423, 1.0, -1.0
    %v1426 = vand.u32 2147483647, %v1420
    %v1427 = vand.u32 2147483647, %v1421
    %v1428 = vmul.f32 %v1426, 0.3275911
    %v1429 = vmul.f32 %v1427, 0.3275911
    %v1430 = vadd.f32 %v1428, 1.0
    %v1431 = vadd.f32 %v1429, 1.0
    %v1432 = vrcp.pop %v1430
    %v1433 = vmul.f32 1.0, %v1432
    %v1434 = vrcp.pop %v1431
    %v1435 = vmul.f32 1.0, %v1434
    %v1436 = vmul.f32 %v1433, 1.0614054
    %v1437 = vmul.f32 %v1435, 1.0614054
    %v1438 = vadd.f32 %v1436, -1.4531521
    %v1439 = vadd.f32 %v1437, -1.4531521
    %v1440 = vmul.f32 %v1438, %v1433
    %v1441 = vmul.f32 %v1439, %v1435
    %v1442 = vadd.f32 %v1440, 1.4214138
    %v1443 = vadd.f32 %v1441, 1.4214138
    %v1444 = vmul.f32 %v1442, %v1433
    %v1445 = vmul.f32 %v1443, %v1435
    %v1446 = vadd.f32 %v1444, -0.28449672
    %v1447 = vadd.f32 %v1445, -0.28449672
    %v1448 = vmul.f32 %v1446, %v1433
    %v1449 = vmul.f32 %v1447, %v1435
    %v1450 = vadd.f32 %v1448, 0.2548296
    %v1451 = vadd.f32 %v1449, 0.2548296
    %v1452 = vmul.f32 %v1450, %v1433
    %v1453 = vmul.f32 %v1451, %v1435
    %v1454 = vsub.f32 0.0, %v1426
    %v1455 = vsub.f32 0.0, %v1427
    %v1456 = vmul.f32 %v1454, %v1426
    %v1457 = vmul.f32 %v1455, %v1427
    %v1458 = vmul.f32 %v1456, 1.442695
    %v1459 = vpow.pop %v1458
    %v1460 = vmul.f32 %v1457, 1.442695
    %v1461 = vpow.pop %v1460
    %v1462 = vmul.f32 %v1452, %v1459
    %v1463 = vmul.f32 %v1453, %v1461
    %v1464 = vsub.f32 1.0, %v1462
    %v1465 = vsub.f32 1.0, %v1463
    %v1466 = vmul.f32 %v1424, %v1464
    %v1467 = vmul.f32 %v1425, %v1465
    %v1468 = vadd.f32 %v1466, 1.0
    %v1469 = vadd.f32 %v1467, 1.0
    %v1470 = vmul.f32 %v1418, %v1468
    %v1471 = vmul.f32 %v1419, %v1469
    %v1472 = vld [vmem:[%s15] sm:$0xff]
    %v1473 = vld [vmem:[%s15 + $0x8] sm:$0xff]
    %v1474 = vld [vmem:[%s15 + $0x10] sm:$0xff]
    %v1475 = vld [vmem:[%s15 + $0x18] sm:$0xff]
    %v1476 = vld [vmem:[%s15 + $0x20] sm:$0xff]
    %v1477 = vld [vmem:[%s15 + $0x28] sm:$0xff]
    %v1478 = vld [vmem:[%s15 + $0x30] sm:$0xff]
    %v1479 = vld [vmem:[%s15 + $0x38] sm:$0xff]
    %v1480 = vld [vmem:[%s16] sm:$0x1]
    %v1482 = vlaneseq
    %v1483 = vshrl.u32 %v1482, 7
    %v1484 = vsub.s32 0, %v1483
    %v1485 = vrot.slane %v1480, %v1484
    %vm1487 = vcmask 523264
    %v1489 = vsel %vm1487, %v1470, 0
    %v1492 = vsel %vm1487, %v1471, 0
    %1494 = vmatprep.subr.mxu0 0.0
    %1495 = vmatpush1.msra.mxu0 %v1472
    %1496 = vmatprep.subr.mxu0 0.0
    %1497 = vmatpush1.msra.mxu0 %v1473
    %1498 = vmatprep.subr.mxu0 0.0
    %1499 = vmatpush1.msra.mxu0 %v1474
    %1500 = vmatprep.subr.mxu0 0.0
    %1501 = vmatpush1.msra.mxu0 %v1475
    %1502 = vmatprep.subr.mxu0 0.0
    %1503 = vmatpush1.msra.mxu0 %v1476
    %1504 = vmatprep.subr.mxu0 0.0
    %1505 = vmatpush1.msra.mxu0 %v1477
    %1506 = vmatprep.subr.mxu0 0.0
    %1507 = vmatpush1.msra.mxu0 %v1478
    %1508 = vmatprep.subr.mxu0 0.0
    %1509 = vmatpush1.msra.mxu0 %v1479
    %1510 = vmatprep.subr.mxu0 0.0
    %1511 = vmatpush1.msra.mxu0 0.0
    %1512 = vmatprep.subr.mxu0 0.0
    %1513 = vmatpush1.msra.mxu0 0.0
    %1514 = vmatprep.subr.mxu0 0.0
    %1515 = vmatpush1.msra.mxu0 0.0
    %1516 = vmatprep.subr.mxu0 0.0
    %1517 = vmatpush1.msra.mxu0 0.0
    %1518 = vmatprep.subr.mxu0 0.0
    %1519 = vmatpush1.msra.mxu0 0.0
    %1520 = vmatprep.subr.mxu0 0.0
    %1521 = vmatpush1.msra.mxu0 0.0
    %1522 = vmatprep.subr.mxu0 0.0
    %1523 = vmatpush1.msra.mxu0 0.0
    %1524 = vmatprep.subr.mxu0 0.0
    %1525 = vmatpush1.msra.mxu0 0.0
    %1526 = vmatprep.subr.mxu0 0.0
    %1527 = vmatpush1.msra.mxu0 0.0
    %1528 = vmatprep.subr.mxu0 0.0
    %1529 = vmatpush1.msra.mxu0 0.0
    %1530 = vmatprep.subr.mxu0 0.0
    %1531 = vmatpush1.msra.mxu0 0.0
    %1532 = vmatprep.subr.mxu0 0.0
    %1533 = vmatpush1.msra.mxu0 0.0
    %1534 = vmatprep.subr.mxu0 0.0
    %1535 = vmatpush1.msra.mxu0 0.0
    %1536 = vmatprep.subr.mxu0 0.0
    %1537 = vmatpush1.msra.mxu0 0.0
    %1538 = vmatprep.subr.mxu0 0.0
    %1539 = vmatpush1.msra.mxu0 0.0
    %1540 = vmatprep.subr.mxu0 0.0
    %1541 = vmatpush1.msra.mxu0 0.0
    %1542 = vmatprep.subr.mxu0 0.0
    %1543 = vmatpush1.msra.mxu0 0.0
    %1544 = vmatprep.subr.mxu0 0.0
    %1545 = vmatpush1.msra.mxu0 0.0
    %1546 = vmatprep.subr.mxu0 0.0
    %1547 = vmatpush1.msra.mxu0 0.0
    %1548 = vmatprep.subr.mxu0 0.0
    %1549 = vmatpush1.msra.mxu0 0.0
    %1550 = vmatprep.subr.mxu0 0.0
    %1551 = vmatpush1.msra.mxu0 0.0
    %1552 = vmatprep.subr.mxu0 0.0
    %1553 = vmatpush1.msra.mxu0 0.0
    %1554 = vmatprep.subr.mxu0 0.0
    %1555 = vmatpush1.msra.mxu0 0.0
    %1556 = vmatprep.subr.mxu0 0.0
    %1557 = vmatpush1.msra.mxu0 0.0
    %1558 = vmatprep.mubr.f32.mxu0 0.0
    %1559 = vmatmul.mubr.f32.gmra.mrb[0].mxu0 %v1489
    %v1560 = vpop.f32.mrb[0].mxu0
    %v1561 = vadd.f32 %v1485, %v1560
    %v1562 = vpop.f32.mrb[0].mxu0
    %1563 = vmatprep.mubr.f32.mxu0 0.0
    %1564 = vmatmul.mubr.f32.gmra.mrb[0].mxu0 %v1492
    %v1565 = vpop.f32.mrb[0].mxu0
    %v1566 = vadd.f32 %v1485, %v1565
    %v1567 = vpop.f32.mrb[0].mxu0
    %1568 = vdwg.mxu0
    %v1569 = vadd.f32 %v1280, %v1561
    %v1570 = vadd.f32 %v1281, %v1566
    %1571 = vst.msk [vmem:[#allocation2] sm:$0xff] %vm85, %v1569
    %1572 = vst.msk [vmem:[#allocation2 + $0x8] sm:$0xff] %vm85, %v1570
    %v1573 = vld [vmem:[#allocation2] sm:$0xff]
    %v1574 = vld [vmem:[#allocation2 + $0x8] sm:$0xff]
    %s1575 = scalar_lea.vmem %s4, 1
    %v1576 = vld [vmem:[%s1575] sm:$0x1]
    %s1577 = scalar_lea.vmem %s5, 1
    %v1578 = vld [vmem:[%s1577] sm:$0x1]
    %v1579 = vsel %vm85, %v1573, 0.0
    %1580 = vadd.xlane.f32.xlu0 %v1579
    %v1581 = vpop.xlane.xlu0 %1580
    %v1582 = vsel %vm85, %v1574, 0.0
    %1583 = vadd.xlane.f32.xlu0 %v1582
    %v1584 = vpop.xlane.xlu0 %1583
    %v1585 = vmul.f32 %v1581, %v203
    %v1586 = vmul.f32 %v1584, %v203
    %v1587 = vsub.f32 %v1573, %v1585
    %v1588 = vsub.f32 %v1574, %v1586
    %v1589 = vmul.f32 %v1587, %v1587
    %v1590 = vmul.f32 %v1588, %v1588
    %v1591 = vsel %vm85, %v1589, 0.0
    %1592 = vadd.xlane.f32.xlu0 %v1591
    %v1593 = vpop.xlane.xlu0 %1592
    %v1594 = vsel %vm85, %v1590, 0.0
    %1595 = vadd.xlane.f32.xlu0 %v1594
    %v1596 = vpop.xlane.xlu0 %1595
    %v1597 = vmul.f32 %v1593, %v203
    %v1598 = vmul.f32 %v1596, %v203
    %v1599 = vadd.f32 %v1597, 1e-05
    %v1600 = vadd.f32 %v1598, 1e-05
    %v1601 = vrsqrt.pop %v1599
    %v1602 = vrsqrt.pop %v1600
    %v1603 = vmul.f32 %v1587, %v1601
    %v1604 = vmul.f32 %v1588, %v1602
    %v1606 = vlaneseq
    %v1607 = vshrl.u32 %v1606, 7
    %v1608 = vsub.s32 0, %v1607
    %v1609 = vrot.slane %v1576, %v1608
    %v1611 = vmul.f32 %v1603, %v1609
    %v1612 = vmul.f32 %v1604, %v1609
    %v1614 = vlaneseq
    %v1615 = vshrl.u32 %v1614, 7
    %v1616 = vsub.s32 0, %v1615
    %v1617 = vrot.slane %v1578, %v1616
    %v1619 = vadd.f32 %v1611, %v1617
    %v1620 = vadd.f32 %v1612, %v1617
    %s1621 = scalar_lea.vmem %s6, 64
    %v1622 = vld [vmem:[%s1621] sm:$0xff]
    %v1623 = vld [vmem:[%s1621 + $0x8] sm:$0xff]
    %v1624 = vld [vmem:[%s1621 + $0x10] sm:$0xff]
    %v1625 = vld [vmem:[%s1621 + $0x18] sm:$0xff]
    %v1627 = vsel %vm85, %v1619, 0
    %v1630 = vsel %vm85, %v1620, 0
    %1632 = vmatprep.subr.mxu0 0.0
    %1633 = vmatpush1.msra.mxu0 %v1622
    %1634 = vmatprep.subr.mxu0 0.0
    %1635 = vmatpush1.msra.mxu0 %v1623
    %1636 = vmatprep.subr.mxu0 0.0
    %1637 = vmatpush1.msra.mxu0 %v1624
    %1638 = vmatprep.subr.mxu0 0.0
    %1639 = vmatpush1.msra.mxu0 %v1625
    %1640 = vmatprep.subr.mxu0 0.0
    %1641 = vmatpush1.msra.mxu0 0.0
    %1642 = vmatprep.subr.mxu0 0.0
    %1643 = vmatpush1.msra.mxu0 0.0
    %1644 = vmatprep.subr.mxu0 0.0
    %1645 = vmatpush1.msra.mxu0 0.0
    %1646 = vmatprep.subr.mxu0 0.0
    %1647 = vmatpush1.msra.mxu0 0.0
    %1648 = vmatprep.subr.mxu0 0.0
    %1649 = vmatpush1.msra.mxu0 0.0
    %1650 = vmatprep.subr.mxu0 0.0
    %1651 = vmatpush1.msra.mxu0 0.0
    %1652 = vmatprep.subr.mxu0 0.0
    %1653 = vmatpush1.msra.mxu0 0.0
    %1654 = vmatprep.subr.mxu0 0.0
    %1655 = vmatpush1.msra.mxu0 0.0
    %1656 = vmatprep.subr.mxu0 0.0
    %1657 = vmatpush1.msra.mxu0 0.0
    %1658 = vmatprep.subr.mxu0 0.0
    %1659 = vmatpush1.msra.mxu0 0.0
    %1660 = vmatprep.subr.mxu0 0.0
    %1661 = vmatpush1.msra.mxu0 0.0
    %1662 = vmatprep.subr.mxu0 0.0
    %1663 = vmatpush1.msra.mxu0 0.0
    %1664 = vmatprep.subr.mxu0 0.0
    %1665 = vmatpush1.msra.mxu0 0.0
    %1666 = vmatprep.subr.mxu0 0.0
    %1667 = vmatpush1.msra.mxu0 0.0
    %1668 = vmatprep.subr.mxu0 0.0
    %1669 = vmatpush1.msra.mxu0 0.0
    %1670 = vmatprep.subr.mxu0 0.0
    %1671 = vmatpush1.msra.mxu0 0.0
    %1672 = vmatprep.subr.mxu0 0.0
    %1673 = vmatpush1.msra.mxu0 0.0
    %1674 = vmatprep.subr.mxu0 0.0
    %1675 = vmatpush1.msra.mxu0 0.0
    %1676 = vmatprep.subr.mxu0 0.0
    %1677 = vmatpush1.msra.mxu0 0.0
    %1678 = vmatprep.subr.mxu0 0.0
    %1679 = vmatpush1.msra.mxu0 0.0
    %1680 = vmatprep.subr.mxu0 0.0
    %1681 = vmatpush1.msra.mxu0 0.0
    %1682 = vmatprep.subr.mxu0 0.0
    %1683 = vmatpush1.msra.mxu0 0.0
    %1684 = vmatprep.subr.mxu0 0.0
    %1685 = vmatpush1.msra.mxu0 0.0
    %1686 = vmatprep.subr.mxu0 0.0
    %1687 = vmatpush1.msra.mxu0 0.0
    %1688 = vmatprep.subr.mxu0 0.0
    %1689 = vmatpush1.msra.mxu0 0.0
    %1690 = vmatprep.subr.mxu0 0.0
    %1691 = vmatpush1.msra.mxu0 0.0
    %1692 = vmatprep.subr.mxu0 0.0
    %1693 = vmatpush1.msra.mxu0 0.0
    %1694 = vmatprep.subr.mxu0 0.0
    %1695 = vmatpush1.msra.mxu0 0.0
    %1696 = vmatprep.mubr.f32.mxu0 0.0
    %1697 = vmatmul.mubr.f32.gmra.mrb[0].mxu0 %v1627
    %v1698 = vpop.f32.mrb[0].mxu0
    %v1699 = vadd.f32 0.0, %v1698
    %v1700 = vpop.f32.mrb[0].mxu0
    %1701 = vmatprep.mubr.f32.mxu0 0.0
    %1702 = vmatmul.mubr.f32.gmra.mrb[0].mxu0 %v1630
    %v1703 = vpop.f32.mrb[0].mxu0
    %v1704 = vadd.f32 0.0, %v1703
    %v1705 = vpop.f32.mrb[0].mxu0
    %1706 = vdwg.mxu0
    %s1707 = scalar_lea.vmem %s7, 64
    %v1708 = vld [vmem:[%s1707] sm:$0xff]
    %v1709 = vld [vmem:[%s1707 + $0x8] sm:$0xff]
    %v1710 = vld [vmem:[%s1707 + $0x10] sm:$0xff]
    %v1711 = vld [vmem:[%s1707 + $0x18] sm:$0xff]
    %1712 = vmatprep.subr.mxu0 0.0
    %1713 = vmatpush1.msra.mxu0 %v1708
    %1714 = vmatprep.subr.mxu0 0.0
    %1715 = vmatpush1.msra.mxu0 %v1709
    %1716 = vmatprep.subr.mxu0 0.0
    %1717 = vmatpush1.msra.mxu0 %v1710
    %1718 = vmatprep.subr.mxu0 0.0
    %1719 = vmatpush1.msra.mxu0 %v1711
    %1720 = vmatprep.subr.mxu0 0.0
    %1721 = vmatpush1.msra.mxu0 0.0
    %1722 = vmatprep.subr.mxu0 0.0
    %1723 = vmatpush1.msra.mxu0 0.0
    %1724 = vmatprep.subr.mxu0 0.0
    %1725 = vmatpush1.msra.mxu0 0.0
    %1726 = vmatprep.subr.mxu0 0.0
    %1727 = vmatpush1.msra.mxu0 0.0
    %1728 = vmatprep.subr.mxu0 0.0
    %1729 = vmatpush1.msra.mxu0 0.0
    %1730 = vmatprep.subr.mxu0 0.0
    %1731 = vmatpush1.msra.mxu0 0.0
    %1732 = vmatprep.subr.mxu0 0.0
    %1733 = vmatpush1.msra.mxu0 0.0
    %1734 = vmatprep.subr.mxu0 0.0
    %1735 = vmatpush1.msra.mxu0 0.0
    %1736 = vmatprep.subr.mxu0 0.0
    %1737 = vmatpush1.msra.mxu0 0.0
    %1738 = vmatprep.subr.mxu0 0.0
    %1739 = vmatpush1.msra.mxu0 0.0
    %1740 = vmatprep.subr.mxu0 0.0
    %1741 = vmatpush1.msra.mxu0 0.0
    %1742 = vmatprep.subr.mxu0 0.0
    %1743 = vmatpush1.msra.mxu0 0.0
    %1744 = vmatprep.subr.mxu0 0.0
    %1745 = vmatpush1.msra.mxu0 0.0
    %1746 = vmatprep.subr.mxu0 0.0
    %1747 = vmatpush1.msra.mxu0 0.0
    %1748 = vmatprep.subr.mxu0 0.0
    %1749 = vmatpush1.msra.mxu0 0.0
    %1750 = vmatprep.subr.mxu0 0.0
    %1751 = vmatpush1.msra.mxu0 0.0
    %1752 = vmatprep.subr.mxu0 0.0
    %1753 = vmatpush1.msra.mxu0 0.0
    %1754 = vmatprep.subr.mxu0 0.0
    %1755 = vmatpush1.msra.mxu0 0.0
    %1756 = vmatprep.subr.mxu0 0.0
    %1757 = vmatpush1.msra.mxu0 0.0
    %1758 = vmatprep.subr.mxu0 0.0
    %1759 = vmatpush1.msra.mxu0 0.0
    %1760 = vmatprep.subr.mxu0 0.0
    %1761 = vmatpush1.msra.mxu0 0.0
    %1762 = vmatprep.subr.mxu0 0.0
    %1763 = vmatpush1.msra.mxu0 0.0
    %1764 = vmatprep.subr.mxu0 0.0
    %1765 = vmatpush1.msra.mxu0 0.0
    %1766 = vmatprep.subr.mxu0 0.0
    %1767 = vmatpush1.msra.mxu0 0.0
    %1768 = vmatprep.subr.mxu0 0.0
    %1769 = vmatpush1.msra.mxu0 0.0
    %1770 = vmatprep.subr.mxu0 0.0
    %1771 = vmatpush1.msra.mxu0 0.0
    %1772 = vmatprep.subr.mxu0 0.0
    %1773 = vmatpush1.msra.mxu0 0.0
    %1774 = vmatprep.subr.mxu0 0.0
    %1775 = vmatpush1.msra.mxu0 0.0
    %1776 = vmatprep.mubr.f32.mxu0 0.0
    %1777 = vmatmul.mubr.f32.gmra.mrb[0].mxu0 %v1627
    %v1778 = vpop.f32.mrb[0].mxu0
    %v1779 = vadd.f32 0.0, %v1778
    %v1780 = vpop.f32.mrb[0].mxu0
    %1781 = vmatprep.mubr.f32.mxu0 0.0
    %1782 = vmatmul.mubr.f32.gmra.mrb[0].mxu0 %v1630
    %v1783 = vpop.f32.mrb[0].mxu0
    %v1784 = vadd.f32 0.0, %v1783
    %v1785 = vpop.f32.mrb[0].mxu0
    %1786 = vdwg.mxu0
    %s1787 = scalar_lea.vmem %s8, 64
    %v1788 = vld [vmem:[%s1787] sm:$0xff]
    %v1789 = vld [vmem:[%s1787 + $0x8] sm:$0xff]
    %v1790 = vld [vmem:[%s1787 + $0x10] sm:$0xff]
    %v1791 = vld [vmem:[%s1787 + $0x18] sm:$0xff]
    %1792 = vmatprep.subr.mxu0 0.0
    %1793 = vmatpush1.msra.mxu0 %v1788
    %1794 = vmatprep.subr.mxu0 0.0
    %1795 = vmatpush1.msra.mxu0 %v1789
    %1796 = vmatprep.subr.mxu0 0.0
    %1797 = vmatpush1.msra.mxu0 %v1790
    %1798 = vmatprep.subr.mxu0 0.0
    %1799 = vmatpush1.msra.mxu0 %v1791
    %1800 = vmatprep.subr.mxu0 0.0
    %1801 = vmatpush1.msra.mxu0 0.0
    %1802 = vmatprep.subr.mxu0 0.0
    %1803 = vmatpush1.msra.mxu0 0.0
    %1804 = vmatprep.subr.mxu0 0.0
    %1805 = vmatpush1.msra.mxu0 0.0
    %1806 = vmatprep.subr.mxu0 0.0
    %1807 = vmatpush1.msra.mxu0 0.0
    %1808 = vmatprep.subr.mxu0 0.0
    %1809 = vmatpush1.msra.mxu0 0.0
    %1810 = vmatprep.subr.mxu0 0.0
    %1811 = vmatpush1.msra.mxu0 0.0
    %1812 = vmatprep.subr.mxu0 0.0
    %1813 = vmatpush1.msra.mxu0 0.0
    %1814 = vmatprep.subr.mxu0 0.0
    %1815 = vmatpush1.msra.mxu0 0.0
    %1816 = vmatprep.subr.mxu0 0.0
    %1817 = vmatpush1.msra.mxu0 0.0
    %1818 = vmatprep.subr.mxu0 0.0
    %1819 = vmatpush1.msra.mxu0 0.0
    %1820 = vmatprep.subr.mxu0 0.0
    %1821 = vmatpush1.msra.mxu0 0.0
    %1822 = vmatprep.subr.mxu0 0.0
    %1823 = vmatpush1.msra.mxu0 0.0
    %1824 = vmatprep.subr.mxu0 0.0
    %1825 = vmatpush1.msra.mxu0 0.0
    %1826 = vmatprep.subr.mxu0 0.0
    %1827 = vmatpush1.msra.mxu0 0.0
    %1828 = vmatprep.subr.mxu0 0.0
    %1829 = vmatpush1.msra.mxu0 0.0
    %1830 = vmatprep.subr.mxu0 0.0
    %1831 = vmatpush1.msra.mxu0 0.0
    %1832 = vmatprep.subr.mxu0 0.0
    %1833 = vmatpush1.msra.mxu0 0.0
    %1834 = vmatprep.subr.mxu0 0.0
    %1835 = vmatpush1.msra.mxu0 0.0
    %1836 = vmatprep.subr.mxu0 0.0
    %1837 = vmatpush1.msra.mxu0 0.0
    %1838 = vmatprep.subr.mxu0 0.0
    %1839 = vmatpush1.msra.mxu0 0.0
    %1840 = vmatprep.subr.mxu0 0.0
    %1841 = vmatpush1.msra.mxu0 0.0
    %1842 = vmatprep.subr.mxu0 0.0
    %1843 = vmatpush1.msra.mxu0 0.0
    %1844 = vmatprep.subr.mxu0 0.0
    %1845 = vmatpush1.msra.mxu0 0.0
    %1846 = vmatprep.subr.mxu0 0.0
    %1847 = vmatpush1.msra.mxu0 0.0
    %1848 = vmatprep.subr.mxu0 0.0
    %1849 = vmatpush1.msra.mxu0 0.0
    %1850 = vmatprep.subr.mxu0 0.0
    %1851 = vmatpush1.msra.mxu0 0.0
    %1852 = vmatprep.subr.mxu0 0.0
    %1853 = vmatpush1.msra.mxu0 0.0
    %1854 = vmatprep.subr.mxu0 0.0
    %1855 = vmatpush1.msra.mxu0 0.0
    %1856 = vmatprep.mubr.f32.mxu0 0.0
    %1857 = vmatmul.mubr.f32.gmra.mrb[0].mxu0 %v1627
    %v1858 = vpop.f32.mrb[0].mxu0
    %v1859 = vadd.f32 0.0, %v1858
    %v1860 = vpop.f32.mrb[0].mxu0
    %1861 = vmatprep.mubr.f32.mxu0 0.0
    %1862 = vmatmul.mubr.f32.gmra.mrb[0].mxu0 %v1630
    %v1863 = vpop.f32.mrb[0].mxu0
    %v1864 = vadd.f32 0.0, %v1863
    %v1865 = vpop.f32.mrb[0].mxu0
    %1866 = vdwg.mxu0
    %v1868 = vsel %vm483, %v1699, 0
    %v1871 = vsel %vm483, %v1704, 0
    %v1874 = vsel %vm483, %v1779, 0
    %v1877 = vsel %vm483, %v1784, 0
    %1879 = vmatprep.subr.mxu0 0.0
    %1880 = vmatpush1.xpose.msra.mxu0 %v1874
    %1881 = vmatprep.subr.mxu0 0.0
    %1882 = vmatpush1.xpose.msra.mxu0 %v1877
    %1883 = vmatprep.subr.mxu0 0.0
    %1884 = vmatpush1.xpose.msra.mxu0 0.0
    %1885 = vmatprep.subr.mxu0 0.0
    %1886 = vmatpush1.xpose.msra.mxu0 0.0
    %1887 = vmatprep.subr.mxu0 0.0
    %1888 = vmatpush1.xpose.msra.mxu0 0.0
    %1889 = vmatprep.subr.mxu0 0.0
    %1890 = vmatpush1.xpose.msra.mxu0 0.0
    %1891 = vmatprep.subr.mxu0 0.0
    %1892 = vmatpush1.xpose.msra.mxu0 0.0
    %1893 = vmatprep.subr.mxu0 0.0
    %1894 = vmatpush1.xpose.msra.mxu0 0.0
    %1895 = vmatprep.subr.mxu0 0.0
    %1896 = vmatpush1.xpose.msra.mxu0 0.0
    %1897 = vmatprep.subr.mxu0 0.0
    %1898 = vmatpush1.xpose.msra.mxu0 0.0
    %1899 = vmatprep.subr.mxu0 0.0
    %1900 = vmatpush1.xpose.msra.mxu0 0.0
    %1901 = vmatprep.subr.mxu0 0.0
    %1902 = vmatpush1.xpose.msra.mxu0 0.0
    %1903 = vmatprep.subr.mxu0 0.0
    %1904 = vmatpush1.xpose.msra.mxu0 0.0
    %1905 = vmatprep.subr.mxu0 0.0
    %1906 = vmatpush1.xpose.msra.mxu0 0.0
    %1907 = vmatprep.subr.mxu0 0.0
    %1908 = vmatpush1.xpose.msra.mxu0 0.0
    %1909 = vmatprep.subr.mxu0 0.0
    %1910 = vmatpush1.xpose.msra.mxu0 0.0
    %1911 = vmatprep.subr.mxu0 0.0
    %1912 = vmatpush1.xpose.msra.mxu0 0.0
    %1913 = vmatprep.subr.mxu0 0.0
    %1914 = vmatpush1.xpose.msra.mxu0 0.0
    %1915 = vmatprep.subr.mxu0 0.0
    %1916 = vmatpush1.xpose.msra.mxu0 0.0
    %1917 = vmatprep.subr.mxu0 0.0
    %1918 = vmatpush1.xpose.msra.mxu0 0.0
    %1919 = vmatprep.subr.mxu0 0.0
    %1920 = vmatpush1.xpose.msra.mxu0 0.0
    %1921 = vmatprep.subr.mxu0 0.0
    %1922 = vmatpush1.xpose.msra.mxu0 0.0
    %1923 = vmatprep.subr.mxu0 0.0
    %1924 = vmatpush1.xpose.msra.mxu0 0.0
    %1925 = vmatprep.subr.mxu0 0.0
    %1926 = vmatpush1.xpose.msra.mxu0 0.0
    %1927 = vmatprep.subr.mxu0 0.0
    %1928 = vmatpush1.xpose.msra.mxu0 0.0
    %1929 = vmatprep.subr.mxu0 0.0
    %1930 = vmatpush1.xpose.msra.mxu0 0.0
    %1931 = vmatprep.subr.mxu0 0.0
    %1932 = vmatpush1.xpose.msra.mxu0 0.0
    %1933 = vmatprep.subr.mxu0 0.0
    %1934 = vmatpush1.xpose.msra.mxu0 0.0
    %1935 = vmatprep.subr.mxu0 0.0
    %1936 = vmatpush1.xpose.msra.mxu0 0.0
    %1937 = vmatprep.subr.mxu0 0.0
    %1938 = vmatpush1.xpose.msra.mxu0 0.0
    %1939 = vmatprep.subr.mxu0 0.0
    %1940 = vmatpush1.xpose.msra.mxu0 0.0
    %1941 = vmatprep.subr.mxu0 0.0
    %1942 = vmatpush1.xpose.msra.mxu0 0.0
    %1943 = vmatprep.mubr.f32.mxu0 0.0
    %1944 = vmatmul.mubr.f32.gmra.mrb[0].mxu0 %v1868
    %v1945 = vpop.f32.mrb[0].mxu0
    %v1946 = vadd.f32 %v192, %v1945
    %v1947 = vpop.f32.mrb[0].mxu0
    %1948 = vmatprep.mubr.f32.mxu0 0.0
    %1949 = vmatmul.mubr.f32.gmra.mrb[0].mxu0 %v1871
    %v1950 = vpop.f32.mrb[0].mxu0
    %v1951 = vadd.f32 %v192, %v1950
    %v1952 = vpop.f32.mrb[0].mxu0
    %1953 = vdwg.mxu0
    %v1954 = vsel %vm483, %v1946, -inf
    %1955 = vmax.xlane.f32.xlu0 %v1954
    %v1956 = vpop.xlane.xlu0 %1955
    %v1957 = vsel %vm483, %v1951, -inf
    %1958 = vmax.xlane.f32.xlu0 %v1957
    %v1959 = vpop.xlane.xlu0 %1958
    %v1960 = vsub.f32 %v1946, %v1956
    %v1961 = vsub.f32 %v1951, %v1959
    %v1962 = vmul.f32 %v1960, 1.442695
    %v1963 = vpow.pop %v1962
    %v1964 = vmul.f32 %v1961, 1.442695
    %v1965 = vpow.pop %v1964
    %v1966 = vsel %vm483, %v1963, 0.0
    %1967 = vadd.xlane.f32.xlu0 %v1966
    %v1968 = vpop.xlane.xlu0 %1967
    %v1969 = vsel %vm483, %v1965, 0.0
    %1970 = vadd.xlane.f32.xlu0 %v1969
    %v1971 = vpop.xlane.xlu0 %1970
    %v1972 = vrcp.pop %v1968
    %v1973 = vmul.f32 %v1963, %v1972
    %v1974 = vrcp.pop %v1971
    %v1975 = vmul.f32 %v1965, %v1974
    %v1977 = vsel %vm483, %v1973, 0
    %v1980 = vsel %vm483, %v1975, 0
    %1982 = vmatprep.subr.mxu0 0.0
    %1983 = vmatpush1.msra.mxu0 %v1859
    %1984 = vmatprep.subr.mxu0 0.0
    %1985 = vmatpush1.msra.mxu0 %v1864
    %1986 = vmatprep.subr.mxu0 0.0
    %1987 = vmatpush1.msra.mxu0 0.0
    %1988 = vmatprep.subr.mxu0 0.0
    %1989 = vmatpush1.msra.mxu0 0.0
    %1990 = vmatprep.subr.mxu0 0.0
    %1991 = vmatpush1.msra.mxu0 0.0
    %1992 = vmatprep.subr.mxu0 0.0
    %1993 = vmatpush1.msra.mxu0 0.0
    %1994 = vmatprep.subr.mxu0 0.0
    %1995 = vmatpush1.msra.mxu0 0.0
    %1996 = vmatprep.subr.mxu0 0.0
    %1997 = vmatpush1.msra.mxu0 0.0
    %1998 = vmatprep.subr.mxu0 0.0
    %1999 = vmatpush1.msra.mxu0 0.0
    %2000 = vmatprep.subr.mxu0 0.0
    %2001 = vmatpush1.msra.mxu0 0.0
    %2002 = vmatprep.subr.mxu0 0.0
    %2003 = vmatpush1.msra.mxu0 0.0
    %2004 = vmatprep.subr.mxu0 0.0
    %2005 = vmatpush1.msra.mxu0 0.0
    %2006 = vmatprep.subr.mxu0 0.0
    %2007 = vmatpush1.msra.mxu0 0.0
    %2008 = vmatprep.subr.mxu0 0.0
    %2009 = vmatpush1.msra.mxu0 0.0
    %2010 = vmatprep.subr.mxu0 0.0
    %2011 = vmatpush1.msra.mxu0 0.0
    %2012 = vmatprep.subr.mxu0 0.0
    %2013 = vmatpush1.msra.mxu0 0.0
    %2014 = vmatprep.subr.mxu0 0.0
    %2015 = vmatpush1.msra.mxu0 0.0
    %2016 = vmatprep.subr.mxu0 0.0
    %2017 = vmatpush1.msra.mxu0 0.0
    %2018 = vmatprep.subr.mxu0 0.0
    %2019 = vmatpush1.msra.mxu0 0.0
    %2020 = vmatprep.subr.mxu0 0.0
    %2021 = vmatpush1.msra.mxu0 0.0
    %2022 = vmatprep.subr.mxu0 0.0
    %2023 = vmatpush1.msra.mxu0 0.0
    %2024 = vmatprep.subr.mxu0 0.0
    %2025 = vmatpush1.msra.mxu0 0.0
    %2026 = vmatprep.subr.mxu0 0.0
    %2027 = vmatpush1.msra.mxu0 0.0
    %2028 = vmatprep.subr.mxu0 0.0
    %2029 = vmatpush1.msra.mxu0 0.0
    %2030 = vmatprep.subr.mxu0 0.0
    %2031 = vmatpush1.msra.mxu0 0.0
    %2032 = vmatprep.subr.mxu0 0.0
    %2033 = vmatpush1.msra.mxu0 0.0
    %2034 = vmatprep.subr.mxu0 0.0
    %2035 = vmatpush1.msra.mxu0 0.0
    %2036 = vmatprep.subr.mxu0 0.0
    %2037 = vmatpush1.msra.mxu0 0.0
    %2038 = vmatprep.subr.mxu0 0.0
    %2039 = vmatpush1.msra.mxu0 0.0
    %2040 = vmatprep.subr.mxu0 0.0
    %2041 = vmatpush1.msra.mxu0 0.0
    %2042 = vmatprep.subr.mxu0 0.0
    %2043 = vmatpush1.msra.mxu0 0.0
    %2044 = vmatprep.subr.mxu0 0.0
    %2045 = vmatpush1.msra.mxu0 0.0
    %2046 = vmatprep.mubr.f32.mxu0 0.0
    %2047 = vmatmul.mubr.f32.gmra.mrb[0].mxu0 %v1977
    %v2048 = vpop.f32.mrb[0].mxu0
    %v2049 = vadd.f32 0.0, %v2048
    %v2050 = vpop.f32.mrb[0].mxu0
    %2051 = vmatprep.mubr.f32.mxu0 0.0
    %2052 = vmatmul.mubr.f32.gmra.mrb[0].mxu0 %v1980
    %v2053 = vpop.f32.mrb[0].mxu0
    %v2054 = vadd.f32 0.0, %v2053
    %v2055 = vpop.f32.mrb[0].mxu0
    %2056 = vdwg.mxu0
    %s2057 = scalar_lea.vmem %s9, 32
    %v2058 = vld [vmem:[%s2057] sm:$0xff]
    %v2059 = vld [vmem:[%s2057 + $0x8] sm:$0xff]
    %s2060 = scalar_lea.vmem %s6, 96
    %v2061 = vld [vmem:[%s2060] sm:$0xff]
    %v2062 = vld [vmem:[%s2060 + $0x8] sm:$0xff]
    %v2063 = vld [vmem:[%s2060 + $0x10] sm:$0xff]
    %v2064 = vld [vmem:[%s2060 + $0x18] sm:$0xff]
    %2065 = vmatprep.subr.mxu0 0.0
    %2066 = vmatpush1.msra.mxu0 %v2061
    %2067 = vmatprep.subr.mxu0 0.0
    %2068 = vmatpush1.msra.mxu0 %v2062
    %2069 = vmatprep.subr.mxu0 0.0
    %2070 = vmatpush1.msra.mxu0 %v2063
    %2071 = vmatprep.subr.mxu0 0.0
    %2072 = vmatpush1.msra.mxu0 %v2064
    %2073 = vmatprep.subr.mxu0 0.0
    %2074 = vmatpush1.msra.mxu0 0.0
    %2075 = vmatprep.subr.mxu0 0.0
    %2076 = vmatpush1.msra.mxu0 0.0
    %2077 = vmatprep.subr.mxu0 0.0
    %2078 = vmatpush1.msra.mxu0 0.0
    %2079 = vmatprep.subr.mxu0 0.0
    %2080 = vmatpush1.msra.mxu0 0.0
    %2081 = vmatprep.subr.mxu0 0.0
    %2082 = vmatpush1.msra.mxu0 0.0
    %2083 = vmatprep.subr.mxu0 0.0
    %2084 = vmatpush1.msra.mxu0 0.0
    %2085 = vmatprep.subr.mxu0 0.0
    %2086 = vmatpush1.msra.mxu0 0.0
    %2087 = vmatprep.subr.mxu0 0.0
    %2088 = vmatpush1.msra.mxu0 0.0
    %2089 = vmatprep.subr.mxu0 0.0
    %2090 = vmatpush1.msra.mxu0 0.0
    %2091 = vmatprep.subr.mxu0 0.0
    %2092 = vmatpush1.msra.mxu0 0.0
    %2093 = vmatprep.subr.mxu0 0.0
    %2094 = vmatpush1.msra.mxu0 0.0
    %2095 = vmatprep.subr.mxu0 0.0
    %2096 = vmatpush1.msra.mxu0 0.0
    %2097 = vmatprep.subr.mxu0 0.0
    %2098 = vmatpush1.msra.mxu0 0.0
    %2099 = vmatprep.subr.mxu0 0.0
    %2100 = vmatpush1.msra.mxu0 0.0
    %2101 = vmatprep.subr.mxu0 0.0
    %2102 = vmatpush1.msra.mxu0 0.0
    %2103 = vmatprep.subr.mxu0 0.0
    %2104 = vmatpush1.msra.mxu0 0.0
    %2105 = vmatprep.subr.mxu0 0.0
    %2106 = vmatpush1.msra.mxu0 0.0
    %2107 = vmatprep.subr.mxu0 0.0
    %2108 = vmatpush1.msra.mxu0 0.0
    %2109 = vmatprep.subr.mxu0 0.0
    %2110 = vmatpush1.msra.mxu0 0.0
    %2111 = vmatprep.subr.mxu0 0.0
    %2112 = vmatpush1.msra.mxu0 0.0
    %2113 = vmatprep.subr.mxu0 0.0
    %2114 = vmatpush1.msra.mxu0 0.0
    %2115 = vmatprep.subr.mxu0 0.0
    %2116 = vmatpush1.msra.mxu0 0.0
    %2117 = vmatprep.subr.mxu0 0.0
    %2118 = vmatpush1.msra.mxu0 0.0
    %2119 = vmatprep.subr.mxu0 0.0
    %2120 = vmatpush1.msra.mxu0 0.0
    %2121 = vmatprep.subr.mxu0 0.0
    %2122 = vmatpush1.msra.mxu0 0.0
    %2123 = vmatprep.subr.mxu0 0.0
    %2124 = vmatpush1.msra.mxu0 0.0
    %2125 = vmatprep.subr.mxu0 0.0
    %2126 = vmatpush1.msra.mxu0 0.0
    %2127 = vmatprep.subr.mxu0 0.0
    %2128 = vmatpush1.msra.mxu0 0.0
    %2129 = vmatprep.mubr.f32.mxu0 0.0
    %2130 = vmatmul.mubr.f32.gmra.mrb[0].mxu0 %v1627
    %v2131 = vpop.f32.mrb[0].mxu0
    %v2132 = vadd.f32 0.0, %v2131
    %v2133 = vpop.f32.mrb[0].mxu0
    %2134 = vmatprep.mubr.f32.mxu0 0.0
    %2135 = vmatmul.mubr.f32.gmra.mrb[0].mxu0 %v1630
    %v2136 = vpop.f32.mrb[0].mxu0
    %v2137 = vadd.f32 0.0, %v2136
    %v2138 = vpop.f32.mrb[0].mxu0
    %2139 = vdwg.mxu0
    %s2140 = scalar_lea.vmem %s7, 96
    %v2141 = vld [vmem:[%s2140] sm:$0xff]
    %v2142 = vld [vmem:[%s2140 + $0x8] sm:$0xff]
    %v2143 = vld [vmem:[%s2140 + $0x10] sm:$0xff]
    %v2144 = vld [vmem:[%s2140 + $0x18] sm:$0xff]
    %2145 = vmatprep.subr.mxu0 0.0
    %2146 = vmatpush1.msra.mxu0 %v2141
    %2147 = vmatprep.subr.mxu0 0.0
    %2148 = vmatpush1.msra.mxu0 %v2142
    %2149 = vmatprep.subr.mxu0 0.0
    %2150 = vmatpush1.msra.mxu0 %v2143
    %2151 = vmatprep.subr.mxu0 0.0
    %2152 = vmatpush1.msra.mxu0 %v2144
    %2153 = vmatprep.subr.mxu0 0.0
    %2154 = vmatpush1.msra.mxu0 0.0
    %2155 = vmatprep.subr.mxu0 0.0
    %2156 = vmatpush1.msra.mxu0 0.0
    %2157 = vmatprep.subr.mxu0 0.0
    %2158 = vmatpush1.msra.mxu0 0.0
    %2159 = vmatprep.subr.mxu0 0.0
    %2160 = vmatpush1.msra.mxu0 0.0
    %2161 = vmatprep.subr.mxu0 0.0
    %2162 = vmatpush1.msra.mxu0 0.0
    %2163 = vmatprep.subr.mxu0 0.0
    %2164 = vmatpush1.msra.mxu0 0.0
    %2165 = vmatprep.subr.mxu0 0.0
    %2166 = vmatpush1.msra.mxu0 0.0
    %2167 = vmatprep.subr.mxu0 0.0
    %2168 = vmatpush1.msra.mxu0 0.0
    %2169 = vmatprep.subr.mxu0 0.0
    %2170 = vmatpush1.msra.mxu0 0.0
    %2171 = vmatprep.subr.mxu0 0.0
    %2172 = vmatpush1.msra.mxu0 0.0
    %2173 = vmatprep.subr.mxu0 0.0
    %2174 = vmatpush1.msra.mxu0 0.0
    %2175 = vmatprep.subr.mxu0 0.0
    %2176 = vmatpush1.msra.mxu0 0.0
    %2177 = vmatprep.subr.mxu0 0.0
    %2178 = vmatpush1.msra.mxu0 0.0
    %2179 = vmatprep.subr.mxu0 0.0
    %2180 = vmatpush1.msra.mxu0 0.0
    %2181 = vmatprep.subr.mxu0 0.0
    %2182 = vmatpush1.msra.mxu0 0.0
    %2183 = vmatprep.subr.mxu0 0.0
    %2184 = vmatpush1.msra.mxu0 0.0
    %2185 = vmatprep.subr.mxu0 0.0
    %2186 = vmatpush1.msra.mxu0 0.0
    %2187 = vmatprep.subr.mxu0 0.0
    %2188 = vmatpush1.msra.mxu0 0.0
    %2189 = vmatprep.subr.mxu0 0.0
    %2190 = vmatpush1.msra.mxu0 0.0
    %2191 = vmatprep.subr.mxu0 0.0
    %2192 = vmatpush1.msra.mxu0 0.0
    %2193 = vmatprep.subr.mxu0 0.0
    %2194 = vmatpush1.msra.mxu0 0.0
    %2195 = vmatprep.subr.mxu0 0.0
    %2196 = vmatpush1.msra.mxu0 0.0
    %2197 = vmatprep.subr.mxu0 0.0
    %2198 = vmatpush1.msra.mxu0 0.0
    %2199 = vmatprep.subr.mxu0 0.0
    %2200 = vmatpush1.msra.mxu0 0.0
    %2201 = vmatprep.subr.mxu0 0.0
    %2202 = vmatpush1.msra.mxu0 0.0
    %2203 = vmatprep.subr.mxu0 0.0
    %2204 = vmatpush1.msra.mxu0 0.0
    %2205 = vmatprep.subr.mxu0 0.0
    %2206 = vmatpush1.msra.mxu0 0.0
    %2207 = vmatprep.subr.mxu0 0.0
    %2208 = vmatpush1.msra.mxu0 0.0
    %2209 = vmatprep.mubr.f32.mxu0 0.0
    %2210 = vmatmul.mubr.f32.gmra.mrb[0].mxu0 %v1627
    %v2211 = vpop.f32.mrb[0].mxu0
    %v2212 = vadd.f32 0.0, %v2211
    %v2213 = vpop.f32.mrb[0].mxu0
    %2214 = vmatprep.mubr.f32.mxu0 0.0
    %2215 = vmatmul.mubr.f32.gmra.mrb[0].mxu0 %v1630
    %v2216 = vpop.f32.mrb[0].mxu0
    %v2217 = vadd.f32 0.0, %v2216
    %v2218 = vpop.f32.mrb[0].mxu0
    %2219 = vdwg.mxu0
    %s2220 = scalar_lea.vmem %s8, 96
    %v2221 = vld [vmem:[%s2220] sm:$0xff]
    %v2222 = vld [vmem:[%s2220 + $0x8] sm:$0xff]
    %v2223 = vld [vmem:[%s2220 + $0x10] sm:$0xff]
    %v2224 = vld [vmem:[%s2220 + $0x18] sm:$0xff]
    %2225 = vmatprep.subr.mxu0 0.0
    %2226 = vmatpush1.msra.mxu0 %v2221
    %2227 = vmatprep.subr.mxu0 0.0
    %2228 = vmatpush1.msra.mxu0 %v2222
    %2229 = vmatprep.subr.mxu0 0.0
    %2230 = vmatpush1.msra.mxu0 %v2223
    %2231 = vmatprep.subr.mxu0 0.0
    %2232 = vmatpush1.msra.mxu0 %v2224
    %2233 = vmatprep.subr.mxu0 0.0
    %2234 = vmatpush1.msra.mxu0 0.0
    %2235 = vmatprep.subr.mxu0 0.0
    %2236 = vmatpush1.msra.mxu0 0.0
    %2237 = vmatprep.subr.mxu0 0.0
    %2238 = vmatpush1.msra.mxu0 0.0
    %2239 = vmatprep.subr.mxu0 0.0
    %2240 = vmatpush1.msra.mxu0 0.0
    %2241 = vmatprep.subr.mxu0 0.0
    %2242 = vmatpush1.msra.mxu0 0.0
    %2243 = vmatprep.subr.mxu0 0.0
    %2244 = vmatpush1.msra.mxu0 0.0
    %2245 = vmatprep.subr.mxu0 0.0
    %2246 = vmatpush1.msra.mxu0 0.0
    %2247 = vmatprep.subr.mxu0 0.0
    %2248 = vmatpush1.msra.mxu0 0.0
    %2249 = vmatprep.subr.mxu0 0.0
    %2250 = vmatpush1.msra.mxu0 0.0
    %2251 = vmatprep.subr.mxu0 0.0
    %2252 = vmatpush1.msra.mxu0 0.0
    %2253 = vmatprep.subr.mxu0 0.0
    %2254 = vmatpush1.msra.mxu0 0.0
    %2255 = vmatprep.subr.mxu0 0.0
    %2256 = vmatpush1.msra.mxu0 0.0
    %2257 = vmatprep.subr.mxu0 0.0
    %2258 = vmatpush1.msra.mxu0 0.0
    %2259 = vmatprep.subr.mxu0 0.0
    %2260 = vmatpush1.msra.mxu0 0.0
    %2261 = vmatprep.subr.mxu0 0.0
    %2262 = vmatpush1.msra.mxu0 0.0
    %2263 = vmatprep.subr.mxu0 0.0
    %2264 = vmatpush1.msra.mxu0 0.0
    %2265 = vmatprep.subr.mxu0 0.0
    %2266 = vmatpush1.msra.mxu0 0.0
    %2267 = vmatprep.subr.mxu0 0.0
    %2268 = vmatpush1.msra.mxu0 0.0
    %2269 = vmatprep.subr.mxu0 0.0
    %2270 = vmatpush1.msra.mxu0 0.0
    %2271 = vmatprep.subr.mxu0 0.0
    %2272 = vmatpush1.msra.mxu0 0.0
    %2273 = vmatprep.subr.mxu0 0.0
    %2274 = vmatpush1.msra.mxu0 0.0
    %2275 = vmatprep.subr.mxu0 0.0
    %2276 = vmatpush1.msra.mxu0 0.0
    %2277 = vmatprep.subr.mxu0 0.0
    %2278 = vmatpush1.msra.mxu0 0.0
    %2279 = vmatprep.subr.mxu0 0.0
    %2280 = vmatpush1.msra.mxu0 0.0
    %2281 = vmatprep.subr.mxu0 0.0
    %2282 = vmatpush1.msra.mxu0 0.0
    %2283 = vmatprep.subr.mxu0 0.0
    %2284 = vmatpush1.msra.mxu0 0.0
    %2285 = vmatprep.subr.mxu0 0.0
    %2286 = vmatpush1.msra.mxu0 0.0
    %2287 = vmatprep.subr.mxu0 0.0
    %2288 = vmatpush1.msra.mxu0 0.0
    %2289 = vmatprep.mubr.f32.mxu0 0.0
    %2290 = vmatmul.mubr.f32.gmra.mrb[0].mxu0 %v1627
    %v2291 = vpop.f32.mrb[0].mxu0
    %v2292 = vadd.f32 0.0, %v2291
    %v2293 = vpop.f32.mrb[0].mxu0
    %2294 = vmatprep.mubr.f32.mxu0 0.0
    %2295 = vmatmul.mubr.f32.gmra.mrb[0].mxu0 %v1630
    %v2296 = vpop.f32.mrb[0].mxu0
    %v2297 = vadd.f32 0.0, %v2296
    %v2298 = vpop.f32.mrb[0].mxu0
    %2299 = vdwg.mxu0
    %v2301 = vsel %vm483, %v2132, 0
    %v2304 = vsel %vm483, %v2137, 0
    %v2307 = vsel %vm483, %v2212, 0
    %v2310 = vsel %vm483, %v2217, 0
    %2312 = vmatprep.subr.mxu0 0.0
    %2313 = vmatpush1.xpose.msra.mxu0 %v2307
    %2314 = vmatprep.subr.mxu0 0.0
    %2315 = vmatpush1.xpose.msra.mxu0 %v2310
    %2316 = vmatprep.subr.mxu0 0.0
    %2317 = vmatpush1.xpose.msra.mxu0 0.0
    %2318 = vmatprep.subr.mxu0 0.0
    %2319 = vmatpush1.xpose.msra.mxu0 0.0
    %2320 = vmatprep.subr.mxu0 0.0
    %2321 = vmatpush1.xpose.msra.mxu0 0.0
    %2322 = vmatprep.subr.mxu0 0.0
    %2323 = vmatpush1.xpose.msra.mxu0 0.0
    %2324 = vmatprep.subr.mxu0 0.0
    %2325 = vmatpush1.xpose.msra.mxu0 0.0
    %2326 = vmatprep.subr.mxu0 0.0
    %2327 = vmatpush1.xpose.msra.mxu0 0.0
    %2328 = vmatprep.subr.mxu0 0.0
    %2329 = vmatpush1.xpose.msra.mxu0 0.0
    %2330 = vmatprep.subr.mxu0 0.0
    %2331 = vmatpush1.xpose.msra.mxu0 0.0
    %2332 = vmatprep.subr.mxu0 0.0
    %2333 = vmatpush1.xpose.msra.mxu0 0.0
    %2334 = vmatprep.subr.mxu0 0.0
    %2335 = vmatpush1.xpose.msra.mxu0 0.0
    %2336 = vmatprep.subr.mxu0 0.0
    %2337 = vmatpush1.xpose.msra.mxu0 0.0
    %2338 = vmatprep.subr.mxu0 0.0
    %2339 = vmatpush1.xpose.msra.mxu0 0.0
    %2340 = vmatprep.subr.mxu0 0.0
    %2341 = vmatpush1.xpose.msra.mxu0 0.0
    %2342 = vmatprep.subr.mxu0 0.0
    %2343 = vmatpush1.xpose.msra.mxu0 0.0
    %2344 = vmatprep.subr.mxu0 0.0
    %2345 = vmatpush1.xpose.msra.mxu0 0.0
    %2346 = vmatprep.subr.mxu0 0.0
    %2347 = vmatpush1.xpose.msra.mxu0 0.0
    %2348 = vmatprep.subr.mxu0 0.0
    %2349 = vmatpush1.xpose.msra.mxu0 0.0
    %2350 = vmatprep.subr.mxu0 0.0
    %2351 = vmatpush1.xpose.msra.mxu0 0.0
    %2352 = vmatprep.subr.mxu0 0.0
    %2353 = vmatpush1.xpose.msra.mxu0 0.0
    %2354 = vmatprep.subr.mxu0 0.0
    %2355 = vmatpush1.xpose.msra.mxu0 0.0
    %2356 = vmatprep.subr.mxu0 0.0
    %2357 = vmatpush1.xpose.msra.mxu0 0.0
    %2358 = vmatprep.subr.mxu0 0.0
    %2359 = vmatpush1.xpose.msra.mxu0 0.0
    %2360 = vmatprep.subr.mxu0 0.0
    %2361 = vmatpush1.xpose.msra.mxu0 0.0
    %2362 = vmatprep.subr.mxu0 0.0
    %2363 = vmatpush1.xpose.msra.mxu0 0.0
    %2364 = vmatprep.subr.mxu0 0.0
    %2365 = vmatpush1.xpose.msra.mxu0 0.0
    %2366 = vmatprep.subr.mxu0 0.0
    %2367 = vmatpush1.xpose.msra.mxu0 0.0
    %2368 = vmatprep.subr.mxu0 0.0
    %2369 = vmatpush1.xpose.msra.mxu0 0.0
    %2370 = vmatprep.subr.mxu0 0.0
    %2371 = vmatpush1.xpose.msra.mxu0 0.0
    %2372 = vmatprep.subr.mxu0 0.0
    %2373 = vmatpush1.xpose.msra.mxu0 0.0
    %2374 = vmatprep.subr.mxu0 0.0
    %2375 = vmatpush1.xpose.msra.mxu0 0.0
    %2376 = vmatprep.mubr.f32.mxu0 0.0
    %2377 = vmatmul.mubr.f32.gmra.mrb[0].mxu0 %v2301
    %v2378 = vpop.f32.mrb[0].mxu0
    %v2379 = vadd.f32 %v192, %v2378
    %v2380 = vpop.f32.mrb[0].mxu0
    %2381 = vmatprep.mubr.f32.mxu0 0.0
    %2382 = vmatmul.mubr.f32.gmra.mrb[0].mxu0 %v2304
    %v2383 = vpop.f32.mrb[0].mxu0
    %v2384 = vadd.f32 %v192, %v2383
    %v2385 = vpop.f32.mrb[0].mxu0
    %2386 = vdwg.mxu0
    %v2387 = vsel %vm483, %v2379, -inf
    %2388 = vmax.xlane.f32.xlu0 %v2387
    %v2389 = vpop.xlane.xlu0 %2388
    %v2390 = vsel %vm483, %v2384, -inf
    %2391 = vmax.xlane.f32.xlu0 %v2390
    %v2392 = vpop.xlane.xlu0 %2391
    %v2393 = vsub.f32 %v2379, %v2389
    %v2394 = vsub.f32 %v2384, %v2392
    %v2395 = vmul.f32 %v2393, 1.442695
    %v2396 = vpow.pop %v2395
    %v2397 = vmul.f32 %v2394, 1.442695
    %v2398 = vpow.pop %v2397
    %v2399 = vsel %vm483, %v2396, 0.0
    %2400 = vadd.xlane.f32.xlu0 %v2399
    %v2401 = vpop.xlane.xlu0 %2400
    %v2402 = vsel %vm483, %v2398, 0.0
    %2403 = vadd.xlane.f32.xlu0 %v2402
    %v2404 = vpop.xlane.xlu0 %2403
    %v2405 = vrcp.pop %v2401
    %v2406 = vmul.f32 %v2396, %v2405
    %v2407 = vrcp.pop %v2404
    %v2408 = vmul.f32 %v2398, %v2407
    %v2410 = vsel %vm483, %v2406, 0
    %v2413 = vsel %vm483, %v2408, 0
    %2415 = vmatprep.subr.mxu0 0.0
    %2416 = vmatpush1.msra.mxu0 %v2292
    %2417 = vmatprep.subr.mxu0 0.0
    %2418 = vmatpush1.msra.mxu0 %v2297
    %2419 = vmatprep.subr.mxu0 0.0
    %2420 = vmatpush1.msra.mxu0 0.0
    %2421 = vmatprep.subr.mxu0 0.0
    %2422 = vmatpush1.msra.mxu0 0.0
    %2423 = vmatprep.subr.mxu0 0.0
    %2424 = vmatpush1.msra.mxu0 0.0
    %2425 = vmatprep.subr.mxu0 0.0
    %2426 = vmatpush1.msra.mxu0 0.0
    %2427 = vmatprep.subr.mxu0 0.0
    %2428 = vmatpush1.msra.mxu0 0.0
    %2429 = vmatprep.subr.mxu0 0.0
    %2430 = vmatpush1.msra.mxu0 0.0
    %2431 = vmatprep.subr.mxu0 0.0
    %2432 = vmatpush1.msra.mxu0 0.0
    %2433 = vmatprep.subr.mxu0 0.0
    %2434 = vmatpush1.msra.mxu0 0.0
    %2435 = vmatprep.subr.mxu0 0.0
    %2436 = vmatpush1.msra.mxu0 0.0
    %2437 = vmatprep.subr.mxu0 0.0
    %2438 = vmatpush1.msra.mxu0 0.0
    %2439 = vmatprep.subr.mxu0 0.0
    %2440 = vmatpush1.msra.mxu0 0.0
    %2441 = vmatprep.subr.mxu0 0.0
    %2442 = vmatpush1.msra.mxu0 0.0
    %2443 = vmatprep.subr.mxu0 0.0
    %2444 = vmatpush1.msra.mxu0 0.0
    %2445 = vmatprep.subr.mxu0 0.0
    %2446 = vmatpush1.msra.mxu0 0.0
    %2447 = vmatprep.subr.mxu0 0.0
    %2448 = vmatpush1.msra.mxu0 0.0
    %2449 = vmatprep.subr.mxu0 0.0
    %2450 = vmatpush1.msra.mxu0 0.0
    %2451 = vmatprep.subr.mxu0 0.0
    %2452 = vmatpush1.msra.mxu0 0.0
    %2453 = vmatprep.subr.mxu0 0.0
    %2454 = vmatpush1.msra.mxu0 0.0
    %2455 = vmatprep.subr.mxu0 0.0
    %2456 = vmatpush1.msra.mxu0 0.0
    %2457 = vmatprep.subr.mxu0 0.0
    %2458 = vmatpush1.msra.mxu0 0.0
    %2459 = vmatprep.subr.mxu0 0.0
    %2460 = vmatpush1.msra.mxu0 0.0
    %2461 = vmatprep.subr.mxu0 0.0
    %2462 = vmatpush1.msra.mxu0 0.0
    %2463 = vmatprep.subr.mxu0 0.0
    %2464 = vmatpush1.msra.mxu0 0.0
    %2465 = vmatprep.subr.mxu0 0.0
    %2466 = vmatpush1.msra.mxu0 0.0
    %2467 = vmatprep.subr.mxu0 0.0
    %2468 = vmatpush1.msra.mxu0 0.0
    %2469 = vmatprep.subr.mxu0 0.0
    %2470 = vmatpush1.msra.mxu0 0.0
    %2471 = vmatprep.subr.mxu0 0.0
    %2472 = vmatpush1.msra.mxu0 0.0
    %2473 = vmatprep.subr.mxu0 0.0
    %2474 = vmatpush1.msra.mxu0 0.0
    %2475 = vmatprep.subr.mxu0 0.0
    %2476 = vmatpush1.msra.mxu0 0.0
    %2477 = vmatprep.subr.mxu0 0.0
    %2478 = vmatpush1.msra.mxu0 0.0
    %2479 = vmatprep.mubr.f32.mxu0 0.0
    %2480 = vmatmul.mubr.f32.gmra.mrb[0].mxu0 %v2410
    %v2481 = vpop.f32.mrb[0].mxu0
    %v2482 = vadd.f32 0.0, %v2481
    %v2483 = vpop.f32.mrb[0].mxu0
    %2484 = vmatprep.mubr.f32.mxu0 0.0
    %2485 = vmatmul.mubr.f32.gmra.mrb[0].mxu0 %v2413
    %v2486 = vpop.f32.mrb[0].mxu0
    %v2487 = vadd.f32 0.0, %v2486
    %v2488 = vpop.f32.mrb[0].mxu0
    %2489 = vdwg.mxu0
    %s2490 = scalar_lea.vmem %s9, 48
    %v2491 = vld [vmem:[%s2490] sm:$0xff]
    %v2492 = vld [vmem:[%s2490 + $0x8] sm:$0xff]
    %v2494 = vsel %vm483, %v2482, 0
    %v2497 = vsel %vm483, %v2487, 0
    %2499 = vmatprep.subr.mxu0 0.0
    %2500 = vmatpush1.msra.mxu0 %v2491
    %2501 = vmatprep.subr.mxu0 0.0
    %2502 = vmatpush1.msra.mxu0 %v2492
    %2503 = vmatprep.subr.mxu0 0.0
    %2504 = vmatpush1.msra.mxu0 0.0
    %2505 = vmatprep.subr.mxu0 0.0
    %2506 = vmatpush1.msra.mxu0 0.0
    %2507 = vmatprep.subr.mxu0 0.0
    %2508 = vmatpush1.msra.mxu0 0.0
    %2509 = vmatprep.subr.mxu0 0.0
    %2510 = vmatpush1.msra.mxu0 0.0
    %2511 = vmatprep.subr.mxu0 0.0
    %2512 = vmatpush1.msra.mxu0 0.0
    %2513 = vmatprep.subr.mxu0 0.0
    %2514 = vmatpush1.msra.mxu0 0.0
    %2515 = vmatprep.subr.mxu0 0.0
    %2516 = vmatpush1.msra.mxu0 0.0
    %2517 = vmatprep.subr.mxu0 0.0
    %2518 = vmatpush1.msra.mxu0 0.0
    %2519 = vmatprep.subr.mxu0 0.0
    %2520 = vmatpush1.msra.mxu0 0.0
    %2521 = vmatprep.subr.mxu0 0.0
    %2522 = vmatpush1.msra.mxu0 0.0
    %2523 = vmatprep.subr.mxu0 0.0
    %2524 = vmatpush1.msra.mxu0 0.0
    %2525 = vmatprep.subr.mxu0 0.0
    %2526 = vmatpush1.msra.mxu0 0.0
    %2527 = vmatprep.subr.mxu0 0.0
    %2528 = vmatpush1.msra.mxu0 0.0
    %2529 = vmatprep.subr.mxu0 0.0
    %2530 = vmatpush1.msra.mxu0 0.0
    %2531 = vmatprep.subr.mxu0 0.0
    %2532 = vmatpush1.msra.mxu0 0.0
    %2533 = vmatprep.subr.mxu0 0.0
    %2534 = vmatpush1.msra.mxu0 0.0
    %2535 = vmatprep.subr.mxu0 0.0
    %2536 = vmatpush1.msra.mxu0 0.0
    %2537 = vmatprep.subr.mxu0 0.0
    %2538 = vmatpush1.msra.mxu0 0.0
    %2539 = vmatprep.subr.mxu0 0.0
    %2540 = vmatpush1.msra.mxu0 0.0
    %2541 = vmatprep.subr.mxu0 0.0
    %2542 = vmatpush1.msra.mxu0 0.0
    %2543 = vmatprep.subr.mxu0 0.0
    %2544 = vmatpush1.msra.mxu0 0.0
    %2545 = vmatprep.subr.mxu0 0.0
    %2546 = vmatpush1.msra.mxu0 0.0
    %2547 = vmatprep.subr.mxu0 0.0
    %2548 = vmatpush1.msra.mxu0 0.0
    %2549 = vmatprep.subr.mxu0 0.0
    %2550 = vmatpush1.msra.mxu0 0.0
    %2551 = vmatprep.subr.mxu0 0.0
    %2552 = vmatpush1.msra.mxu0 0.0
    %2553 = vmatprep.subr.mxu0 0.0
    %2554 = vmatpush1.msra.mxu0 0.0
    %2555 = vmatprep.subr.mxu0 0.0
    %2556 = vmatpush1.msra.mxu0 0.0
    %2557 = vmatprep.subr.mxu0 0.0
    %2558 = vmatpush1.msra.mxu0 0.0
    %2559 = vmatprep.subr.mxu0 0.0
    %2560 = vmatpush1.msra.mxu0 0.0
    %2561 = vmatprep.subr.mxu0 0.0
    %2562 = vmatpush1.msra.mxu0 0.0
    %2563 = vmatprep.mubr.f32.mxu0 0.0
    %2564 = vmatmul.mubr.f32.gmra.mrb[0].mxu0 %v2494
    %v2565 = vpop.f32.mrb[0].mxu0
    %v2566 = vadd.f32 0.0, %v2565
    %v2567 = vpop.f32.mrb[0].mxu0
    %2568 = vmatprep.mubr.f32.mxu0 0.0
    %2569 = vmatmul.mubr.f32.gmra.mrb[0].mxu0 %v2497
    %v2570 = vpop.f32.mrb[0].mxu0
    %v2571 = vadd.f32 0.0, %v2570
    %v2572 = vpop.f32.mrb[0].mxu0
    %2573 = vdwg.mxu0
    %v2575 = vsel %vm483, %v2049, 0
    %v2578 = vsel %vm483, %v2054, 0
    %2580 = vmatprep.subr.mxu0 0.0
    %2581 = vmatpush1.msra.mxu0 %v2058
    %2582 = vmatprep.subr.mxu0 0.0
    %2583 = vmatpush1.msra.mxu0 %v2059
    %2584 = vmatprep.subr.mxu0 0.0
    %2585 = vmatpush1.msra.mxu0 0.0
    %2586 = vmatprep.subr.mxu0 0.0
    %2587 = vmatpush1.msra.mxu0 0.0
    %2588 = vmatprep.subr.mxu0 0.0
    %2589 = vmatpush1.msra.mxu0 0.0
    %2590 = vmatprep.subr.mxu0 0.0
    %2591 = vmatpush1.msra.mxu0 0.0
    %2592 = vmatprep.subr.mxu0 0.0
    %2593 = vmatpush1.msra.mxu0 0.0
    %2594 = vmatprep.subr.mxu0 0.0
    %2595 = vmatpush1.msra.mxu0 0.0
    %2596 = vmatprep.subr.mxu0 0.0
    %2597 = vmatpush1.msra.mxu0 0.0
    %2598 = vmatprep.subr.mxu0 0.0
    %2599 = vmatpush1.msra.mxu0 0.0
    %2600 = vmatprep.subr.mxu0 0.0
    %2601 = vmatpush1.msra.mxu0 0.0
    %2602 = vmatprep.subr.mxu0 0.0
    %2603 = vmatpush1.msra.mxu0 0.0
    %2604 = vmatprep.subr.mxu0 0.0
    %2605 = vmatpush1.msra.mxu0 0.0
    %2606 = vmatprep.subr.mxu0 0.0
    %2607 = vmatpush1.msra.mxu0 0.0
    %2608 = vmatprep.subr.mxu0 0.0
    %2609 = vmatpush1.msra.mxu0 0.0
    %2610 = vmatprep.subr.mxu0 0.0
    %2611 = vmatpush1.msra.mxu0 0.0
    %2612 = vmatprep.subr.mxu0 0.0
    %2613 = vmatpush1.msra.mxu0 0.0
    %2614 = vmatprep.subr.mxu0 0.0
    %2615 = vmatpush1.msra.mxu0 0.0
    %2616 = vmatprep.subr.mxu0 0.0
    %2617 = vmatpush1.msra.mxu0 0.0
    %2618 = vmatprep.subr.mxu0 0.0
    %2619 = vmatpush1.msra.mxu0 0.0
    %2620 = vmatprep.subr.mxu0 0.0
    %2621 = vmatpush1.msra.mxu0 0.0
    %2622 = vmatprep.subr.mxu0 0.0
    %2623 = vmatpush1.msra.mxu0 0.0
    %2624 = vmatprep.subr.mxu0 0.0
    %2625 = vmatpush1.msra.mxu0 0.0
    %2626 = vmatprep.subr.mxu0 0.0
    %2627 = vmatpush1.msra.mxu0 0.0
    %2628 = vmatprep.subr.mxu0 0.0
    %2629 = vmatpush1.msra.mxu0 0.0
    %2630 = vmatprep.subr.mxu0 0.0
    %2631 = vmatpush1.msra.mxu0 0.0
    %2632 = vmatprep.subr.mxu0 0.0
    %2633 = vmatpush1.msra.mxu0 0.0
    %2634 = vmatprep.subr.mxu0 0.0
    %2635 = vmatpush1.msra.mxu0 0.0
    %2636 = vmatprep.subr.mxu0 0.0
    %2637 = vmatpush1.msra.mxu0 0.0
    %2638 = vmatprep.subr.mxu0 0.0
    %2639 = vmatpush1.msra.mxu0 0.0
    %2640 = vmatprep.subr.mxu0 0.0
    %2641 = vmatpush1.msra.mxu0 0.0
    %2642 = vmatprep.subr.mxu0 0.0
    %2643 = vmatpush1.msra.mxu0 0.0
    %2644 = vmatprep.mubr.f32.mxu0 0.0
    %2645 = vmatmul.mubr.f32.gmra.mrb[0].mxu0 %v2575
    %v2646 = vpop.f32.mrb[0].mxu0
    %v2647 = vadd.f32 %v2566, %v2646
    %v2648 = vpop.f32.mrb[0].mxu0
    %2649 = vmatprep.mubr.f32.mxu0 0.0
    %2650 = vmatmul.mubr.f32.gmra.mrb[0].mxu0 %v2578
    %v2651 = vpop.f32.mrb[0].mxu0
    %v2652 = vadd.f32 %v2571, %v2651
    %v2653 = vpop.f32.mrb[0].mxu0
    %2654 = vdwg.mxu0
    %v2655 = vadd.f32 %v1573, %v2647
    %v2656 = vadd.f32 %v1574, %v2652
    %s2657 = scalar_lea.vmem %s10, 1
    %v2658 = vld [vmem:[%s2657] sm:$0x1]
    %v2660 = vlaneseq
    %v2661 = vshrl.u32 %v2660, 7
    %v2662 = vsub.s32 0, %v2661
    %v2663 = vrot.slane %v2658, %v2662
    %v2665 = vadd.f32 %v2655, %v2663
    %v2666 = vadd.f32 %v2656, %v2663
    %s2667 = scalar_lea.vmem %s11, 1
    %v2668 = vld [vmem:[%s2667] sm:$0x1]
    %s2669 = scalar_lea.vmem %s12, 1
    %v2670 = vld [vmem:[%s2669] sm:$0x1]
    %v2671 = vsel %vm85, %v2665, 0.0
    %2672 = vadd.xlane.f32.xlu0 %v2671
    %v2673 = vpop.xlane.xlu0 %2672
    %v2674 = vsel %vm85, %v2666, 0.0
    %2675 = vadd.xlane.f32.xlu0 %v2674
    %v2676 = vpop.xlane.xlu0 %2675
    %v2677 = vmul.f32 %v2673, %v203
    %v2678 = vmul.f32 %v2676, %v203
    %v2679 = vsub.f32 %v2665, %v2677
    %v2680 = vsub.f32 %v2666, %v2678
    %v2681 = vmul.f32 %v2679, %v2679
    %v2682 = vmul.f32 %v2680, %v2680
    %v2683 = vsel %vm85, %v2681, 0.0
    %2684 = vadd.xlane.f32.xlu0 %v2683
    %v2685 = vpop.xlane.xlu0 %2684
    %v2686 = vsel %vm85, %v2682, 0.0
    %2687 = vadd.xlane.f32.xlu0 %v2686
    %v2688 = vpop.xlane.xlu0 %2687
    %v2689 = vmul.f32 %v2685, %v203
    %v2690 = vmul.f32 %v2688, %v203
    %v2691 = vadd.f32 %v2689, 1e-05
    %v2692 = vadd.f32 %v2690, 1e-05
    %v2693 = vrsqrt.pop %v2691
    %v2694 = vrsqrt.pop %v2692
    %v2695 = vmul.f32 %v2679, %v2693
    %v2696 = vmul.f32 %v2680, %v2694
    %v2698 = vlaneseq
    %v2699 = vshrl.u32 %v2698, 7
    %v2700 = vsub.s32 0, %v2699
    %v2701 = vrot.slane %v2668, %v2700
    %v2703 = vmul.f32 %v2695, %v2701
    %v2704 = vmul.f32 %v2696, %v2701
    %v2706 = vlaneseq
    %v2707 = vshrl.u32 %v2706, 7
    %v2708 = vsub.s32 0, %v2707
    %v2709 = vrot.slane %v2670, %v2708
    %v2711 = vadd.f32 %v2703, %v2709
    %v2712 = vadd.f32 %v2704, %v2709
    %s2713 = scalar_lea.vmem %s13, 32
    %v2714 = vld [vmem:[%s2713] sm:$0xff]
    %v2715 = vld [vmem:[%s2713 + $0x8] sm:$0xff]
    %v2716 = vld [vmem:[%s2713 + $0x10] sm:$0xff]
    %v2717 = vld [vmem:[%s2713 + $0x18] sm:$0xff]
    %s2718 = scalar_lea.vmem %s14, 1
    %v2719 = vld [vmem:[%s2718] sm:$0x1]
    %v2721 = vlaneseq
    %v2722 = vshrl.u32 %v2721, 7
    %v2723 = vsub.s32 0, %v2722
    %v2724 = vrot.slane %v2719, %v2723
    %v2727 = vsel %vm85, %v2711, 0
    %v2730 = vsel %vm85, %v2712, 0
    %2732 = vmatprep.subr.mxu0 0.0
    %2733 = vmatpush1.msra.mxu0 %v2714
    %2734 = vmatprep.subr.mxu0 0.0
    %2735 = vmatpush1.msra.mxu0 %v2715
    %2736 = vmatprep.subr.mxu0 0.0
    %2737 = vmatpush1.msra.mxu0 %v2716
    %2738 = vmatprep.subr.mxu0 0.0
    %2739 = vmatpush1.msra.mxu0 %v2717
    %2740 = vmatprep.subr.mxu0 0.0
    %2741 = vmatpush1.msra.mxu0 0.0
    %2742 = vmatprep.subr.mxu0 0.0
    %2743 = vmatpush1.msra.mxu0 0.0
    %2744 = vmatprep.subr.mxu0 0.0
    %2745 = vmatpush1.msra.mxu0 0.0
    %2746 = vmatprep.subr.mxu0 0.0
    %2747 = vmatpush1.msra.mxu0 0.0
    %2748 = vmatprep.subr.mxu0 0.0
    %2749 = vmatpush1.msra.mxu0 0.0
    %2750 = vmatprep.subr.mxu0 0.0
    %2751 = vmatpush1.msra.mxu0 0.0
    %2752 = vmatprep.subr.mxu0 0.0
    %2753 = vmatpush1.msra.mxu0 0.0
    %2754 = vmatprep.subr.mxu0 0.0
    %2755 = vmatpush1.msra.mxu0 0.0
    %2756 = vmatprep.subr.mxu0 0.0
    %2757 = vmatpush1.msra.mxu0 0.0
    %2758 = vmatprep.subr.mxu0 0.0
    %2759 = vmatpush1.msra.mxu0 0.0
    %2760 = vmatprep.subr.mxu0 0.0
    %2761 = vmatpush1.msra.mxu0 0.0
    %2762 = vmatprep.subr.mxu0 0.0
    %2763 = vmatpush1.msra.mxu0 0.0
    %2764 = vmatprep.subr.mxu0 0.0
    %2765 = vmatpush1.msra.mxu0 0.0
    %2766 = vmatprep.subr.mxu0 0.0
    %2767 = vmatpush1.msra.mxu0 0.0
    %2768 = vmatprep.subr.mxu0 0.0
    %2769 = vmatpush1.msra.mxu0 0.0
    %2770 = vmatprep.subr.mxu0 0.0
    %2771 = vmatpush1.msra.mxu0 0.0
    %2772 = vmatprep.subr.mxu0 0.0
    %2773 = vmatpush1.msra.mxu0 0.0
    %2774 = vmatprep.subr.mxu0 0.0
    %2775 = vmatpush1.msra.mxu0 0.0
    %2776 = vmatprep.subr.mxu0 0.0
    %2777 = vmatpush1.msra.mxu0 0.0
    %2778 = vmatprep.subr.mxu0 0.0
    %2779 = vmatpush1.msra.mxu0 0.0
    %2780 = vmatprep.subr.mxu0 0.0
    %2781 = vmatpush1.msra.mxu0 0.0
    %2782 = vmatprep.subr.mxu0 0.0
    %2783 = vmatpush1.msra.mxu0 0.0
    %2784 = vmatprep.subr.mxu0 0.0
    %2785 = vmatpush1.msra.mxu0 0.0
    %2786 = vmatprep.subr.mxu0 0.0
    %2787 = vmatpush1.msra.mxu0 0.0
    %2788 = vmatprep.subr.mxu0 0.0
    %2789 = vmatpush1.msra.mxu0 0.0
    %2790 = vmatprep.subr.mxu0 0.0
    %2791 = vmatpush1.msra.mxu0 0.0
    %2792 = vmatprep.subr.mxu0 0.0
    %2793 = vmatpush1.msra.mxu0 0.0
    %2794 = vmatprep.subr.mxu0 0.0
    %2795 = vmatpush1.msra.mxu0 0.0
    %2796 = vmatprep.mubr.f32.mxu0 0.0
    %2797 = vmatmul.mubr.f32.gmra.mrb[0].mxu0 %v2727
    %v2798 = vpop.f32.mrb[0].mxu0
    %v2799 = vadd.f32 %v2724, %v2798
    %v2800 = vpop.f32.mrb[0].mxu0
    %2801 = vmatprep.mubr.f32.mxu0 0.0
    %2802 = vmatmul.mubr.f32.gmra.mrb[0].mxu0 %v2730
    %v2803 = vpop.f32.mrb[0].mxu0
    %v2804 = vadd.f32 %v2724, %v2803
    %v2805 = vpop.f32.mrb[0].mxu0
    %2806 = vdwg.mxu0
    %v2807 = vmul.f32 %v2799, 0.5
    %v2808 = vmul.f32 %v2804, 0.5
    %v2809 = vmul.f32 %v2799, 0.70710677
    %v2810 = vmul.f32 %v2804, 0.70710677
    %vm2811 = vcmp.ge.f32.partialorder %v2809, 0.0
    %vm2812 = vcmp.ge.f32.partialorder %v2810, 0.0
    %v2813 = vsel %vm2811, 1.0, -1.0
    %v2814 = vsel %vm2812, 1.0, -1.0
    %v2815 = vand.u32 2147483647, %v2809
    %v2816 = vand.u32 2147483647, %v2810
    %v2817 = vmul.f32 %v2815, 0.3275911
    %v2818 = vmul.f32 %v2816, 0.3275911
    %v2819 = vadd.f32 %v2817, 1.0
    %v2820 = vadd.f32 %v2818, 1.0
    %v2821 = vrcp.pop %v2819
    %v2822 = vmul.f32 1.0, %v2821
    %v2823 = vrcp.pop %v2820
    %v2824 = vmul.f32 1.0, %v2823
    %v2825 = vmul.f32 %v2822, 1.0614054
    %v2826 = vmul.f32 %v2824, 1.0614054
    %v2827 = vadd.f32 %v2825, -1.4531521
    %v2828 = vadd.f32 %v2826, -1.4531521
    %v2829 = vmul.f32 %v2827, %v2822
    %v2830 = vmul.f32 %v2828, %v2824
    %v2831 = vadd.f32 %v2829, 1.4214138
    %v2832 = vadd.f32 %v2830, 1.4214138
    %v2833 = vmul.f32 %v2831, %v2822
    %v2834 = vmul.f32 %v2832, %v2824
    %v2835 = vadd.f32 %v2833, -0.28449672
    %v2836 = vadd.f32 %v2834, -0.28449672
    %v2837 = vmul.f32 %v2835, %v2822
    %v2838 = vmul.f32 %v2836, %v2824
    %v2839 = vadd.f32 %v2837, 0.2548296
    %v2840 = vadd.f32 %v2838, 0.2548296
    %v2841 = vmul.f32 %v2839, %v2822
    %v2842 = vmul.f32 %v2840, %v2824
    %v2843 = vsub.f32 0.0, %v2815
    %v2844 = vsub.f32 0.0, %v2816
    %v2845 = vmul.f32 %v2843, %v2815
    %v2846 = vmul.f32 %v2844, %v2816
    %v2847 = vmul.f32 %v2845, 1.442695
    %v2848 = vpow.pop %v2847
    %v2849 = vmul.f32 %v2846, 1.442695
    %v2850 = vpow.pop %v2849
    %v2851 = vmul.f32 %v2841, %v2848
    %v2852 = vmul.f32 %v2842, %v2850
    %v2853 = vsub.f32 1.0, %v2851
    %v2854 = vsub.f32 1.0, %v2852
    %v2855 = vmul.f32 %v2813, %v2853
    %v2856 = vmul.f32 %v2814, %v2854
    %v2857 = vadd.f32 %v2855, 1.0
    %v2858 = vadd.f32 %v2856, 1.0
    %v2859 = vmul.f32 %v2807, %v2857
    %v2860 = vmul.f32 %v2808, %v2858
    %s2861 = scalar_lea.vmem %s15, 64
    %v2862 = vld [vmem:[%s2861] sm:$0xff]
    %v2863 = vld [vmem:[%s2861 + $0x8] sm:$0xff]
    %v2864 = vld [vmem:[%s2861 + $0x10] sm:$0xff]
    %v2865 = vld [vmem:[%s2861 + $0x18] sm:$0xff]
    %v2866 = vld [vmem:[%s2861 + $0x20] sm:$0xff]
    %v2867 = vld [vmem:[%s2861 + $0x28] sm:$0xff]
    %v2868 = vld [vmem:[%s2861 + $0x30] sm:$0xff]
    %v2869 = vld [vmem:[%s2861 + $0x38] sm:$0xff]
    %s2870 = scalar_lea.vmem %s16, 1
    %v2871 = vld [vmem:[%s2870] sm:$0x1]
    %v2873 = vlaneseq
    %v2874 = vshrl.u32 %v2873, 7
    %v2875 = vsub.s32 0, %v2874
    %v2876 = vrot.slane %v2871, %v2875
    %v2879 = vsel %vm1487, %v2859, 0
    %v2882 = vsel %vm1487, %v2860, 0
    %2884 = vmatprep.subr.mxu0 0.0
    %2885 = vmatpush1.msra.mxu0 %v2862
    %2886 = vmatprep.subr.mxu0 0.0
    %2887 = vmatpush1.msra.mxu0 %v2863
    %2888 = vmatprep.subr.mxu0 0.0
    %2889 = vmatpush1.msra.mxu0 %v2864
    %2890 = vmatprep.subr.mxu0 0.0
    %2891 = vmatpush1.msra.mxu0 %v2865
    %2892 = vmatprep.subr.mxu0 0.0
    %2893 = vmatpush1.msra.mxu0 %v2866
    %2894 = vmatprep.subr.mxu0 0.0
    %2895 = vmatpush1.msra.mxu0 %v2867
    %2896 = vmatprep.subr.mxu0 0.0
    %2897 = vmatpush1.msra.mxu0 %v2868
    %2898 = vmatprep.subr.mxu0 0.0
    %2899 = vmatpush1.msra.mxu0 %v2869
    %2900 = vmatprep.subr.mxu0 0.0
    %2901 = vmatpush1.msra.mxu0 0.0
    %2902 = vmatprep.subr.mxu0 0.0
    %2903 = vmatpush1.msra.mxu0 0.0
    %2904 = vmatprep.subr.mxu0 0.0
    %2905 = vmatpush1.msra.mxu0 0.0
    %2906 = vmatprep.subr.mxu0 0.0
    %2907 = vmatpush1.msra.mxu0 0.0
    %2908 = vmatprep.subr.mxu0 0.0
    %2909 = vmatpush1.msra.mxu0 0.0
    %2910 = vmatprep.subr.mxu0 0.0
    %2911 = vmatpush1.msra.mxu0 0.0
    %2912 = vmatprep.subr.mxu0 0.0
    %2913 = vmatpush1.msra.mxu0 0.0
    %2914 = vmatprep.subr.mxu0 0.0
    %2915 = vmatpush1.msra.mxu0 0.0
    %2916 = vmatprep.subr.mxu0 0.0
    %2917 = vmatpush1.msra.mxu0 0.0
    %2918 = vmatprep.subr.mxu0 0.0
    %2919 = vmatpush1.msra.mxu0 0.0
    %2920 = vmatprep.subr.mxu0 0.0
    %2921 = vmatpush1.msra.mxu0 0.0
    %2922 = vmatprep.subr.mxu0 0.0
    %2923 = vmatpush1.msra.mxu0 0.0
    %2924 = vmatprep.subr.mxu0 0.0
    %2925 = vmatpush1.msra.mxu0 0.0
    %2926 = vmatprep.subr.mxu0 0.0
    %2927 = vmatpush1.msra.mxu0 0.0
    %2928 = vmatprep.subr.mxu0 0.0
    %2929 = vmatpush1.msra.mxu0 0.0
    %2930 = vmatprep.subr.mxu0 0.0
    %2931 = vmatpush1.msra.mxu0 0.0
    %2932 = vmatprep.subr.mxu0 0.0
    %2933 = vmatpush1.msra.mxu0 0.0
    %2934 = vmatprep.subr.mxu0 0.0
    %2935 = vmatpush1.msra.mxu0 0.0
    %2936 = vmatprep.subr.mxu0 0.0
    %2937 = vmatpush1.msra.mxu0 0.0
    %2938 = vmatprep.subr.mxu0 0.0
    %2939 = vmatpush1.msra.mxu0 0.0
    %2940 = vmatprep.subr.mxu0 0.0
    %2941 = vmatpush1.msra.mxu0 0.0
    %2942 = vmatprep.subr.mxu0 0.0
    %2943 = vmatpush1.msra.mxu0 0.0
    %2944 = vmatprep.subr.mxu0 0.0
    %2945 = vmatpush1.msra.mxu0 0.0
    %2946 = vmatprep.subr.mxu0 0.0
    %2947 = vmatpush1.msra.mxu0 0.0
    %2948 = vmatprep.mubr.f32.mxu0 0.0
    %2949 = vmatmul.mubr.f32.gmra.mrb[0].mxu0 %v2879
    %v2950 = vpop.f32.mrb[0].mxu0
    %v2951 = vadd.f32 %v2876, %v2950
    %v2952 = vpop.f32.mrb[0].mxu0
    %2953 = vmatprep.mubr.f32.mxu0 0.0
    %2954 = vmatmul.mubr.f32.gmra.mrb[0].mxu0 %v2882
    %v2955 = vpop.f32.mrb[0].mxu0
    %v2956 = vadd.f32 %v2876, %v2955
    %v2957 = vpop.f32.mrb[0].mxu0
    %2958 = vdwg.mxu0
    %v2959 = vadd.f32 %v2665, %v2951
    %v2960 = vadd.f32 %v2666, %v2956
    %2961 = vst.msk [vmem:[#allocation2] sm:$0xff] %vm85, %v2959
    %2962 = vst.msk [vmem:[#allocation2 + $0x8] sm:$0xff] %vm85, %v2960
    %v2963 = vld [vmem:[#allocation2] sm:$0x1]
    %v2964 = vld [vmem:[%s17] sm:$0x1]
    %v2965 = vld [vmem:[%s18] sm:$0x1]
    %vm2966 = vcmask 253952
    %v2967 = vsel %vm2966, %v2963, 0.0
    %2968 = vadd.xlane.f32.xlu0 %v2967
    %v2969 = vpop.xlane.xlu0 %2968
    %v2970 = vmul.f32 %v2969, %v203
    %v2971 = vsub.f32 %v2963, %v2970
    %v2972 = vmul.f32 %v2971, %v2971
    %v2973 = vsel %vm2966, %v2972, 0.0
    %2974 = vadd.xlane.f32.xlu0 %v2973
    %v2975 = vpop.xlane.xlu0 %2974
    %v2976 = vmul.f32 %v2975, %v203
    %v2977 = vadd.f32 %v2976, 1e-05
    %v2978 = vrsqrt.pop %v2977
    %v2979 = vmul.f32 %v2971, %v2978
    %v2980 = vmul.f32 %v2979, %v2964
    %v2981 = vadd.f32 %v2980, %v2965
    %v2982 = vld [vmem:[%s19] sm:$0xff]
    %v2983 = vld [vmem:[%s19 + $0x8] sm:$0xff]
    %v2984 = vld [vmem:[%s19 + $0x10] sm:$0xff]
    %v2985 = vld [vmem:[%s19 + $0x18] sm:$0xff]
    %v2986 = vld [vmem:[%s20] sm:$0x1]
    %v2988 = vsel %vm85, %v2981, 0
    %2990 = vmatprep.subr.mxu0 0.0
    %2991 = vmatpush1.msra.mxu0 %v2982
    %2992 = vmatprep.subr.mxu0 0.0
    %2993 = vmatpush1.msra.mxu0 %v2983
    %2994 = vmatprep.subr.mxu0 0.0
    %2995 = vmatpush1.msra.mxu0 %v2984
    %2996 = vmatprep.subr.mxu0 0.0
    %2997 = vmatpush1.msra.mxu0 %v2985
    %2998 = vmatprep.subr.mxu0 0.0
    %2999 = vmatpush1.msra.mxu0 0.0
    %3000 = vmatprep.subr.mxu0 0.0
    %3001 = vmatpush1.msra.mxu0 0.0
    %3002 = vmatprep.subr.mxu0 0.0
    %3003 = vmatpush1.msra.mxu0 0.0
    %3004 = vmatprep.subr.mxu0 0.0
    %3005 = vmatpush1.msra.mxu0 0.0
    %3006 = vmatprep.subr.mxu0 0.0
    %3007 = vmatpush1.msra.mxu0 0.0
    %3008 = vmatprep.subr.mxu0 0.0
    %3009 = vmatpush1.msra.mxu0 0.0
    %3010 = vmatprep.subr.mxu0 0.0
    %3011 = vmatpush1.msra.mxu0 0.0
    %3012 = vmatprep.subr.mxu0 0.0
    %3013 = vmatpush1.msra.mxu0 0.0
    %3014 = vmatprep.subr.mxu0 0.0
    %3015 = vmatpush1.msra.mxu0 0.0
    %3016 = vmatprep.subr.mxu0 0.0
    %3017 = vmatpush1.msra.mxu0 0.0
    %3018 = vmatprep.subr.mxu0 0.0
    %3019 = vmatpush1.msra.mxu0 0.0
    %3020 = vmatprep.subr.mxu0 0.0
    %3021 = vmatpush1.msra.mxu0 0.0
    %3022 = vmatprep.subr.mxu0 0.0
    %3023 = vmatpush1.msra.mxu0 0.0
    %3024 = vmatprep.subr.mxu0 0.0
    %3025 = vmatpush1.msra.mxu0 0.0
    %3026 = vmatprep.subr.mxu0 0.0
    %3027 = vmatpush1.msra.mxu0 0.0
    %3028 = vmatprep.subr.mxu0 0.0
    %3029 = vmatpush1.msra.mxu0 0.0
    %3030 = vmatprep.subr.mxu0 0.0
    %3031 = vmatpush1.msra.mxu0 0.0
    %3032 = vmatprep.subr.mxu0 0.0
    %3033 = vmatpush1.msra.mxu0 0.0
    %3034 = vmatprep.subr.mxu0 0.0
    %3035 = vmatpush1.msra.mxu0 0.0
    %3036 = vmatprep.subr.mxu0 0.0
    %3037 = vmatpush1.msra.mxu0 0.0
    %3038 = vmatprep.subr.mxu0 0.0
    %3039 = vmatpush1.msra.mxu0 0.0
    %3040 = vmatprep.subr.mxu0 0.0
    %3041 = vmatpush1.msra.mxu0 0.0
    %3042 = vmatprep.subr.mxu0 0.0
    %3043 = vmatpush1.msra.mxu0 0.0
    %3044 = vmatprep.subr.mxu0 0.0
    %3045 = vmatpush1.msra.mxu0 0.0
    %3046 = vmatprep.subr.mxu0 0.0
    %3047 = vmatpush1.msra.mxu0 0.0
    %3048 = vmatprep.subr.mxu0 0.0
    %3049 = vmatpush1.msra.mxu0 0.0
    %3050 = vmatprep.subr.mxu0 0.0
    %3051 = vmatpush1.msra.mxu0 0.0
    %3052 = vmatprep.subr.mxu0 0.0
    %3053 = vmatpush1.msra.mxu0 0.0
    %3054 = vmatprep.mubr.f32.mxu0 0.0
    %3055 = vmatmul.mubr.f32.gmra.mrb[0].mxu0 %v2988
    %v3056 = vpop.f32.mrb[0].mxu0
    %v3057 = vadd.f32 %v2986, %v3056
    %v3058 = vpop.f32.mrb[0].mxu0
    %3059 = vdwg.mxu0
    %vm3060 = vcmask 24576
    %3061 = vst.msk [vmem:[#allocation3] sm:$0x1] %vm3060, %v3057
    %v3062 = vsel %vm3060, %v3057, -inf
    %3063 = vmax.xlane.f32.xlu0 %v3062
    %v3064 = vpop.xlane.xlu0 %3063
    %v3065 = vsub.f32 %v3057, %v3064
    %v3066 = vmul.f32 %v3065, 1.442695
    %v3067 = vpow.pop %v3066
    %v3068 = vsel %vm3060, %v3067, 0.0
    %3069 = vadd.xlane.f32.xlu0 %v3068
    %v3070 = vpop.xlane.xlu0 %3069
    %v3071 = vrcp.pop %v3070
    %v3072 = vmul.f32 %v3067, %v3071
    %3073 = vst.msk [vmem:[#allocation5] sm:$0x1] %vm3060, %v3072
    // Predicated region
    $region86: #{tpu_custom_call.1} parent=1 // pred_check
      _
    $region87: #{tpu_custom_call.1} parent=1 // pred_check_branch
      %3075 = sbr.rel (0) target = $region89
    $region88: #{tpu_custom_call.1} parent=1 // pred_region
      %s3077 = ssub.s32 16, 16
      %3078 = vsyncadd [#allocation4], %s3077
      %s3080 = sshll.u32 [#allocation3], 4
      %s3081 = int_to_ptr.vmem [resolvable:$true] %s3080
      %3083 = dma.vmem_to_hbm [thread:$0]  %s3081, 16, %s21, [#allocation4]
    $region89: #{tpu_custom_call.1} parent=1 // pred_fallthru
      _
    // Predicated region
    $region90: #{tpu_custom_call.1} parent=1 // pred_check
      _
    $region91: #{tpu_custom_call.1} parent=1 // pred_check_branch
      %3085 = sbr.rel (0) target = $region93
    $region92: #{tpu_custom_call.1} parent=1 // pred_region
      %s3087 = ssub.s32 16, 16
      %3088 = vsyncadd [#allocation6], %s3087
      %s3090 = sshll.u32 [#allocation5], 4
      %s3091 = int_to_ptr.vmem [resolvable:$true] %s3090
      %3093 = dma.vmem_to_hbm [thread:$0]  %s3091, 16, %s22, [#allocation6]
    $region93: #{tpu_custom_call.1} parent=1 // pred_fallthru
      _
    // Predicated region
    $region94: #{tpu_custom_call.1} parent=1 // pred_check
      _
    $region95: #{tpu_custom_call.1} parent=1 // pred_check_branch
      %3095 = sbr.rel (0) target = $region97
    $region96: #{tpu_custom_call.1} parent=1 // pred_region
      %3096 = dma.done [#allocation4], 16
    $region97: #{tpu_custom_call.1} parent=1 // pred_fallthru
      _
    // Predicated region
    $region98: #{tpu_custom_call.1} parent=1 // pred_check
      _
    $region99: #{tpu_custom_call.1} parent=1 // pred_check_branch
      %3098 = sbr.rel (0) target = $region101
    $region100: #{tpu_custom_call.1} parent=1 // pred_region
      %3099 = dma.done [#allocation6], 16
    $region101: #{tpu_custom_call.1} parent=1 // pred_fallthru
      _
    %3100 = vsyncpa [#allocation4], 1
    %3101 = vsyncpa [#allocation6], 1

</llo_original>
